<compile_context>
chip_gen: v7x
topology: tpu7x:2x2x1
jax: 0.10.0
libtpu: 0.0.40
codegen_flags: <defaults>
</compile_context>

<pallas_src>
import functools
import math

import jax
import jax.numpy as jnp
from jax.experimental import pallas as pl
from jax.experimental.pallas import tpu as pltpu

EPS = 1e-6          # LayerNorm eps (added to std, matching the PyTorch module)
NEG_INF = -1e9      # masked_fill value


# ------------------------------------------------- per-generation sizing ----

def _tpu_vmem_bytes():
    try:
        info = pltpu.get_tpu_info()
        return int(getattr(info, "vmem_capacity_bytes", 64 * 1024 * 1024))
    except Exception:
        return 64 * 1024 * 1024


_VMEM_CAP = _tpu_vmem_bytes()
if _VMEM_CAP >= 128 * 1024 * 1024:        # v5e / v6e: 128 MiB VMEM
    _VMEM_LIMIT = 100 * 1024 * 1024
    _MAX_ROW_TILE = 1024
    _MAX_Q_TILE = 512
else:                                      # v7x: 64 MiB per TensorCore
    _VMEM_LIMIT = 48 * 1024 * 1024
    _MAX_ROW_TILE = 512
    _MAX_Q_TILE = 256


def _row_tile(n):
    return n if n <= _MAX_ROW_TILE else _MAX_ROW_TILE


def _cparams(n_axes=1):
    return pltpu.CompilerParams(
        dimension_semantics=("parallel",) * n_axes,
        vmem_limit_bytes=_VMEM_LIMIT,
    )


def _wspec(shape):
    """Grid-invariant (resident) weight block: single-buffered."""
    return pl.BlockSpec(shape, lambda *_: (0,) * len(shape),
                        pipeline_mode=pl.Buffered(1))


# ------------------------------------------------------------------ kernels --

def _layernorm_f32(x, g, b):
    """Annotated-Transformer LayerNorm: unbiased std, eps added to std."""
    d = x.shape[-1]
    mean = jnp.mean(x, axis=-1, keepdims=True)
    xc = x - mean
    var = jnp.sum(xc * xc, axis=-1, keepdims=True) * (1.0 / (d - 1))
    std = jnp.sqrt(var)
    return xc * (g / (std + EPS)) + b


def _ln_qkv_kernel(x_ref, g_ref, b_ref,
                   wq_ref, bq_ref, wk_ref, bk_ref, wv_ref, bv_ref,
                   q_ref, k_ref, v_ref):
    x = x_ref[...].astype(jnp.float32)
    xn = _layernorm_f32(x, g_ref[...], b_ref[...]).astype(jnp.bfloat16)
    for w_ref, bias_ref, out_ref in ((wq_ref, bq_ref, q_ref),
                                     (wk_ref, bk_ref, k_ref),
                                     (wv_ref, bv_ref, v_ref)):
        y = jnp.dot(xn, w_ref[...],               # weights already bf16
                    preferred_element_type=jnp.float32) + bias_ref[...]
        out_ref[...] = y.astype(out_ref.dtype)


def _ln_linear_kernel(x_ref, g_ref, b_ref, w_ref, wb_ref, o_ref):
    x = x_ref[...].astype(jnp.float32)
    xn = _layernorm_f32(x, g_ref[...], b_ref[...]).astype(jnp.bfloat16)
    y = jnp.dot(xn, w_ref[...],
                preferred_element_type=jnp.float32) + wb_ref[...]
    o_ref[...] = y.astype(o_ref.dtype)


def _kv_proj_kernel(x_ref, wk_ref, bk_ref, wv_ref, bv_ref, k_ref, v_ref):
    x = x_ref[...].astype(jnp.bfloat16)
    for w_ref, bias_ref, out_ref in ((wk_ref, bk_ref, k_ref),
                                     (wv_ref, bv_ref, v_ref)):
        y = jnp.dot(x, w_ref[...],
                    preferred_element_type=jnp.float32) + bias_ref[...]
        out_ref[...] = y.astype(out_ref.dtype)


def _ln_ffn_resid_kernel(x_ref, g_ref, b_ref, w1_ref, b1_ref, w2_ref, b2_ref,
                         o_ref):
    x = x_ref[...].astype(jnp.float32)
    xn = _layernorm_f32(x, g_ref[...], b_ref[...]).astype(jnp.bfloat16)
    h1 = jnp.dot(xn, w1_ref[...],
                 preferred_element_type=jnp.float32) + b1_ref[...]
    h1 = jnp.maximum(h1, 0.0).astype(jnp.bfloat16)
    y = jnp.dot(h1, w2_ref[...],
                preferred_element_type=jnp.float32) + b2_ref[...]
    o_ref[...] = (x + y).astype(o_ref.dtype)


def _attn_out_resid_kernel(q_ref, k_ref, v_ref, mask_ref, res_ref,
                           wo_ref, bo_ref, o_ref, ctx_ref, *, h, dk):
    """Multi-head attention + output projection + residual, fused.

    q_ref: (1, tq, D) bf16   k_ref/v_ref: (1, Sk, D) bf16
    mask_ref: (1, tq|1, Sk) int32       res_ref/o_ref: (1, tq, D) f32
    ctx_ref: (tq, D) f32 VMEM scratch (per-head slab writes, single store).
    """
    q = q_ref[0]                               # (tq, D) bf16
    k = k_ref[0]                               # (Sk, D) bf16
    v = v_ref[0]                               # (Sk, D) bf16
    tq = q.shape[0]
    sk = k.shape[0]
    # hoist the mask compare out of the head loop (exact masked_fill semantics)
    mzero = jnp.broadcast_to(mask_ref[0], (tq, sk)) == 0
    inv_sqrt_dk = 1.0 / math.sqrt(dk)
    for hh in range(h):                        # static unroll over heads
        lo = hh * dk
        qh = q[:, lo:lo + dk]
        kh = k[:, lo:lo + dk]
        vh = v[:, lo:lo + dk]
        s = jnp.einsum("qd,kd->qk", qh, kh,
                       preferred_element_type=jnp.float32) * inv_sqrt_dk
        s = jnp.where(mzero, NEG_INF, s)
        s = s - jnp.max(s, axis=-1, keepdims=True)
        p = jnp.exp(s)
        p = p / jnp.sum(p, axis=-1, keepdims=True)
        ctx_ref[:, lo:lo + dk] = jnp.dot(p.astype(jnp.bfloat16), vh,
                                         preferred_element_type=jnp.float32)
    ctx = ctx_ref[...].astype(jnp.bfloat16)
    y = jnp.dot(ctx, wo_ref[...],
                preferred_element_type=jnp.float32) + bo_ref[...]
    o_ref[0] = (res_ref[0].astype(jnp.float32) + y).astype(o_ref.dtype)


# ----------------------------------------------------------------- wrappers --

def ln_qkv(x2d, g, b, p):
    n, d = x2d.shape
    tm = _row_tile(n)
    row = pl.BlockSpec((tm, d), lambda i: (i, 0))
    vec = pl.BlockSpec((1, d), lambda i: (0, 0))
    out = jax.ShapeDtypeStruct((n, d), jnp.bfloat16)
    return pl.pallas_call(
        _ln_qkv_kernel,
        out_shape=(out, out, out),
        grid=(pl.cdiv(n, tm),),
        in_specs=[row, vec, vec,
                  _wspec((d, d)), vec, _wspec((d, d)), vec, _wspec((d, d)), vec],
        out_specs=(row, row, row),
        compiler_params=_cparams(),
    )(x2d, g.reshape(1, d), b.reshape(1, d),
      p["wq"], p["bq"].reshape(1, d),
      p["wk"], p["bk"].reshape(1, d),
      p["wv"], p["bv"].reshape(1, d))


def ln_linear(x2d, g, b, w, wb):
    n, d = x2d.shape
    dout = w.shape[1]
    tm = _row_tile(n)
    return pl.pallas_call(
        _ln_linear_kernel,
        out_shape=jax.ShapeDtypeStruct((n, dout), jnp.bfloat16),
        grid=(pl.cdiv(n, tm),),
        in_specs=[pl.BlockSpec((tm, d), lambda i: (i, 0)),
                  pl.BlockSpec((1, d), lambda i: (0, 0)),
                  pl.BlockSpec((1, d), lambda i: (0, 0)),
                  _wspec((d, dout)),
                  pl.BlockSpec((1, dout), lambda i: (0, 0))],
        out_specs=pl.BlockSpec((tm, dout), lambda i: (i, 0)),
        compiler_params=_cparams(),
    )(x2d, g.reshape(1, d), b.reshape(1, d), w, wb.reshape(1, dout))


def kv_proj(x2d, wk, bk, wv, bv):
    n, d = x2d.shape
    dout = wk.shape[1]
    tm = _row_tile(n)
    row_in = pl.BlockSpec((tm, d), lambda i: (i, 0))
    row_out = pl.BlockSpec((tm, dout), lambda i: (i, 0))
    vec = pl.BlockSpec((1, dout), lambda i: (0, 0))
    out = jax.ShapeDtypeStruct((n, dout), jnp.bfloat16)
    return pl.pallas_call(
        _kv_proj_kernel,
        out_shape=(out, out),
        grid=(pl.cdiv(n, tm),),
        in_specs=[row_in, _wspec((d, dout)), vec, _wspec((d, dout)), vec],
        out_specs=(row_out, row_out),
        compiler_params=_cparams(),
    )(x2d, wk, bk.reshape(1, dout), wv, bv.reshape(1, dout))


def ln_ffn_resid(x2d, g, b, p):
    n, d = x2d.shape
    d_ff = p["w1"].shape[1]
    tm = _row_tile(n)   # keeps the f32 intermediate at (tm, d_ff)
    return pl.pallas_call(
        _ln_ffn_resid_kernel,
        out_shape=jax.ShapeDtypeStruct((n, d), x2d.dtype),
        grid=(pl.cdiv(n, tm),),
        in_specs=[pl.BlockSpec((tm, d), lambda i: (i, 0)),
                  pl.BlockSpec((1, d), lambda i: (0, 0)),
                  pl.BlockSpec((1, d), lambda i: (0, 0)),
                  _wspec((d, d_ff)),
                  pl.BlockSpec((1, d_ff), lambda i: (0, 0)),
                  _wspec((d_ff, d)),
                  pl.BlockSpec((1, d), lambda i: (0, 0))],
        out_specs=pl.BlockSpec((tm, d), lambda i: (i, 0)),
        compiler_params=_cparams(),
    )(x2d, g.reshape(1, d), b.reshape(1, d),
      p["w1"], p["b1"].reshape(1, d_ff), p["w2"], p["b2"].reshape(1, d))


def attn_out_resid(q, k, v, mask, res, wo, bo, h):
    """q: (B,Sq,D) bf16; k/v: (B,Sk,D) bf16; mask: (1|B, 1|Sq, Sk);
    res: (B,Sq,D) f32.  Returns res + (attention(q,k,v) @ Wo + bo), f32."""
    b, sq, d = q.shape
    sk = k.shape[1]
    dk = d // h
    tq = sq if sq <= _MAX_Q_TILE else _MAX_Q_TILE
    nq = pl.cdiv(sq, tq)

    mask = mask.astype(jnp.int32)
    bm, sm, _ = mask.shape
    per_batch_mask = (bm == b and b > 1)
    if sm > 1:  # per-query-row mask (e.g. causal tgt_mask) -> tile along Sq
        if per_batch_mask:
            mask_spec = pl.BlockSpec((1, tq, sk), lambda bi, qi: (bi, qi, 0))
        else:
            mask_spec = pl.BlockSpec((1, tq, sk), lambda bi, qi: (0, qi, 0))
    else:       # broadcast mask over query rows (e.g. src padding mask)
        if per_batch_mask:
            mask_spec = pl.BlockSpec((1, 1, sk), lambda bi, qi: (bi, 0, 0))
        else:
            mask_spec = pl.BlockSpec((1, 1, sk), lambda bi, qi: (0, 0, 0))

    kern = functools.partial(_attn_out_resid_kernel, h=h, dk=dk)
    return pl.pallas_call(
        kern,
        out_shape=jax.ShapeDtypeStruct((b, sq, d), res.dtype),
        grid=(b, nq),
        in_specs=[pl.BlockSpec((1, tq, d), lambda bi, qi: (bi, qi, 0)),
                  pl.BlockSpec((1, sk, d), lambda bi, qi: (bi, 0, 0)),
                  pl.BlockSpec((1, sk, d), lambda bi, qi: (bi, 0, 0)),
                  mask_spec,
                  pl.BlockSpec((1, tq, d), lambda bi, qi: (bi, qi, 0)),
                  pl.BlockSpec((d, d), lambda bi, qi: (0, 0),
                               pipeline_mode=pl.Buffered(1)),
                  pl.BlockSpec((1, d), lambda bi, qi: (0, 0))],
        out_specs=pl.BlockSpec((1, tq, d), lambda bi, qi: (bi, qi, 0)),
        scratch_shapes=[pltpu.VMEM((tq, d), jnp.float32)],
        compiler_params=_cparams(2),
    )(q, k, v, mask, res, wo, bo.reshape(1, d))


# -------------------------------------------------------------- decoder layer

def decoder_layer(params, x, memory, src_mask, tgt_mask, h):
    b, s, d = x.shape
    sk = memory.shape[1]

    # sublayer 0: x + self_attn(norm(x), norm(x), norm(x), tgt_mask)
    pa = params["self_attn"]
    q, k, v = ln_qkv(x.reshape(b * s, d), params["ln0_g"], params["ln0_b"], pa)
    x = attn_out_resid(q.reshape(b, s, d), k.reshape(b, s, d),
                       v.reshape(b, s, d), tgt_mask, x, pa["wo"], pa["bo"], h)

    # sublayer 1: x + src_attn(norm(x), memory, memory, src_mask)
    # TODO(synk): for autoregressive decode, cache the K/V projection of memory.
    pa = params["src_attn"]
    q = ln_linear(x.reshape(b * s, d), params["ln1_g"], params["ln1_b"],
                  pa["wq"], pa["bq"])
    k, v = kv_proj(memory.reshape(b * sk, d), pa["wk"], pa["bk"],
                   pa["wv"], pa["bv"])
    x = attn_out_resid(q.reshape(b, s, d), k.reshape(b, sk, d),
                       v.reshape(b, sk, d), src_mask, x, pa["wo"], pa["bo"], h)

    # sublayer 2: x + feed_forward(norm(x))
    x2 = ln_ffn_resid(x.reshape(b * s, d), params["ln2_g"], params["ln2_b"],
                      params["ffn"])
    return x2.reshape(b, s, d)


# ----------------------------------------------------------------- params ----

def init_params(key, d_model, d_ff, h):
    def lin(k, din, dout):
        kw, kb = jax.random.split(k)
        scale = 1.0 / jnp.sqrt(jnp.float32(din))
        return (jax.random.uniform(kw, (din, dout), jnp.float32, -scale, scale),
                jax.random.uniform(kb, (dout,), jnp.float32, -scale, scale))

    keys = jax.random.split(key, 12)

    def attn_params(ks):
        wq, bq = lin(ks[0], d_model, d_model)
        wk, bk = lin(ks[1], d_model, d_model)
        wv, bv = lin(ks[2], d_model, d_model)
        wo, bo = lin(ks[3], d_model, d_model)
        return dict(wq=wq, bq=bq, wk=wk, bk=bk, wv=wv, bv=bv, wo=wo, bo=bo)

    w1, b1 = lin(keys[8], d_model, d_ff)
    w2, b2 = lin(keys[9], d_ff, d_model)

    ones = jnp.ones((d_model,), jnp.float32)
    zeros = jnp.zeros((d_model,), jnp.float32)
    return dict(
        self_attn=attn_params(keys[0:4]),
        src_attn=attn_params(keys[4:8]),
        ffn=dict(w1=w1, b1=b1, w2=w2, b2=b2),
        ln0_g=ones, ln0_b=zeros,
        ln1_g=ones, ln1_b=zeros,
        ln2_g=ones, ln2_b=zeros,
    )


def cast_weights_bf16(params):
    """Pre-cast all MXU weight matrices to bf16 once (biases / LN stay f32)."""
    def cast_attn(pa):
        out = dict(pa)
        for name in ("wq", "wk", "wv", "wo"):
            out[name] = pa[name].astype(jnp.bfloat16)
        return out

    out = dict(params)
    out["self_attn"] = cast_attn(params["self_attn"])
    out["src_attn"] = cast_attn(params["src_attn"])
    ffn = dict(params["ffn"])
    ffn["w1"] = ffn["w1"].astype(jnp.bfloat16)
    ffn["w2"] = ffn["w2"].astype(jnp.bfloat16)
    out["ffn"] = ffn
    return out


# ------------------------------------------------------------------- main ----

if __name__ == "__main__":
    B, S_TGT, S_SRC = 2, 8, 8
    D_MODEL, D_FF, H = 32, 64, 4

    key = jax.random.PRNGKey(0)
    k_p, k_x, k_m = jax.random.split(key, 3)

    params = cast_weights_bf16(init_params(k_p, D_MODEL, D_FF, H))
    x = jax.random.normal(k_x, (B, S_TGT, D_MODEL), jnp.float32)
    memory = jax.random.normal(k_m, (B, S_SRC, D_MODEL), jnp.float32)

    # tgt_mask: causal (subsequent) mask, shape (1, S_tgt, S_tgt)
    tgt_mask = jnp.tril(jnp.ones((S_TGT, S_TGT), jnp.int32))[None, :, :]
    # src_mask: all-visible padding mask, shape (B, 1, S_src)
    src_mask = jnp.ones((B, 1, S_SRC), jnp.int32)

    fwd = jax.jit(functools.partial(decoder_layer, h=H))
    out = fwd(params, x, memory, src_mask, tgt_mask)
    out = jax.block_until_ready(out)

    assert out.shape == (B, S_TGT, D_MODEL)
    assert bool(jnp.all(jnp.isfinite(out)))
    print("KERNEL_OK")
</pallas_src>

<mosaic_0001>
module attributes {stable_mosaic.version = 11 : i64} {
  func.func @_ln_linear_kernel(%arg0: i32, %arg1: memref<16x32xf32, #tpu.memory_space<vmem>>, %arg2: memref<1x32xf32, #tpu.memory_space<vmem>>, %arg3: memref<1x32xf32, #tpu.memory_space<vmem>>, %arg4: memref<32x32xbf16, #tpu.memory_space<vmem>>, %arg5: memref<1x32xf32, #tpu.memory_space<vmem>>, %arg6: memref<16x32xbf16, #tpu.memory_space<vmem>>) attributes {dimension_semantics = [#tpu.dimension_semantics<parallel>], iteration_bounds = array<i64: 1>, scalar_prefetch = 0 : i64, scratch_operands = 0 : i64, tpu.core_type = #tpu.core_type<tc>, window_params = [{transform_indices = @transform_0, window_bounds = array<i64: 16, 32>}, {pipeline_mode = #tpu.pipeline_mode<synchronous>, transform_indices = @transform_1, window_bounds = array<i64: 1, 32>}, {pipeline_mode = #tpu.pipeline_mode<synchronous>, transform_indices = @transform_2, window_bounds = array<i64: 1, 32>}, {pipeline_mode = #tpu.pipeline_mode<synchronous>, transform_indices = @transform_3, window_bounds = array<i64: 32, 32>}, {pipeline_mode = #tpu.pipeline_mode<synchronous>, transform_indices = @transform_4, window_bounds = array<i64: 1, 32>}, {transform_indices = @transform_5, window_bounds = array<i64: 16, 32>}]} {
    %c0 = arith.constant 0 : index
    %c0_0 = arith.constant 0 : index
    %0 = vector.load %arg1[%c0, %c0_0] : memref<16x32xf32, #tpu.memory_space<vmem>>, vector<16x32xf32>
    %c0_1 = arith.constant 0 : index
    %c0_2 = arith.constant 0 : index
    %1 = vector.load %arg2[%c0_1, %c0_2] : memref<1x32xf32, #tpu.memory_space<vmem>>, vector<1x32xf32>
    %c0_3 = arith.constant 0 : index
    %c0_4 = arith.constant 0 : index
    %2 = vector.load %arg3[%c0_3, %c0_4] : memref<1x32xf32, #tpu.memory_space<vmem>>, vector<1x32xf32>
    %cst = arith.constant dense<0.000000e+00> : vector<16xf32>
    %3 = vector.multi_reduction <add>, %0, %cst [1] : vector<16x32xf32> to vector<16xf32>
    %4 = vector.shape_cast %3 : vector<16xf32> to vector<16x1xf32>
    %cst_5 = arith.constant 3.200000e+01 : f32
    %5 = vector.broadcast %cst_5 : f32 to vector<16x1xf32>
    %6 = arith.divf %4, %5 : vector<16x1xf32>
    %7 = vector.broadcast %6 : vector<16x1xf32> to vector<16x32xf32>
    %8 = arith.subf %0, %7 : vector<16x32xf32>
    %9 = arith.mulf %8, %8 : vector<16x32xf32>
    %cst_6 = arith.constant dense<0.000000e+00> : vector<16xf32>
    %10 = vector.multi_reduction <add>, %9, %cst_6 [1] : vector<16x32xf32> to vector<16xf32>
    %11 = vector.shape_cast %10 : vector<16xf32> to vector<16x1xf32>
    %cst_7 = arith.constant 0.0322580636 : f32
    %12 = vector.broadcast %cst_7 : f32 to vector<16x1xf32>
    %13 = arith.mulf %11, %12 : vector<16x1xf32>
    %14 = math.sqrt %13 : vector<16x1xf32>
    %cst_8 = arith.constant 9.99999997E-7 : f32
    %15 = vector.broadcast %cst_8 : f32 to vector<16x1xf32>
    %16 = arith.addf %14, %15 : vector<16x1xf32>
    %17 = vector.broadcast %1 : vector<1x32xf32> to vector<16x32xf32>
    %18 = vector.broadcast %16 : vector<16x1xf32> to vector<16x32xf32>
    %19 = arith.divf %17, %18 : vector<16x32xf32>
    %20 = arith.mulf %8, %19 : vector<16x32xf32>
    %21 = vector.broadcast %2 : vector<1x32xf32> to vector<16x32xf32>
    %22 = arith.addf %20, %21 : vector<16x32xf32>
    %23 = arith.truncf %22 : vector<16x32xf32> to vector<16x32xbf16>
    %c0_9 = arith.constant 0 : index
    %c0_10 = arith.constant 0 : index
    %24 = vector.load %arg4[%c0_9, %c0_10] : memref<32x32xbf16, #tpu.memory_space<vmem>>, vector<32x32xbf16>
    %cst_11 = arith.constant dense<0.000000e+00> : vector<16x32xf32>
    %25 = tpu.matmul %23, %24, %cst_11 {dimension_numbers = #tpu.dot_dimension_numbers<[1], [0], [0], [1], [0, 0, 1, 1], [], []>} : vector<16x32xbf16>, vector<32x32xbf16>, vector<16x32xf32> -> vector<16x32xf32>
    %c0_12 = arith.constant 0 : index
    %c0_13 = arith.constant 0 : index
    %26 = vector.load %arg5[%c0_12, %c0_13] : memref<1x32xf32, #tpu.memory_space<vmem>>, vector<1x32xf32>
    %27 = vector.broadcast %26 : vector<1x32xf32> to vector<16x32xf32>
    %28 = arith.addf %25, %27 : vector<16x32xf32>
    %29 = arith.truncf %28 : vector<16x32xf32> to vector<16x32xbf16>
    %c0_14 = arith.constant 0 : index
    %c0_15 = arith.constant 0 : index
    %30 = vector.load %arg6[%c0_14, %c0_15] : memref<16x32xbf16, #tpu.memory_space<vmem>>, vector<16x32xbf16>
    tpu.vector_store %arg6[%c0_14, %c0_15], %29 {strides = array<i32>} : memref<16x32xbf16, #tpu.memory_space<vmem>>, vector<16x32xbf16>,
    return
  }
  func.func @transform_0(%arg0: i32) -> (i32, i32) {
    %c0_i32 = arith.constant 0 : i32
    %c0_i32_0 = arith.constant 0 : i32
    return %arg0, %c0_i32 : i32, i32
  }
  func.func @transform_1(%arg0: i32) -> (i32, i32) {
    %c0_i32 = arith.constant 0 : i32
    %c0_i32_0 = arith.constant 0 : i32
    %c0_i32_1 = arith.constant 0 : i32
    return %c0_i32, %c0_i32_0 : i32, i32
  }
  func.func @transform_2(%arg0: i32) -> (i32, i32) {
    %c0_i32 = arith.constant 0 : i32
    %c0_i32_0 = arith.constant 0 : i32
    %c0_i32_1 = arith.constant 0 : i32
    return %c0_i32, %c0_i32_0 : i32, i32
  }
  func.func @transform_3(%arg0: i32) -> (i32, i32) {
    %c0_i32 = arith.constant 0 : i32
    %c0_i32_0 = arith.constant 0 : i32
    %c0_i32_1 = arith.constant 0 : i32
    return %c0_i32, %c0_i32_0 : i32, i32
  }
  func.func @transform_4(%arg0: i32) -> (i32, i32) {
    %c0_i32 = arith.constant 0 : i32
    %c0_i32_0 = arith.constant 0 : i32
    %c0_i32_1 = arith.constant 0 : i32
    return %c0_i32, %c0_i32_0 : i32, i32
  }
  func.func @transform_5(%arg0: i32) -> (i32, i32) {
    %c0_i32 = arith.constant 0 : i32
    %c0_i32_0 = arith.constant 0 : i32
    return %arg0, %c0_i32 : i32, i32
  }
}

module attributes {stable_mosaic.version = 11 : i64} {
  func.func @_kv_proj_kernel(%arg0: i32, %arg1: memref<16x32xf32, #tpu.memory_space<vmem>>, %arg2: memref<32x32xbf16, #tpu.memory_space<vmem>>, %arg3: memref<1x32xf32, #tpu.memory_space<vmem>>, %arg4: memref<32x32xbf16, #tpu.memory_space<vmem>>, %arg5: memref<1x32xf32, #tpu.memory_space<vmem>>, %arg6: memref<16x32xbf16, #tpu.memory_space<vmem>>, %arg7: memref<16x32xbf16, #tpu.memory_space<vmem>>) attributes {dimension_semantics = [#tpu.dimension_semantics<parallel>], iteration_bounds = array<i64: 1>, scalar_prefetch = 0 : i64, scratch_operands = 0 : i64, tpu.core_type = #tpu.core_type<tc>, window_params = [{transform_indices = @transform_0, window_bounds = array<i64: 16, 32>}, {pipeline_mode = #tpu.pipeline_mode<synchronous>, transform_indices = @transform_1, window_bounds = array<i64: 32, 32>}, {pipeline_mode = #tpu.pipeline_mode<synchronous>, transform_indices = @transform_2, window_bounds = array<i64: 1, 32>}, {pipeline_mode = #tpu.pipeline_mode<synchronous>, transform_indices = @transform_3, window_bounds = array<i64: 32, 32>}, {pipeline_mode = #tpu.pipeline_mode<synchronous>, transform_indices = @transform_4, window_bounds = array<i64: 1, 32>}, {transform_indices = @transform_5, window_bounds = array<i64: 16, 32>}, {transform_indices = @transform_6, window_bounds = array<i64: 16, 32>}]} {
    %c0 = arith.constant 0 : index
    %c0_0 = arith.constant 0 : index
    %0 = vector.load %arg1[%c0, %c0_0] : memref<16x32xf32, #tpu.memory_space<vmem>>, vector<16x32xf32>
    %1 = arith.truncf %0 : vector<16x32xf32> to vector<16x32xbf16>
    %c0_1 = arith.constant 0 : index
    %c0_2 = arith.constant 0 : index
    %2 = vector.load %arg2[%c0_1, %c0_2] : memref<32x32xbf16, #tpu.memory_space<vmem>>, vector<32x32xbf16>
    %cst = arith.constant dense<0.000000e+00> : vector<16x32xf32>
    %3 = tpu.matmul %1, %2, %cst {dimension_numbers = #tpu.dot_dimension_numbers<[1], [0], [0], [1], [0, 0, 1, 1], [], []>} : vector<16x32xbf16>, vector<32x32xbf16>, vector<16x32xf32> -> vector<16x32xf32>
    %c0_3 = arith.constant 0 : index
    %c0_4 = arith.constant 0 : index
    %4 = vector.load %arg3[%c0_3, %c0_4] : memref<1x32xf32, #tpu.memory_space<vmem>>, vector<1x32xf32>
    %5 = vector.broadcast %4 : vector<1x32xf32> to vector<16x32xf32>
    %6 = arith.addf %3, %5 : vector<16x32xf32>
    %7 = arith.truncf %6 : vector<16x32xf32> to vector<16x32xbf16>
    %c0_5 = arith.constant 0 : index
    %c0_6 = arith.constant 0 : index
    %8 = vector.load %arg6[%c0_5, %c0_6] : memref<16x32xbf16, #tpu.memory_space<vmem>>, vector<16x32xbf16>
    tpu.vector_store %arg6[%c0_5, %c0_6], %7 {strides = array<i32>} : memref<16x32xbf16, #tpu.memory_space<vmem>>, vector<16x32xbf16>,
    %c0_7 = arith.constant 0 : index
    %c0_8 = arith.constant 0 : index
    %9 = vector.load %arg4[%c0_7, %c0_8] : memref<32x32xbf16, #tpu.memory_space<vmem>>, vector<32x32xbf16>
    %cst_9 = arith.constant dense<0.000000e+00> : vector<16x32xf32>
    %10 = tpu.matmul %1, %9, %cst_9 {dimension_numbers = #tpu.dot_dimension_numbers<[1], [0], [0], [1], [0, 0, 1, 1], [], []>} : vector<16x32xbf16>, vector<32x32xbf16>, vector<16x32xf32> -> vector<16x32xf32>
    %c0_10 = arith.constant 0 : index
    %c0_11 = arith.constant 0 : index
    %11 = vector.load %arg5[%c0_10, %c0_11] : memref<1x32xf32, #tpu.memory_space<vmem>>, vector<1x32xf32>
    %12 = vector.broadcast %11 : vector<1x32xf32> to vector<16x32xf32>
    %13 = arith.addf %10, %12 : vector<16x32xf32>
    %14 = arith.truncf %13 : vector<16x32xf32> to vector<16x32xbf16>
    %c0_12 = arith.constant 0 : index
    %c0_13 = arith.constant 0 : index
    %15 = vector.load %arg7[%c0_12, %c0_13] : memref<16x32xbf16, #tpu.memory_space<vmem>>, vector<16x32xbf16>
    tpu.vector_store %arg7[%c0_12, %c0_13], %14 {strides = array<i32>} : memref<16x32xbf16, #tpu.memory_space<vmem>>, vector<16x32xbf16>,
    return
  }
  func.func @transform_0(%arg0: i32) -> (i32, i32) {
    %c0_i32 = arith.constant 0 : i32
    %c0_i32_0 = arith.constant 0 : i32
    return %arg0, %c0_i32 : i32, i32
  }
  func.func @transform_1(%arg0: i32) -> (i32, i32) {
    %c0_i32 = arith.constant 0 : i32
    %c0_i32_0 = arith.constant 0 : i32
    %c0_i32_1 = arith.constant 0 : i32
    return %c0_i32, %c0_i32_0 : i32, i32
  }
  func.func @transform_2(%arg0: i32) -> (i32, i32) {
    %c0_i32 = arith.constant 0 : i32
    %c0_i32_0 = arith.constant 0 : i32
    %c0_i32_1 = arith.constant 0 : i32
    return %c0_i32, %c0_i32_0 : i32, i32
  }
  func.func @transform_3(%arg0: i32) -> (i32, i32) {
    %c0_i32 = arith.constant 0 : i32
    %c0_i32_0 = arith.constant 0 : i32
    %c0_i32_1 = arith.constant 0 : i32
    return %c0_i32, %c0_i32_0 : i32, i32
  }
  func.func @transform_4(%arg0: i32) -> (i32, i32) {
    %c0_i32 = arith.constant 0 : i32
    %c0_i32_0 = arith.constant 0 : i32
    %c0_i32_1 = arith.constant 0 : i32
    return %c0_i32, %c0_i32_0 : i32, i32
  }
  func.func @transform_5(%arg0: i32) -> (i32, i32) {
    %c0_i32 = arith.constant 0 : i32
    %c0_i32_0 = arith.constant 0 : i32
    return %arg0, %c0_i32 : i32, i32
  }
  func.func @transform_6(%arg0: i32) -> (i32, i32) {
    %c0_i32 = arith.constant 0 : i32
    %c0_i32_0 = arith.constant 0 : i32
    return %arg0, %c0_i32 : i32, i32
  }
}

module attributes {stable_mosaic.version = 11 : i64} {
  func.func @_ln_qkv_kernel(%arg0: i32, %arg1: memref<16x32xf32, #tpu.memory_space<vmem>>, %arg2: memref<1x32xf32, #tpu.memory_space<vmem>>, %arg3: memref<1x32xf32, #tpu.memory_space<vmem>>, %arg4: memref<32x32xbf16, #tpu.memory_space<vmem>>, %arg5: memref<1x32xf32, #tpu.memory_space<vmem>>, %arg6: memref<32x32xbf16, #tpu.memory_space<vmem>>, %arg7: memref<1x32xf32, #tpu.memory_space<vmem>>, %arg8: memref<32x32xbf16, #tpu.memory_space<vmem>>, %arg9: memref<1x32xf32, #tpu.memory_space<vmem>>, %arg10: memref<16x32xbf16, #tpu.memory_space<vmem>>, %arg11: memref<16x32xbf16, #tpu.memory_space<vmem>>, %arg12: memref<16x32xbf16, #tpu.memory_space<vmem>>) attributes {dimension_semantics = [#tpu.dimension_semantics<parallel>], iteration_bounds = array<i64: 1>, scalar_prefetch = 0 : i64, scratch_operands = 0 : i64, tpu.core_type = #tpu.core_type<tc>, window_params = [{transform_indices = @transform_0, window_bounds = array<i64: 16, 32>}, {pipeline_mode = #tpu.pipeline_mode<synchronous>, transform_indices = @transform_1, window_bounds = array<i64: 1, 32>}, {pipeline_mode = #tpu.pipeline_mode<synchronous>, transform_indices = @transform_2, window_bounds = array<i64: 1, 32>}, {pipeline_mode = #tpu.pipeline_mode<synchronous>, transform_indices = @transform_3, window_bounds = array<i64: 32, 32>}, {pipeline_mode = #tpu.pipeline_mode<synchronous>, transform_indices = @transform_4, window_bounds = array<i64: 1, 32>}, {pipeline_mode = #tpu.pipeline_mode<synchronous>, transform_indices = @transform_5, window_bounds = array<i64: 32, 32>}, {pipeline_mode = #tpu.pipeline_mode<synchronous>, transform_indices = @transform_6, window_bounds = array<i64: 1, 32>}, {pipeline_mode = #tpu.pipeline_mode<synchronous>, transform_indices = @transform_7, window_bounds = array<i64: 32, 32>}, {pipeline_mode = #tpu.pipeline_mode<synchronous>, transform_indices = @transform_8, window_bounds = array<i64: 1, 32>}, {transform_indices = @transform_9, window_bounds = array<i64: 16, 32>}, {transform_indices = @transform_10, window_bounds = array<i64: 16, 32>}, {transform_indices = @transform_11, window_bounds = array<i64: 16, 32>}]} {
    %c0 = arith.constant 0 : index
    %c0_0 = arith.constant 0 : index
    %0 = vector.load %arg1[%c0, %c0_0] : memref<16x32xf32, #tpu.memory_space<vmem>>, vector<16x32xf32>
    %c0_1 = arith.constant 0 : index
    %c0_2 = arith.constant 0 : index
    %1 = vector.load %arg2[%c0_1, %c0_2] : memref<1x32xf32, #tpu.memory_space<vmem>>, vector<1x32xf32>
    %c0_3 = arith.constant 0 : index
    %c0_4 = arith.constant 0 : index
    %2 = vector.load %arg3[%c0_3, %c0_4] : memref<1x32xf32, #tpu.memory_space<vmem>>, vector<1x32xf32>
    %cst = arith.constant dense<0.000000e+00> : vector<16xf32>
    %3 = vector.multi_reduction <add>, %0, %cst [1] : vector<16x32xf32> to vector<16xf32>
    %4 = vector.shape_cast %3 : vector<16xf32> to vector<16x1xf32>
    %cst_5 = arith.constant 3.200000e+01 : f32
    %5 = vector.broadcast %cst_5 : f32 to vector<16x1xf32>
    %6 = arith.divf %4, %5 : vector<16x1xf32>
    %7 = vector.broadcast %6 : vector<16x1xf32> to vector<16x32xf32>
    %8 = arith.subf %0, %7 : vector<16x32xf32>
    %9 = arith.mulf %8, %8 : vector<16x32xf32>
    %cst_6 = arith.constant dense<0.000000e+00> : vector<16xf32>
    %10 = vector.multi_reduction <add>, %9, %cst_6 [1] : vector<16x32xf32> to vector<16xf32>
    %11 = vector.shape_cast %10 : vector<16xf32> to vector<16x1xf32>
    %cst_7 = arith.constant 0.0322580636 : f32
    %12 = vector.broadcast %cst_7 : f32 to vector<16x1xf32>
    %13 = arith.mulf %11, %12 : vector<16x1xf32>
    %14 = math.sqrt %13 : vector<16x1xf32>
    %cst_8 = arith.constant 9.99999997E-7 : f32
    %15 = vector.broadcast %cst_8 : f32 to vector<16x1xf32>
    %16 = arith.addf %14, %15 : vector<16x1xf32>
    %17 = vector.broadcast %1 : vector<1x32xf32> to vector<16x32xf32>
    %18 = vector.broadcast %16 : vector<16x1xf32> to vector<16x32xf32>
    %19 = arith.divf %17, %18 : vector<16x32xf32>
    %20 = arith.mulf %8, %19 : vector<16x32xf32>
    %21 = vector.broadcast %2 : vector<1x32xf32> to vector<16x32xf32>
    %22 = arith.addf %20, %21 : vector<16x32xf32>
    %23 = arith.truncf %22 : vector<16x32xf32> to vector<16x32xbf16>
    %c0_9 = arith.constant 0 : index
    %c0_10 = arith.constant 0 : index
    %24 = vector.load %arg4[%c0_9, %c0_10] : memref<32x32xbf16, #tpu.memory_space<vmem>>, vector<32x32xbf16>
    %cst_11 = arith.constant dense<0.000000e+00> : vector<16x32xf32>
    %25 = tpu.matmul %23, %24, %cst_11 {dimension_numbers = #tpu.dot_dimension_numbers<[1], [0], [0], [1], [0, 0, 1, 1], [], []>} : vector<16x32xbf16>, vector<32x32xbf16>, vector<16x32xf32> -> vector<16x32xf32>
    %c0_12 = arith.constant 0 : index
    %c0_13 = arith.constant 0 : index
    %26 = vector.load %arg5[%c0_12, %c0_13] : memref<1x32xf32, #tpu.memory_space<vmem>>, vector<1x32xf32>
    %27 = vector.broadcast %26 : vector<1x32xf32> to vector<16x32xf32>
    %28 = arith.addf %25, %27 : vector<16x32xf32>
    %29 = arith.truncf %28 : vector<16x32xf32> to vector<16x32xbf16>
    %c0_14 = arith.constant 0 : index
    %c0_15 = arith.constant 0 : index
    %30 = vector.load %arg10[%c0_14, %c0_15] : memref<16x32xbf16, #tpu.memory_space<vmem>>, vector<16x32xbf16>
    tpu.vector_store %arg10[%c0_14, %c0_15], %29 {strides = array<i32>} : memref<16x32xbf16, #tpu.memory_space<vmem>>, vector<16x32xbf16>,
    %c0_16 = arith.constant 0 : index
    %c0_17 = arith.constant 0 : index
    %31 = vector.load %arg6[%c0_16, %c0_17] : memref<32x32xbf16, #tpu.memory_space<vmem>>, vector<32x32xbf16>
    %cst_18 = arith.constant dense<0.000000e+00> : vector<16x32xf32>
    %32 = tpu.matmul %23, %31, %cst_18 {dimension_numbers = #tpu.dot_dimension_numbers<[1], [0], [0], [1], [0, 0, 1, 1], [], []>} : vector<16x32xbf16>, vector<32x32xbf16>, vector<16x32xf32> -> vector<16x32xf32>
    %c0_19 = arith.constant 0 : index
    %c0_20 = arith.constant 0 : index
    %33 = vector.load %arg7[%c0_19, %c0_20] : memref<1x32xf32, #tpu.memory_space<vmem>>, vector<1x32xf32>
    %34 = vector.broadcast %33 : vector<1x32xf32> to vector<16x32xf32>
    %35 = arith.addf %32, %34 : vector<16x32xf32>
    %36 = arith.truncf %35 : vector<16x32xf32> to vector<16x32xbf16>
    %c0_21 = arith.constant 0 : index
    %c0_22 = arith.constant 0 : index
    %37 = vector.load %arg11[%c0_21, %c0_22] : memref<16x32xbf16, #tpu.memory_space<vmem>>, vector<16x32xbf16>
    tpu.vector_store %arg11[%c0_21, %c0_22], %36 {strides = array<i32>} : memref<16x32xbf16, #tpu.memory_space<vmem>>, vector<16x32xbf16>,
    %c0_23 = arith.constant 0 : index
    %c0_24 = arith.constant 0 : index
    %38 = vector.load %arg8[%c0_23, %c0_24] : memref<32x32xbf16, #tpu.memory_space<vmem>>, vector<32x32xbf16>
    %cst_25 = arith.constant dense<0.000000e+00> : vector<16x32xf32>
    %39 = tpu.matmul %23, %38, %cst_25 {dimension_numbers = #tpu.dot_dimension_numbers<[1], [0], [0], [1], [0, 0, 1, 1], [], []>} : vector<16x32xbf16>, vector<32x32xbf16>, vector<16x32xf32> -> vector<16x32xf32>
    %c0_26 = arith.constant 0 : index
    %c0_27 = arith.constant 0 : index
    %40 = vector.load %arg9[%c0_26, %c0_27] : memref<1x32xf32, #tpu.memory_space<vmem>>, vector<1x32xf32>
    %41 = vector.broadcast %40 : vector<1x32xf32> to vector<16x32xf32>
    %42 = arith.addf %39, %41 : vector<16x32xf32>
    %43 = arith.truncf %42 : vector<16x32xf32> to vector<16x32xbf16>
    %c0_28 = arith.constant 0 : index
    %c0_29 = arith.constant 0 : index
    %44 = vector.load %arg12[%c0_28, %c0_29] : memref<16x32xbf16, #tpu.memory_space<vmem>>, vector<16x32xbf16>
    tpu.vector_store %arg12[%c0_28, %c0_29], %43 {strides = array<i32>} : memref<16x32xbf16, #tpu.memory_space<vmem>>, vector<16x32xbf16>,
    return
  }
  func.func @transform_0(%arg0: i32) -> (i32, i32) {
    %c0_i32 = arith.constant 0 : i32
    %c0_i32_0 = arith.constant 0 : i32
    return %arg0, %c0_i32 : i32, i32
  }
  func.func @transform_1(%arg0: i32) -> (i32, i32) {
    %c0_i32 = arith.constant 0 : i32
    %c0_i32_0 = arith.constant 0 : i32
    %c0_i32_1 = arith.constant 0 : i32
    return %c0_i32, %c0_i32_0 : i32, i32
  }
  func.func @transform_2(%arg0: i32) -> (i32, i32) {
    %c0_i32 = arith.constant 0 : i32
    %c0_i32_0 = arith.constant 0 : i32
    %c0_i32_1 = arith.constant 0 : i32
    return %c0_i32, %c0_i32_0 : i32, i32
  }
  func.func @transform_3(%arg0: i32) -> (i32, i32) {
    %c0_i32 = arith.constant 0 : i32
    %c0_i32_0 = arith.constant 0 : i32
    %c0_i32_1 = arith.constant 0 : i32
    return %c0_i32, %c0_i32_0 : i32, i32
  }
  func.func @transform_4(%arg0: i32) -> (i32, i32) {
    %c0_i32 = arith.constant 0 : i32
    %c0_i32_0 = arith.constant 0 : i32
    %c0_i32_1 = arith.constant 0 : i32
    return %c0_i32, %c0_i32_0 : i32, i32
  }
  func.func @transform_5(%arg0: i32) -> (i32, i32) {
    %c0_i32 = arith.constant 0 : i32
    %c0_i32_0 = arith.constant 0 : i32
    %c0_i32_1 = arith.constant 0 : i32
    return %c0_i32, %c0_i32_0 : i32, i32
  }
  func.func @transform_6(%arg0: i32) -> (i32, i32) {
    %c0_i32 = arith.constant 0 : i32
    %c0_i32_0 = arith.constant 0 : i32
    %c0_i32_1 = arith.constant 0 : i32
    return %c0_i32, %c0_i32_0 : i32, i32
  }
  func.func @transform_7(%arg0: i32) -> (i32, i32) {
    %c0_i32 = arith.constant 0 : i32
    %c0_i32_0 = arith.constant 0 : i32
    %c0_i32_1 = arith.constant 0 : i32
    return %c0_i32, %c0_i32_0 : i32, i32
  }
  func.func @transform_8(%arg0: i32) -> (i32, i32) {
    %c0_i32 = arith.constant 0 : i32
    %c0_i32_0 = arith.constant 0 : i32
    %c0_i32_1 = arith.constant 0 : i32
    return %c0_i32, %c0_i32_0 : i32, i32
  }
  func.func @transform_9(%arg0: i32) -> (i32, i32) {
    %c0_i32 = arith.constant 0 : i32
    %c0_i32_0 = arith.constant 0 : i32
    return %arg0, %c0_i32 : i32, i32
  }
  func.func @transform_10(%arg0: i32) -> (i32, i32) {
    %c0_i32 = arith.constant 0 : i32
    %c0_i32_0 = arith.constant 0 : i32
    return %arg0, %c0_i32 : i32, i32
  }
  func.func @transform_11(%arg0: i32) -> (i32, i32) {
    %c0_i32 = arith.constant 0 : i32
    %c0_i32_0 = arith.constant 0 : i32
    return %arg0, %c0_i32 : i32, i32
  }
}

module attributes {stable_mosaic.version = 11 : i64} {
  func.func @_attn_out_resid_kernel(%arg0: i32, %arg1: i32, %arg2: memref<1x8x32xbf16, #tpu.memory_space<vmem>>, %arg3: memref<1x8x32xbf16, #tpu.memory_space<vmem>>, %arg4: memref<1x8x32xbf16, #tpu.memory_space<vmem>>, %arg5: memref<1x8x8xi32, #tpu.memory_space<vmem>>, %arg6: memref<1x8x32xf32, #tpu.memory_space<vmem>>, %arg7: memref<32x32xbf16, #tpu.memory_space<vmem>>, %arg8: memref<1x32xf32, #tpu.memory_space<vmem>>, %arg9: memref<1x8x32xf32, #tpu.memory_space<vmem>>, %arg10: memref<8x32xf32, #tpu.memory_space<vmem>>) attributes {dimension_semantics = [#tpu.dimension_semantics<parallel>, #tpu.dimension_semantics<parallel>], iteration_bounds = array<i64: 2, 1>, scalar_prefetch = 0 : i64, scratch_operands = 1 : i64, tpu.core_type = #tpu.core_type<tc>, window_params = [{transform_indices = @transform_0, window_bounds = array<i64: 1, 8, 32>}, {transform_indices = @transform_1, window_bounds = array<i64: 1, 8, 32>}, {transform_indices = @transform_2, window_bounds = array<i64: 1, 8, 32>}, {transform_indices = @transform_3, window_bounds = array<i64: 1, 8, 8>}, {transform_indices = @transform_4, window_bounds = array<i64: 1, 8, 32>}, {pipeline_mode = #tpu.pipeline_mode<synchronous>, transform_indices = @transform_5, window_bounds = array<i64: 32, 32>}, {pipeline_mode = #tpu.pipeline_mode<synchronous>, transform_indices = @transform_6, window_bounds = array<i64: 1, 32>}, {transform_indices = @transform_7, window_bounds = array<i64: 1, 8, 32>}]} {
    %c0 = arith.constant 0 : index
    %c0_0 = arith.constant 0 : index
    %c0_1 = arith.constant 0 : index
    %0 = vector.load %arg2[%c0, %c0_0, %c0_1] : memref<1x8x32xbf16, #tpu.memory_space<vmem>>, vector<1x8x32xbf16>
    %1 = vector.shape_cast %0 : vector<1x8x32xbf16> to vector<8x32xbf16>
    %c0_2 = arith.constant 0 : index
    %c0_3 = arith.constant 0 : index
    %c0_4 = arith.constant 0 : index
    %2 = vector.load %arg3[%c0_2, %c0_3, %c0_4] : memref<1x8x32xbf16, #tpu.memory_space<vmem>>, vector<1x8x32xbf16>
    %3 = vector.shape_cast %2 : vector<1x8x32xbf16> to vector<8x32xbf16>
    %c0_5 = arith.constant 0 : index
    %c0_6 = arith.constant 0 : index
    %c0_7 = arith.constant 0 : index
    %4 = vector.load %arg4[%c0_5, %c0_6, %c0_7] : memref<1x8x32xbf16, #tpu.memory_space<vmem>>, vector<1x8x32xbf16>
    %5 = vector.shape_cast %4 : vector<1x8x32xbf16> to vector<8x32xbf16>
    %c0_8 = arith.constant 0 : index
    %c0_9 = arith.constant 0 : index
    %c0_10 = arith.constant 0 : index
    %6 = vector.load %arg5[%c0_8, %c0_9, %c0_10] : memref<1x8x8xi32, #tpu.memory_space<vmem>>, vector<1x8x8xi32>
    %7 = vector.shape_cast %6 : vector<1x8x8xi32> to vector<8x8xi32>
    %c0_i32 = arith.constant 0 : i32
    %8 = vector.broadcast %c0_i32 : i32 to vector<8x8xi32>
    %9 = arith.cmpi eq, %7, %8 : vector<8x8xi32>
    %10 = vector.extract_strided_slice %1 {offsets = [0, 0], sizes = [8, 8], strides = [1, 1]} : vector<8x32xbf16> to vector<8x8xbf16>
    %11 = vector.extract_strided_slice %3 {offsets = [0, 0], sizes = [8, 8], strides = [1, 1]} : vector<8x32xbf16> to vector<8x8xbf16>
    %12 = vector.extract_strided_slice %5 {offsets = [0, 0], sizes = [8, 8], strides = [1, 1]} : vector<8x32xbf16> to vector<8x8xbf16>
    "tpu.trace_start"() <{level = 10 : i32, message = "qd,kd->qk"}> : () -> ()
    %cst = arith.constant dense<0.000000e+00> : vector<8x8xf32>
    %13 = tpu.matmul %10, %11, %cst {dimension_numbers = #tpu.dot_dimension_numbers<[1], [1], [0], [0], [0, 0, 1, 0], [], []>} : vector<8x8xbf16>, vector<8x8xbf16>, vector<8x8xf32> -> vector<8x8xf32>
    "tpu.trace_stop"() : () -> ()
    %cst_11 = arith.constant 0.353553385 : f32
    %14 = vector.broadcast %cst_11 : f32 to vector<8x8xf32>
    %15 = arith.mulf %13, %14 : vector<8x8xf32>
    %cst_12 = arith.constant -1.000000e+09 : f32
    %16 = vector.broadcast %cst_12 : f32 to vector<8x8xf32>
    %17 = arith.select %9, %16, %15 : vector<8x8xi1>, vector<8x8xf32>
    %cst_13 = arith.constant dense<0xFF800000> : vector<8xf32>
    %18 = vector.multi_reduction <maximumf>, %17, %cst_13 [1] : vector<8x8xf32> to vector<8xf32>
    %19 = vector.shape_cast %18 : vector<8xf32> to vector<8x1xf32>
    %20 = vector.broadcast %19 : vector<8x1xf32> to vector<8x8xf32>
    %21 = arith.subf %17, %20 : vector<8x8xf32>
    %22 = math.exp %21 : vector<8x8xf32>
    %cst_14 = arith.constant dense<0.000000e+00> : vector<8xf32>
    %23 = vector.multi_reduction <add>, %22, %cst_14 [1] : vector<8x8xf32> to vector<8xf32>
    %24 = vector.shape_cast %23 : vector<8xf32> to vector<8x1xf32>
    %25 = vector.broadcast %24 : vector<8x1xf32> to vector<8x8xf32>
    %26 = arith.divf %22, %25 : vector<8x8xf32>
    %27 = arith.truncf %26 : vector<8x8xf32> to vector<8x8xbf16>
    %cst_15 = arith.constant dense<0.000000e+00> : vector<8x8xf32>
    %28 = tpu.matmul %27, %12, %cst_15 {dimension_numbers = #tpu.dot_dimension_numbers<[1], [0], [0], [1], [0, 0, 1, 1], [], []>} : vector<8x8xbf16>, vector<8x8xbf16>, vector<8x8xf32> -> vector<8x8xf32>
    %c0_16 = arith.constant 0 : index
    %c0_17 = arith.constant 0 : index
    %29 = vector.load %arg10[%c0_16, %c0_17] : memref<8x32xf32, #tpu.memory_space<vmem>>, vector<8x8xf32>
    tpu.vector_store %arg10[%c0_16, %c0_17], %28 {strides = array<i32>} : memref<8x32xf32, #tpu.memory_space<vmem>>, vector<8x8xf32>,
    %30 = vector.extract_strided_slice %1 {offsets = [0, 8], sizes = [8, 8], strides = [1, 1]} : vector<8x32xbf16> to vector<8x8xbf16>
    %31 = vector.extract_strided_slice %3 {offsets = [0, 8], sizes = [8, 8], strides = [1, 1]} : vector<8x32xbf16> to vector<8x8xbf16>
    %32 = vector.extract_strided_slice %5 {offsets = [0, 8], sizes = [8, 8], strides = [1, 1]} : vector<8x32xbf16> to vector<8x8xbf16>
    "tpu.trace_start"() <{level = 10 : i32, message = "qd,kd->qk"}> : () -> ()
    %cst_18 = arith.constant dense<0.000000e+00> : vector<8x8xf32>
    %33 = tpu.matmul %30, %31, %cst_18 {dimension_numbers = #tpu.dot_dimension_numbers<[1], [1], [0], [0], [0, 0, 1, 0], [], []>} : vector<8x8xbf16>, vector<8x8xbf16>, vector<8x8xf32> -> vector<8x8xf32>
    "tpu.trace_stop"() : () -> ()
    %cst_19 = arith.constant 0.353553385 : f32
    %34 = vector.broadcast %cst_19 : f32 to vector<8x8xf32>
    %35 = arith.mulf %33, %34 : vector<8x8xf32>
    %cst_20 = arith.constant -1.000000e+09 : f32
    %36 = vector.broadcast %cst_20 : f32 to vector<8x8xf32>
    %37 = arith.select %9, %36, %35 : vector<8x8xi1>, vector<8x8xf32>
    %cst_21 = arith.constant dense<0xFF800000> : vector<8xf32>
    %38 = vector.multi_reduction <maximumf>, %37, %cst_21 [1] : vector<8x8xf32> to vector<8xf32>
    %39 = vector.shape_cast %38 : vector<8xf32> to vector<8x1xf32>
    %40 = vector.broadcast %39 : vector<8x1xf32> to vector<8x8xf32>
    %41 = arith.subf %37, %40 : vector<8x8xf32>
    %42 = math.exp %41 : vector<8x8xf32>
    %cst_22 = arith.constant dense<0.000000e+00> : vector<8xf32>
    %43 = vector.multi_reduction <add>, %42, %cst_22 [1] : vector<8x8xf32> to vector<8xf32>
    %44 = vector.shape_cast %43 : vector<8xf32> to vector<8x1xf32>
    %45 = vector.broadcast %44 : vector<8x1xf32> to vector<8x8xf32>
    %46 = arith.divf %42, %45 : vector<8x8xf32>
    %47 = arith.truncf %46 : vector<8x8xf32> to vector<8x8xbf16>
    %cst_23 = arith.constant dense<0.000000e+00> : vector<8x8xf32>
    %48 = tpu.matmul %47, %32, %cst_23 {dimension_numbers = #tpu.dot_dimension_numbers<[1], [0], [0], [1], [0, 0, 1, 1], [], []>} : vector<8x8xbf16>, vector<8x8xbf16>, vector<8x8xf32> -> vector<8x8xf32>
    %c0_24 = arith.constant 0 : index
    %c8 = arith.constant 8 : index
    %49 = vector.load %arg10[%c0_24, %c8] : memref<8x32xf32, #tpu.memory_space<vmem>>, vector<8x8xf32>
    tpu.vector_store %arg10[%c0_24, %c8], %48 {strides = array<i32>} : memref<8x32xf32, #tpu.memory_space<vmem>>, vector<8x8xf32>,
    %50 = vector.extract_strided_slice %1 {offsets = [0, 16], sizes = [8, 8], strides = [1, 1]} : vector<8x32xbf16> to vector<8x8xbf16>
    %51 = vector.extract_strided_slice %3 {offsets = [0, 16], sizes = [8, 8], strides = [1, 1]} : vector<8x32xbf16> to vector<8x8xbf16>
    %52 = vector.extract_strided_slice %5 {offsets = [0, 16], sizes = [8, 8], strides = [1, 1]} : vector<8x32xbf16> to vector<8x8xbf16>
    "tpu.trace_start"() <{level = 10 : i32, message = "qd,kd->qk"}> : () -> ()
    %cst_25 = arith.constant dense<0.000000e+00> : vector<8x8xf32>
    %53 = tpu.matmul %50, %51, %cst_25 {dimension_numbers = #tpu.dot_dimension_numbers<[1], [1], [0], [0], [0, 0, 1, 0], [], []>} : vector<8x8xbf16>, vector<8x8xbf16>, vector<8x8xf32> -> vector<8x8xf32>
    "tpu.trace_stop"() : () -> ()
    %cst_26 = arith.constant 0.353553385 : f32
    %54 = vector.broadcast %cst_26 : f32 to vector<8x8xf32>
    %55 = arith.mulf %53, %54 : vector<8x8xf32>
    %cst_27 = arith.constant -1.000000e+09 : f32
    %56 = vector.broadcast %cst_27 : f32 to vector<8x8xf32>
    %57 = arith.select %9, %56, %55 : vector<8x8xi1>, vector<8x8xf32>
    %cst_28 = arith.constant dense<0xFF800000> : vector<8xf32>
    %58 = vector.multi_reduction <maximumf>, %57, %cst_28 [1] : vector<8x8xf32> to vector<8xf32>
    %59 = vector.shape_cast %58 : vector<8xf32> to vector<8x1xf32>
    %60 = vector.broadcast %59 : vector<8x1xf32> to vector<8x8xf32>
    %61 = arith.subf %57, %60 : vector<8x8xf32>
    %62 = math.exp %61 : vector<8x8xf32>
    %cst_29 = arith.constant dense<0.000000e+00> : vector<8xf32>
    %63 = vector.multi_reduction <add>, %62, %cst_29 [1] : vector<8x8xf32> to vector<8xf32>
    %64 = vector.shape_cast %63 : vector<8xf32> to vector<8x1xf32>
    %65 = vector.broadcast %64 : vector<8x1xf32> to vector<8x8xf32>
    %66 = arith.divf %62, %65 : vector<8x8xf32>
    %67 = arith.truncf %66 : vector<8x8xf32> to vector<8x8xbf16>
    %cst_30 = arith.constant dense<0.000000e+00> : vector<8x8xf32>
    %68 = tpu.matmul %67, %52, %cst_30 {dimension_numbers = #tpu.dot_dimension_numbers<[1], [0], [0], [1], [0, 0, 1, 1], [], []>} : vector<8x8xbf16>, vector<8x8xbf16>, vector<8x8xf32> -> vector<8x8xf32>
    %c0_31 = arith.constant 0 : index
    %c16 = arith.constant 16 : index
    %69 = vector.load %arg10[%c0_31, %c16] : memref<8x32xf32, #tpu.memory_space<vmem>>, vector<8x8xf32>
    tpu.vector_store %arg10[%c0_31, %c16], %68 {strides = array<i32>} : memref<8x32xf32, #tpu.memory_space<vmem>>, vector<8x8xf32>,
    %70 = vector.extract_strided_slice %1 {offsets = [0, 24], sizes = [8, 8], strides = [1, 1]} : vector<8x32xbf16> to vector<8x8xbf16>
    %71 = vector.extract_strided_slice %3 {offsets = [0, 24], sizes = [8, 8], strides = [1, 1]} : vector<8x32xbf16> to vector<8x8xbf16>
    %72 = vector.extract_strided_slice %5 {offsets = [0, 24], sizes = [8, 8], strides = [1, 1]} : vector<8x32xbf16> to vector<8x8xbf16>
    "tpu.trace_start"() <{level = 10 : i32, message = "qd,kd->qk"}> : () -> ()
    %cst_32 = arith.constant dense<0.000000e+00> : vector<8x8xf32>
    %73 = tpu.matmul %70, %71, %cst_32 {dimension_numbers = #tpu.dot_dimension_numbers<[1], [1], [0], [0], [0, 0, 1, 0], [], []>} : vector<8x8xbf16>, vector<8x8xbf16>, vector<8x8xf32> -> vector<8x8xf32>
    "tpu.trace_stop"() : () -> ()
    %cst_33 = arith.constant 0.353553385 : f32
    %74 = vector.broadcast %cst_33 : f32 to vector<8x8xf32>
    %75 = arith.mulf %73, %74 : vector<8x8xf32>
    %cst_34 = arith.constant -1.000000e+09 : f32
    %76 = vector.broadcast %cst_34 : f32 to vector<8x8xf32>
    %77 = arith.select %9, %76, %75 : vector<8x8xi1>, vector<8x8xf32>
    %cst_35 = arith.constant dense<0xFF800000> : vector<8xf32>
    %78 = vector.multi_reduction <maximumf>, %77, %cst_35 [1] : vector<8x8xf32> to vector<8xf32>
    %79 = vector.shape_cast %78 : vector<8xf32> to vector<8x1xf32>
    %80 = vector.broadcast %79 : vector<8x1xf32> to vector<8x8xf32>
    %81 = arith.subf %77, %80 : vector<8x8xf32>
    %82 = math.exp %81 : vector<8x8xf32>
    %cst_36 = arith.constant dense<0.000000e+00> : vector<8xf32>
    %83 = vector.multi_reduction <add>, %82, %cst_36 [1] : vector<8x8xf32> to vector<8xf32>
    %84 = vector.shape_cast %83 : vector<8xf32> to vector<8x1xf32>
    %85 = vector.broadcast %84 : vector<8x1xf32> to vector<8x8xf32>
    %86 = arith.divf %82, %85 : vector<8x8xf32>
    %87 = arith.truncf %86 : vector<8x8xf32> to vector<8x8xbf16>
    %cst_37 = arith.constant dense<0.000000e+00> : vector<8x8xf32>
    %88 = tpu.matmul %87, %72, %cst_37 {dimension_numbers = #tpu.dot_dimension_numbers<[1], [0], [0], [1], [0, 0, 1, 1], [], []>} : vector<8x8xbf16>, vector<8x8xbf16>, vector<8x8xf32> -> vector<8x8xf32>
    %c0_38 = arith.constant 0 : index
    %c24 = arith.constant 24 : index
    %89 = vector.load %arg10[%c0_38, %c24] : memref<8x32xf32, #tpu.memory_space<vmem>>, vector<8x8xf32>
    tpu.vector_store %arg10[%c0_38, %c24], %88 {strides = array<i32>} : memref<8x32xf32, #tpu.memory_space<vmem>>, vector<8x8xf32>,
    %c0_39 = arith.constant 0 : index
    %c0_40 = arith.constant 0 : index
    %90 = vector.load %arg10[%c0_39, %c0_40] : memref<8x32xf32, #tpu.memory_space<vmem>>, vector<8x32xf32>
    %91 = arith.truncf %90 : vector<8x32xf32> to vector<8x32xbf16>
    %c0_41 = arith.constant 0 : index
    %c0_42 = arith.constant 0 : index
    %92 = vector.load %arg7[%c0_41, %c0_42] : memref<32x32xbf16, #tpu.memory_space<vmem>>, vector<32x32xbf16>
    %cst_43 = arith.constant dense<0.000000e+00> : vector<8x32xf32>
    %93 = tpu.matmul %91, %92, %cst_43 {dimension_numbers = #tpu.dot_dimension_numbers<[1], [0], [0], [1], [0, 0, 1, 1], [], []>} : vector<8x32xbf16>, vector<32x32xbf16>, vector<8x32xf32> -> vector<8x32xf32>
    %c0_44 = arith.constant 0 : index
    %c0_45 = arith.constant 0 : index
    %94 = vector.load %arg8[%c0_44, %c0_45] : memref<1x32xf32, #tpu.memory_space<vmem>>, vector<1x32xf32>
    %95 = vector.broadcast %94 : vector<1x32xf32> to vector<8x32xf32>
    %96 = arith.addf %93, %95 : vector<8x32xf32>
    %c0_46 = arith.constant 0 : index
    %c0_47 = arith.constant 0 : index
    %c0_48 = arith.constant 0 : index
    %97 = vector.load %arg6[%c0_46, %c0_47, %c0_48] : memref<1x8x32xf32, #tpu.memory_space<vmem>>, vector<1x8x32xf32>
    %98 = vector.shape_cast %97 : vector<1x8x32xf32> to vector<8x32xf32>
    %99 = arith.addf %98, %96 : vector<8x32xf32>
    %c0_49 = arith.constant 0 : index
    %c0_50 = arith.constant 0 : index
    %c0_51 = arith.constant 0 : index
    %100 = vector.load %arg9[%c0_49, %c0_50, %c0_51] : memref<1x8x32xf32, #tpu.memory_space<vmem>>, vector<1x8x32xf32>
    %101 = vector.shape_cast %100 : vector<1x8x32xf32> to vector<8x32xf32>
    %102 = vector.shape_cast %99 : vector<8x32xf32> to vector<1x8x32xf32>
    tpu.vector_store %arg9[%c0_49, %c0_50, %c0_51], %102 {strides = array<i32>} : memref<1x8x32xf32, #tpu.memory_space<vmem>>, vector<1x8x32xf32>,
    return
  }
  func.func @transform_0(%arg0: i32, %arg1: i32) -> (i32, i32, i32) {
    %c0_i32 = arith.constant 0 : i32
    %c0_i32_0 = arith.constant 0 : i32
    return %arg0, %arg1, %c0_i32 : i32, i32, i32
  }
  func.func @transform_1(%arg0: i32, %arg1: i32) -> (i32, i32, i32) {
    %c0_i32 = arith.constant 0 : i32
    %c0_i32_0 = arith.constant 0 : i32
    %c0_i32_1 = arith.constant 0 : i32
    return %arg0, %c0_i32, %c0_i32_0 : i32, i32, i32
  }
  func.func @transform_2(%arg0: i32, %arg1: i32) -> (i32, i32, i32) {
    %c0_i32 = arith.constant 0 : i32
    %c0_i32_0 = arith.constant 0 : i32
    %c0_i32_1 = arith.constant 0 : i32
    return %arg0, %c0_i32, %c0_i32_0 : i32, i32, i32
  }
  func.func @transform_3(%arg0: i32, %arg1: i32) -> (i32, i32, i32) {
    %c0_i32 = arith.constant 0 : i32
    %c0_i32_0 = arith.constant 0 : i32
    %c0_i32_1 = arith.constant 0 : i32
    return %c0_i32, %arg1, %c0_i32_0 : i32, i32, i32
  }
  func.func @transform_4(%arg0: i32, %arg1: i32) -> (i32, i32, i32) {
    %c0_i32 = arith.constant 0 : i32
    %c0_i32_0 = arith.constant 0 : i32
    return %arg0, %arg1, %c0_i32 : i32, i32, i32
  }
  func.func @transform_5(%arg0: i32, %arg1: i32) -> (i32, i32) {
    %c0_i32 = arith.constant 0 : i32
    %c0_i32_0 = arith.constant 0 : i32
    %c0_i32_1 = arith.constant 0 : i32
    return %c0_i32, %c0_i32_0 : i32, i32
  }
  func.func @transform_6(%arg0: i32, %arg1: i32) -> (i32, i32) {
    %c0_i32 = arith.constant 0 : i32
    %c0_i32_0 = arith.constant 0 : i32
    %c0_i32_1 = arith.constant 0 : i32
    return %c0_i32, %c0_i32_0 : i32, i32
  }
  func.func @transform_7(%arg0: i32, %arg1: i32) -> (i32, i32, i32) {
    %c0_i32 = arith.constant 0 : i32
    %c0_i32_0 = arith.constant 0 : i32
    return %arg0, %arg1, %c0_i32 : i32, i32, i32
  }
}

module attributes {stable_mosaic.version = 11 : i64} {
  func.func @_ln_ffn_resid_kernel(%arg0: i32, %arg1: memref<16x32xf32, #tpu.memory_space<vmem>>, %arg2: memref<1x32xf32, #tpu.memory_space<vmem>>, %arg3: memref<1x32xf32, #tpu.memory_space<vmem>>, %arg4: memref<32x64xbf16, #tpu.memory_space<vmem>>, %arg5: memref<1x64xf32, #tpu.memory_space<vmem>>, %arg6: memref<64x32xbf16, #tpu.memory_space<vmem>>, %arg7: memref<1x32xf32, #tpu.memory_space<vmem>>, %arg8: memref<16x32xf32, #tpu.memory_space<vmem>>) attributes {dimension_semantics = [#tpu.dimension_semantics<parallel>], iteration_bounds = array<i64: 1>, scalar_prefetch = 0 : i64, scratch_operands = 0 : i64, tpu.core_type = #tpu.core_type<tc>, window_params = [{transform_indices = @transform_0, window_bounds = array<i64: 16, 32>}, {pipeline_mode = #tpu.pipeline_mode<synchronous>, transform_indices = @transform_1, window_bounds = array<i64: 1, 32>}, {pipeline_mode = #tpu.pipeline_mode<synchronous>, transform_indices = @transform_2, window_bounds = array<i64: 1, 32>}, {pipeline_mode = #tpu.pipeline_mode<synchronous>, transform_indices = @transform_3, window_bounds = array<i64: 32, 64>}, {pipeline_mode = #tpu.pipeline_mode<synchronous>, transform_indices = @transform_4, window_bounds = array<i64: 1, 64>}, {pipeline_mode = #tpu.pipeline_mode<synchronous>, transform_indices = @transform_5, window_bounds = array<i64: 64, 32>}, {pipeline_mode = #tpu.pipeline_mode<synchronous>, transform_indices = @transform_6, window_bounds = array<i64: 1, 32>}, {transform_indices = @transform_7, window_bounds = array<i64: 16, 32>}]} {
    %c0 = arith.constant 0 : index
    %c0_0 = arith.constant 0 : index
    %0 = vector.load %arg1[%c0, %c0_0] : memref<16x32xf32, #tpu.memory_space<vmem>>, vector<16x32xf32>
    %c0_1 = arith.constant 0 : index
    %c0_2 = arith.constant 0 : index
    %1 = vector.load %arg2[%c0_1, %c0_2] : memref<1x32xf32, #tpu.memory_space<vmem>>, vector<1x32xf32>
    %c0_3 = arith.constant 0 : index
    %c0_4 = arith.constant 0 : index
    %2 = vector.load %arg3[%c0_3, %c0_4] : memref<1x32xf32, #tpu.memory_space<vmem>>, vector<1x32xf32>
    %cst = arith.constant dense<0.000000e+00> : vector<16xf32>
    %3 = vector.multi_reduction <add>, %0, %cst [1] : vector<16x32xf32> to vector<16xf32>
    %4 = vector.shape_cast %3 : vector<16xf32> to vector<16x1xf32>
    %cst_5 = arith.constant 3.200000e+01 : f32
    %5 = vector.broadcast %cst_5 : f32 to vector<16x1xf32>
    %6 = arith.divf %4, %5 : vector<16x1xf32>
    %7 = vector.broadcast %6 : vector<16x1xf32> to vector<16x32xf32>
    %8 = arith.subf %0, %7 : vector<16x32xf32>
    %9 = arith.mulf %8, %8 : vector<16x32xf32>
    %cst_6 = arith.constant dense<0.000000e+00> : vector<16xf32>
    %10 = vector.multi_reduction <add>, %9, %cst_6 [1] : vector<16x32xf32> to vector<16xf32>
    %11 = vector.shape_cast %10 : vector<16xf32> to vector<16x1xf32>
    %cst_7 = arith.constant 0.0322580636 : f32
    %12 = vector.broadcast %cst_7 : f32 to vector<16x1xf32>
    %13 = arith.mulf %11, %12 : vector<16x1xf32>
    %14 = math.sqrt %13 : vector<16x1xf32>
    %cst_8 = arith.constant 9.99999997E-7 : f32
    %15 = vector.broadcast %cst_8 : f32 to vector<16x1xf32>
    %16 = arith.addf %14, %15 : vector<16x1xf32>
    %17 = vector.broadcast %1 : vector<1x32xf32> to vector<16x32xf32>
    %18 = vector.broadcast %16 : vector<16x1xf32> to vector<16x32xf32>
    %19 = arith.divf %17, %18 : vector<16x32xf32>
    %20 = arith.mulf %8, %19 : vector<16x32xf32>
    %21 = vector.broadcast %2 : vector<1x32xf32> to vector<16x32xf32>
    %22 = arith.addf %20, %21 : vector<16x32xf32>
    %23 = arith.truncf %22 : vector<16x32xf32> to vector<16x32xbf16>
    %c0_9 = arith.constant 0 : index
    %c0_10 = arith.constant 0 : index
    %24 = vector.load %arg4[%c0_9, %c0_10] : memref<32x64xbf16, #tpu.memory_space<vmem>>, vector<32x64xbf16>
    %cst_11 = arith.constant dense<0.000000e+00> : vector<16x64xf32>
    %25 = tpu.matmul %23, %24, %cst_11 {dimension_numbers = #tpu.dot_dimension_numbers<[1], [0], [0], [1], [0, 0, 1, 1], [], []>} : vector<16x32xbf16>, vector<32x64xbf16>, vector<16x64xf32> -> vector<16x64xf32>
    %c0_12 = arith.constant 0 : index
    %c0_13 = arith.constant 0 : index
    %26 = vector.load %arg5[%c0_12, %c0_13] : memref<1x64xf32, #tpu.memory_space<vmem>>, vector<1x64xf32>
    %27 = vector.broadcast %26 : vector<1x64xf32> to vector<16x64xf32>
    %28 = arith.addf %25, %27 : vector<16x64xf32>
    %cst_14 = arith.constant 0.000000e+00 : f32
    %29 = vector.broadcast %cst_14 : f32 to vector<16x64xf32>
    %30 = arith.maximumf %28, %29 : vector<16x64xf32>
    %31 = arith.truncf %30 : vector<16x64xf32> to vector<16x64xbf16>
    %c0_15 = arith.constant 0 : index
    %c0_16 = arith.constant 0 : index
    %32 = vector.load %arg6[%c0_15, %c0_16] : memref<64x32xbf16, #tpu.memory_space<vmem>>, vector<64x32xbf16>
    %cst_17 = arith.constant dense<0.000000e+00> : vector<16x32xf32>
    %33 = tpu.matmul %31, %32, %cst_17 {dimension_numbers = #tpu.dot_dimension_numbers<[1], [0], [0], [1], [0, 0, 1, 1], [], []>} : vector<16x64xbf16>, vector<64x32xbf16>, vector<16x32xf32> -> vector<16x32xf32>
    %c0_18 = arith.constant 0 : index
    %c0_19 = arith.constant 0 : index
    %34 = vector.load %arg7[%c0_18, %c0_19] : memref<1x32xf32, #tpu.memory_space<vmem>>, vector<1x32xf32>
    %35 = vector.broadcast %34 : vector<1x32xf32> to vector<16x32xf32>
    %36 = arith.addf %33, %35 : vector<16x32xf32>
    %37 = arith.addf %0, %36 : vector<16x32xf32>
    %c0_20 = arith.constant 0 : index
    %c0_21 = arith.constant 0 : index
    %38 = vector.load %arg8[%c0_20, %c0_21] : memref<16x32xf32, #tpu.memory_space<vmem>>, vector<16x32xf32>
    tpu.vector_store %arg8[%c0_20, %c0_21], %37 {strides = array<i32>} : memref<16x32xf32, #tpu.memory_space<vmem>>, vector<16x32xf32>,
    return
  }
  func.func @transform_0(%arg0: i32) -> (i32, i32) {
    %c0_i32 = arith.constant 0 : i32
    %c0_i32_0 = arith.constant 0 : i32
    return %arg0, %c0_i32 : i32, i32
  }
  func.func @transform_1(%arg0: i32) -> (i32, i32) {
    %c0_i32 = arith.constant 0 : i32
    %c0_i32_0 = arith.constant 0 : i32
    %c0_i32_1 = arith.constant 0 : i32
    return %c0_i32, %c0_i32_0 : i32, i32
  }
  func.func @transform_2(%arg0: i32) -> (i32, i32) {
    %c0_i32 = arith.constant 0 : i32
    %c0_i32_0 = arith.constant 0 : i32
    %c0_i32_1 = arith.constant 0 : i32
    return %c0_i32, %c0_i32_0 : i32, i32
  }
  func.func @transform_3(%arg0: i32) -> (i32, i32) {
    %c0_i32 = arith.constant 0 : i32
    %c0_i32_0 = arith.constant 0 : i32
    %c0_i32_1 = arith.constant 0 : i32
    return %c0_i32, %c0_i32_0 : i32, i32
  }
  func.func @transform_4(%arg0: i32) -> (i32, i32) {
    %c0_i32 = arith.constant 0 : i32
    %c0_i32_0 = arith.constant 0 : i32
    %c0_i32_1 = arith.constant 0 : i32
    return %c0_i32, %c0_i32_0 : i32, i32
  }
  func.func @transform_5(%arg0: i32) -> (i32, i32) {
    %c0_i32 = arith.constant 0 : i32
    %c0_i32_0 = arith.constant 0 : i32
    %c0_i32_1 = arith.constant 0 : i32
    return %c0_i32, %c0_i32_0 : i32, i32
  }
  func.func @transform_6(%arg0: i32) -> (i32, i32) {
    %c0_i32 = arith.constant 0 : i32
    %c0_i32_0 = arith.constant 0 : i32
    %c0_i32_1 = arith.constant 0 : i32
    return %c0_i32, %c0_i32_0 : i32, i32
  }
  func.func @transform_7(%arg0: i32) -> (i32, i32) {
    %c0_i32 = arith.constant 0 : i32
    %c0_i32_0 = arith.constant 0 : i32
    return %arg0, %c0_i32 : i32, i32
  }
}

module attributes {stable_mosaic.version = 11 : i64} {
  func.func @_attn_out_resid_kernel(%arg0: i32, %arg1: i32, %arg2: memref<1x8x32xbf16, #tpu.memory_space<vmem>>, %arg3: memref<1x8x32xbf16, #tpu.memory_space<vmem>>, %arg4: memref<1x8x32xbf16, #tpu.memory_space<vmem>>, %arg5: memref<1x1x8xi32, #tpu.memory_space<vmem>>, %arg6: memref<1x8x32xf32, #tpu.memory_space<vmem>>, %arg7: memref<32x32xbf16, #tpu.memory_space<vmem>>, %arg8: memref<1x32xf32, #tpu.memory_space<vmem>>, %arg9: memref<1x8x32xf32, #tpu.memory_space<vmem>>, %arg10: memref<8x32xf32, #tpu.memory_space<vmem>>) attributes {dimension_semantics = [#tpu.dimension_semantics<parallel>, #tpu.dimension_semantics<parallel>], iteration_bounds = array<i64: 2, 1>, scalar_prefetch = 0 : i64, scratch_operands = 1 : i64, tpu.core_type = #tpu.core_type<tc>, window_params = [{transform_indices = @transform_0, window_bounds = array<i64: 1, 8, 32>}, {transform_indices = @transform_1, window_bounds = array<i64: 1, 8, 32>}, {transform_indices = @transform_2, window_bounds = array<i64: 1, 8, 32>}, {transform_indices = @transform_3, window_bounds = array<i64: 1, 1, 8>}, {transform_indices = @transform_4, window_bounds = array<i64: 1, 8, 32>}, {pipeline_mode = #tpu.pipeline_mode<synchronous>, transform_indices = @transform_5, window_bounds = array<i64: 32, 32>}, {pipeline_mode = #tpu.pipeline_mode<synchronous>, transform_indices = @transform_6, window_bounds = array<i64: 1, 32>}, {transform_indices = @transform_7, window_bounds = array<i64: 1, 8, 32>}]} {
    %c0 = arith.constant 0 : index
    %c0_0 = arith.constant 0 : index
    %c0_1 = arith.constant 0 : index
    %0 = vector.load %arg2[%c0, %c0_0, %c0_1] : memref<1x8x32xbf16, #tpu.memory_space<vmem>>, vector<1x8x32xbf16>
    %1 = vector.shape_cast %0 : vector<1x8x32xbf16> to vector<8x32xbf16>
    %c0_2 = arith.constant 0 : index
    %c0_3 = arith.constant 0 : index
    %c0_4 = arith.constant 0 : index
    %2 = vector.load %arg3[%c0_2, %c0_3, %c0_4] : memref<1x8x32xbf16, #tpu.memory_space<vmem>>, vector<1x8x32xbf16>
    %3 = vector.shape_cast %2 : vector<1x8x32xbf16> to vector<8x32xbf16>
    %c0_5 = arith.constant 0 : index
    %c0_6 = arith.constant 0 : index
    %c0_7 = arith.constant 0 : index
    %4 = vector.load %arg4[%c0_5, %c0_6, %c0_7] : memref<1x8x32xbf16, #tpu.memory_space<vmem>>, vector<1x8x32xbf16>
    %5 = vector.shape_cast %4 : vector<1x8x32xbf16> to vector<8x32xbf16>
    %c0_8 = arith.constant 0 : index
    %c0_9 = arith.constant 0 : index
    %c0_10 = arith.constant 0 : index
    %6 = vector.load %arg5[%c0_8, %c0_9, %c0_10] : memref<1x1x8xi32, #tpu.memory_space<vmem>>, vector<1x1x8xi32>
    %7 = vector.shape_cast %6 : vector<1x1x8xi32> to vector<1x8xi32>
    %8 = vector.shape_cast %7 : vector<1x8xi32> to vector<1x8xi32>
    %9 = vector.broadcast %8 : vector<1x8xi32> to vector<8x8xi32>
    %c0_i32 = arith.constant 0 : i32
    %10 = vector.broadcast %c0_i32 : i32 to vector<8x8xi32>
    %11 = arith.cmpi eq, %9, %10 : vector<8x8xi32>
    %12 = vector.extract_strided_slice %1 {offsets = [0, 0], sizes = [8, 8], strides = [1, 1]} : vector<8x32xbf16> to vector<8x8xbf16>
    %13 = vector.extract_strided_slice %3 {offsets = [0, 0], sizes = [8, 8], strides = [1, 1]} : vector<8x32xbf16> to vector<8x8xbf16>
    %14 = vector.extract_strided_slice %5 {offsets = [0, 0], sizes = [8, 8], strides = [1, 1]} : vector<8x32xbf16> to vector<8x8xbf16>
    "tpu.trace_start"() <{level = 10 : i32, message = "qd,kd->qk"}> : () -> ()
    %cst = arith.constant dense<0.000000e+00> : vector<8x8xf32>
    %15 = tpu.matmul %12, %13, %cst {dimension_numbers = #tpu.dot_dimension_numbers<[1], [1], [0], [0], [0, 0, 1, 0], [], []>} : vector<8x8xbf16>, vector<8x8xbf16>, vector<8x8xf32> -> vector<8x8xf32>
    "tpu.trace_stop"() : () -> ()
    %cst_11 = arith.constant 0.353553385 : f32
    %16 = vector.broadcast %cst_11 : f32 to vector<8x8xf32>
    %17 = arith.mulf %15, %16 : vector<8x8xf32>
    %cst_12 = arith.constant -1.000000e+09 : f32
    %18 = vector.broadcast %cst_12 : f32 to vector<8x8xf32>
    %19 = arith.select %11, %18, %17 : vector<8x8xi1>, vector<8x8xf32>
    %cst_13 = arith.constant dense<0xFF800000> : vector<8xf32>
    %20 = vector.multi_reduction <maximumf>, %19, %cst_13 [1] : vector<8x8xf32> to vector<8xf32>
    %21 = vector.shape_cast %20 : vector<8xf32> to vector<8x1xf32>
    %22 = vector.broadcast %21 : vector<8x1xf32> to vector<8x8xf32>
    %23 = arith.subf %19, %22 : vector<8x8xf32>
    %24 = math.exp %23 : vector<8x8xf32>
    %cst_14 = arith.constant dense<0.000000e+00> : vector<8xf32>
    %25 = vector.multi_reduction <add>, %24, %cst_14 [1] : vector<8x8xf32> to vector<8xf32>
    %26 = vector.shape_cast %25 : vector<8xf32> to vector<8x1xf32>
    %27 = vector.broadcast %26 : vector<8x1xf32> to vector<8x8xf32>
    %28 = arith.divf %24, %27 : vector<8x8xf32>
    %29 = arith.truncf %28 : vector<8x8xf32> to vector<8x8xbf16>
    %cst_15 = arith.constant dense<0.000000e+00> : vector<8x8xf32>
    %30 = tpu.matmul %29, %14, %cst_15 {dimension_numbers = #tpu.dot_dimension_numbers<[1], [0], [0], [1], [0, 0, 1, 1], [], []>} : vector<8x8xbf16>, vector<8x8xbf16>, vector<8x8xf32> -> vector<8x8xf32>
    %c0_16 = arith.constant 0 : index
    %c0_17 = arith.constant 0 : index
    %31 = vector.load %arg10[%c0_16, %c0_17] : memref<8x32xf32, #tpu.memory_space<vmem>>, vector<8x8xf32>
    tpu.vector_store %arg10[%c0_16, %c0_17], %30 {strides = array<i32>} : memref<8x32xf32, #tpu.memory_space<vmem>>, vector<8x8xf32>,
    %32 = vector.extract_strided_slice %1 {offsets = [0, 8], sizes = [8, 8], strides = [1, 1]} : vector<8x32xbf16> to vector<8x8xbf16>
    %33 = vector.extract_strided_slice %3 {offsets = [0, 8], sizes = [8, 8], strides = [1, 1]} : vector<8x32xbf16> to vector<8x8xbf16>
    %34 = vector.extract_strided_slice %5 {offsets = [0, 8], sizes = [8, 8], strides = [1, 1]} : vector<8x32xbf16> to vector<8x8xbf16>
    "tpu.trace_start"() <{level = 10 : i32, message = "qd,kd->qk"}> : () -> ()
    %cst_18 = arith.constant dense<0.000000e+00> : vector<8x8xf32>
    %35 = tpu.matmul %32, %33, %cst_18 {dimension_numbers = #tpu.dot_dimension_numbers<[1], [1], [0], [0], [0, 0, 1, 0], [], []>} : vector<8x8xbf16>, vector<8x8xbf16>, vector<8x8xf32> -> vector<8x8xf32>
    "tpu.trace_stop"() : () -> ()
    %cst_19 = arith.constant 0.353553385 : f32
    %36 = vector.broadcast %cst_19 : f32 to vector<8x8xf32>
    %37 = arith.mulf %35, %36 : vector<8x8xf32>
    %cst_20 = arith.constant -1.000000e+09 : f32
    %38 = vector.broadcast %cst_20 : f32 to vector<8x8xf32>
    %39 = arith.select %11, %38, %37 : vector<8x8xi1>, vector<8x8xf32>
    %cst_21 = arith.constant dense<0xFF800000> : vector<8xf32>
    %40 = vector.multi_reduction <maximumf>, %39, %cst_21 [1] : vector<8x8xf32> to vector<8xf32>
    %41 = vector.shape_cast %40 : vector<8xf32> to vector<8x1xf32>
    %42 = vector.broadcast %41 : vector<8x1xf32> to vector<8x8xf32>
    %43 = arith.subf %39, %42 : vector<8x8xf32>
    %44 = math.exp %43 : vector<8x8xf32>
    %cst_22 = arith.constant dense<0.000000e+00> : vector<8xf32>
    %45 = vector.multi_reduction <add>, %44, %cst_22 [1] : vector<8x8xf32> to vector<8xf32>
    %46 = vector.shape_cast %45 : vector<8xf32> to vector<8x1xf32>
    %47 = vector.broadcast %46 : vector<8x1xf32> to vector<8x8xf32>
    %48 = arith.divf %44, %47 : vector<8x8xf32>
    %49 = arith.truncf %48 : vector<8x8xf32> to vector<8x8xbf16>
    %cst_23 = arith.constant dense<0.000000e+00> : vector<8x8xf32>
    %50 = tpu.matmul %49, %34, %cst_23 {dimension_numbers = #tpu.dot_dimension_numbers<[1], [0], [0], [1], [0, 0, 1, 1], [], []>} : vector<8x8xbf16>, vector<8x8xbf16>, vector<8x8xf32> -> vector<8x8xf32>
    %c0_24 = arith.constant 0 : index
    %c8 = arith.constant 8 : index
    %51 = vector.load %arg10[%c0_24, %c8] : memref<8x32xf32, #tpu.memory_space<vmem>>, vector<8x8xf32>
    tpu.vector_store %arg10[%c0_24, %c8], %50 {strides = array<i32>} : memref<8x32xf32, #tpu.memory_space<vmem>>, vector<8x8xf32>,
    %52 = vector.extract_strided_slice %1 {offsets = [0, 16], sizes = [8, 8], strides = [1, 1]} : vector<8x32xbf16> to vector<8x8xbf16>
    %53 = vector.extract_strided_slice %3 {offsets = [0, 16], sizes = [8, 8], strides = [1, 1]} : vector<8x32xbf16> to vector<8x8xbf16>
    %54 = vector.extract_strided_slice %5 {offsets = [0, 16], sizes = [8, 8], strides = [1, 1]} : vector<8x32xbf16> to vector<8x8xbf16>
    "tpu.trace_start"() <{level = 10 : i32, message = "qd,kd->qk"}> : () -> ()
    %cst_25 = arith.constant dense<0.000000e+00> : vector<8x8xf32>
    %55 = tpu.matmul %52, %53, %cst_25 {dimension_numbers = #tpu.dot_dimension_numbers<[1], [1], [0], [0], [0, 0, 1, 0], [], []>} : vector<8x8xbf16>, vector<8x8xbf16>, vector<8x8xf32> -> vector<8x8xf32>
    "tpu.trace_stop"() : () -> ()
    %cst_26 = arith.constant 0.353553385 : f32
    %56 = vector.broadcast %cst_26 : f32 to vector<8x8xf32>
    %57 = arith.mulf %55, %56 : vector<8x8xf32>
    %cst_27 = arith.constant -1.000000e+09 : f32
    %58 = vector.broadcast %cst_27 : f32 to vector<8x8xf32>
    %59 = arith.select %11, %58, %57 : vector<8x8xi1>, vector<8x8xf32>
    %cst_28 = arith.constant dense<0xFF800000> : vector<8xf32>
    %60 = vector.multi_reduction <maximumf>, %59, %cst_28 [1] : vector<8x8xf32> to vector<8xf32>
    %61 = vector.shape_cast %60 : vector<8xf32> to vector<8x1xf32>
    %62 = vector.broadcast %61 : vector<8x1xf32> to vector<8x8xf32>
    %63 = arith.subf %59, %62 : vector<8x8xf32>
    %64 = math.exp %63 : vector<8x8xf32>
    %cst_29 = arith.constant dense<0.000000e+00> : vector<8xf32>
    %65 = vector.multi_reduction <add>, %64, %cst_29 [1] : vector<8x8xf32> to vector<8xf32>
    %66 = vector.shape_cast %65 : vector<8xf32> to vector<8x1xf32>
    %67 = vector.broadcast %66 : vector<8x1xf32> to vector<8x8xf32>
    %68 = arith.divf %64, %67 : vector<8x8xf32>
    %69 = arith.truncf %68 : vector<8x8xf32> to vector<8x8xbf16>
    %cst_30 = arith.constant dense<0.000000e+00> : vector<8x8xf32>
    %70 = tpu.matmul %69, %54, %cst_30 {dimension_numbers = #tpu.dot_dimension_numbers<[1], [0], [0], [1], [0, 0, 1, 1], [], []>} : vector<8x8xbf16>, vector<8x8xbf16>, vector<8x8xf32> -> vector<8x8xf32>
    %c0_31 = arith.constant 0 : index
    %c16 = arith.constant 16 : index
    %71 = vector.load %arg10[%c0_31, %c16] : memref<8x32xf32, #tpu.memory_space<vmem>>, vector<8x8xf32>
    tpu.vector_store %arg10[%c0_31, %c16], %70 {strides = array<i32>} : memref<8x32xf32, #tpu.memory_space<vmem>>, vector<8x8xf32>,
    %72 = vector.extract_strided_slice %1 {offsets = [0, 24], sizes = [8, 8], strides = [1, 1]} : vector<8x32xbf16> to vector<8x8xbf16>
    %73 = vector.extract_strided_slice %3 {offsets = [0, 24], sizes = [8, 8], strides = [1, 1]} : vector<8x32xbf16> to vector<8x8xbf16>
    %74 = vector.extract_strided_slice %5 {offsets = [0, 24], sizes = [8, 8], strides = [1, 1]} : vector<8x32xbf16> to vector<8x8xbf16>
    "tpu.trace_start"() <{level = 10 : i32, message = "qd,kd->qk"}> : () -> ()
    %cst_32 = arith.constant dense<0.000000e+00> : vector<8x8xf32>
    %75 = tpu.matmul %72, %73, %cst_32 {dimension_numbers = #tpu.dot_dimension_numbers<[1], [1], [0], [0], [0, 0, 1, 0], [], []>} : vector<8x8xbf16>, vector<8x8xbf16>, vector<8x8xf32> -> vector<8x8xf32>
    "tpu.trace_stop"() : () -> ()
    %cst_33 = arith.constant 0.353553385 : f32
    %76 = vector.broadcast %cst_33 : f32 to vector<8x8xf32>
    %77 = arith.mulf %75, %76 : vector<8x8xf32>
    %cst_34 = arith.constant -1.000000e+09 : f32
    %78 = vector.broadcast %cst_34 : f32 to vector<8x8xf32>
    %79 = arith.select %11, %78, %77 : vector<8x8xi1>, vector<8x8xf32>
    %cst_35 = arith.constant dense<0xFF800000> : vector<8xf32>
    %80 = vector.multi_reduction <maximumf>, %79, %cst_35 [1] : vector<8x8xf32> to vector<8xf32>
    %81 = vector.shape_cast %80 : vector<8xf32> to vector<8x1xf32>
    %82 = vector.broadcast %81 : vector<8x1xf32> to vector<8x8xf32>
    %83 = arith.subf %79, %82 : vector<8x8xf32>
    %84 = math.exp %83 : vector<8x8xf32>
    %cst_36 = arith.constant dense<0.000000e+00> : vector<8xf32>
    %85 = vector.multi_reduction <add>, %84, %cst_36 [1] : vector<8x8xf32> to vector<8xf32>
    %86 = vector.shape_cast %85 : vector<8xf32> to vector<8x1xf32>
    %87 = vector.broadcast %86 : vector<8x1xf32> to vector<8x8xf32>
    %88 = arith.divf %84, %87 : vector<8x8xf32>
    %89 = arith.truncf %88 : vector<8x8xf32> to vector<8x8xbf16>
    %cst_37 = arith.constant dense<0.000000e+00> : vector<8x8xf32>
    %90 = tpu.matmul %89, %74, %cst_37 {dimension_numbers = #tpu.dot_dimension_numbers<[1], [0], [0], [1], [0, 0, 1, 1], [], []>} : vector<8x8xbf16>, vector<8x8xbf16>, vector<8x8xf32> -> vector<8x8xf32>
    %c0_38 = arith.constant 0 : index
    %c24 = arith.constant 24 : index
    %91 = vector.load %arg10[%c0_38, %c24] : memref<8x32xf32, #tpu.memory_space<vmem>>, vector<8x8xf32>
    tpu.vector_store %arg10[%c0_38, %c24], %90 {strides = array<i32>} : memref<8x32xf32, #tpu.memory_space<vmem>>, vector<8x8xf32>,
    %c0_39 = arith.constant 0 : index
    %c0_40 = arith.constant 0 : index
    %92 = vector.load %arg10[%c0_39, %c0_40] : memref<8x32xf32, #tpu.memory_space<vmem>>, vector<8x32xf32>
    %93 = arith.truncf %92 : vector<8x32xf32> to vector<8x32xbf16>
    %c0_41 = arith.constant 0 : index
    %c0_42 = arith.constant 0 : index
    %94 = vector.load %arg7[%c0_41, %c0_42] : memref<32x32xbf16, #tpu.memory_space<vmem>>, vector<32x32xbf16>
    %cst_43 = arith.constant dense<0.000000e+00> : vector<8x32xf32>
    %95 = tpu.matmul %93, %94, %cst_43 {dimension_numbers = #tpu.dot_dimension_numbers<[1], [0], [0], [1], [0, 0, 1, 1], [], []>} : vector<8x32xbf16>, vector<32x32xbf16>, vector<8x32xf32> -> vector<8x32xf32>
    %c0_44 = arith.constant 0 : index
    %c0_45 = arith.constant 0 : index
    %96 = vector.load %arg8[%c0_44, %c0_45] : memref<1x32xf32, #tpu.memory_space<vmem>>, vector<1x32xf32>
    %97 = vector.broadcast %96 : vector<1x32xf32> to vector<8x32xf32>
    %98 = arith.addf %95, %97 : vector<8x32xf32>
    %c0_46 = arith.constant 0 : index
    %c0_47 = arith.constant 0 : index
    %c0_48 = arith.constant 0 : index
    %99 = vector.load %arg6[%c0_46, %c0_47, %c0_48] : memref<1x8x32xf32, #tpu.memory_space<vmem>>, vector<1x8x32xf32>
    %100 = vector.shape_cast %99 : vector<1x8x32xf32> to vector<8x32xf32>
    %101 = arith.addf %100, %98 : vector<8x32xf32>
    %c0_49 = arith.constant 0 : index
    %c0_50 = arith.constant 0 : index
    %c0_51 = arith.constant 0 : index
    %102 = vector.load %arg9[%c0_49, %c0_50, %c0_51] : memref<1x8x32xf32, #tpu.memory_space<vmem>>, vector<1x8x32xf32>
    %103 = vector.shape_cast %102 : vector<1x8x32xf32> to vector<8x32xf32>
    %104 = vector.shape_cast %101 : vector<8x32xf32> to vector<1x8x32xf32>
    tpu.vector_store %arg9[%c0_49, %c0_50, %c0_51], %104 {strides = array<i32>} : memref<1x8x32xf32, #tpu.memory_space<vmem>>, vector<1x8x32xf32>,
    return
  }
  func.func @transform_0(%arg0: i32, %arg1: i32) -> (i32, i32, i32) {
    %c0_i32 = arith.constant 0 : i32
    %c0_i32_0 = arith.constant 0 : i32
    return %arg0, %arg1, %c0_i32 : i32, i32, i32
  }
  func.func @transform_1(%arg0: i32, %arg1: i32) -> (i32, i32, i32) {
    %c0_i32 = arith.constant 0 : i32
    %c0_i32_0 = arith.constant 0 : i32
    %c0_i32_1 = arith.constant 0 : i32
    return %arg0, %c0_i32, %c0_i32_0 : i32, i32, i32
  }
  func.func @transform_2(%arg0: i32, %arg1: i32) -> (i32, i32, i32) {
    %c0_i32 = arith.constant 0 : i32
    %c0_i32_0 = arith.constant 0 : i32
    %c0_i32_1 = arith.constant 0 : i32
    return %arg0, %c0_i32, %c0_i32_0 : i32, i32, i32
  }
  func.func @transform_3(%arg0: i32, %arg1: i32) -> (i32, i32, i32) {
    %c0_i32 = arith.constant 0 : i32
    %c0_i32_0 = arith.constant 0 : i32
    %c0_i32_1 = arith.constant 0 : i32
    return %arg0, %c0_i32, %c0_i32_0 : i32, i32, i32
  }
  func.func @transform_4(%arg0: i32, %arg1: i32) -> (i32, i32, i32) {
    %c0_i32 = arith.constant 0 : i32
    %c0_i32_0 = arith.constant 0 : i32
    return %arg0, %arg1, %c0_i32 : i32, i32, i32
  }
  func.func @transform_5(%arg0: i32, %arg1: i32) -> (i32, i32) {
    %c0_i32 = arith.constant 0 : i32
    %c0_i32_0 = arith.constant 0 : i32
    %c0_i32_1 = arith.constant 0 : i32
    return %c0_i32, %c0_i32_0 : i32, i32
  }
  func.func @transform_6(%arg0: i32, %arg1: i32) -> (i32, i32) {
    %c0_i32 = arith.constant 0 : i32
    %c0_i32_0 = arith.constant 0 : i32
    %c0_i32_1 = arith.constant 0 : i32
    return %c0_i32, %c0_i32_0 : i32, i32
  }
  func.func @transform_7(%arg0: i32, %arg1: i32) -> (i32, i32, i32) {
    %c0_i32 = arith.constant 0 : i32
    %c0_i32_0 = arith.constant 0 : i32
    return %arg0, %arg1, %c0_i32 : i32, i32, i32
  }
}

</mosaic_0001>

<llo_original>
// kernel: decoder_layer.8
$region0: #{decoder_layer.8}
  #allocation0 [shape = 'u32[]', space=smem, size = 0x4, offset = 0x4, fixed_abs, tag = 'smem constant byte address 0x4 - core index']
  #allocation1 [shape = 'u32[144,128]{1,0:T(1,128)}', space=vmem, size = 0x12000, scoped, tag = 'internal scratch']
  %s0 = inlined_call_operand.vmem [shape: f32[16,32], index: 0, kind: input, shape index: {}]
  %s1 = inlined_call_operand.vmem [shape: f32[1,32], index: 1, kind: input, shape index: {}]
  %s2 = inlined_call_operand.vmem [shape: f32[1,32], index: 2, kind: input, shape index: {}]
  %s3 = inlined_call_operand.vmem [shape: bf16[32,32], index: 3, kind: input, shape index: {}]
  %s4 = inlined_call_operand.vmem [shape: f32[1,32], index: 4, kind: input, shape index: {}]
  %s5 = inlined_call_operand.vmem [shape: bf16[16,32], index: 5, kind: output, shape index: {}]
  %s6 = sld [smem:[#allocation0]]
  $region30: #{decoder_layer.8} parent=0
    _
  %s8 = ssub.s32 1, %s6
  %s9 = scalar_select 0, %s8, %s6
  // Predicated region
  $region2: #{decoder_layer.8} parent=0 // pred_check
    _
  $region3: #{decoder_layer.8} parent=0 // pred_check_branch
    %11 = sbr.rel (0) target = $region5
  $region4: #{decoder_layer.8} parent=0 // pred_region
    _
  $region5: #{decoder_layer.8} parent=0 // pred_fallthru
    _
  // Predicated region
  $region6: #{decoder_layer.8} parent=0 // pred_check
    _
  $region7: #{decoder_layer.8} parent=0 // pred_check_branch
    %13 = sbr.rel (0) target = $region9
  $region8: #{decoder_layer.8} parent=0 // pred_region
    _
  $region9: #{decoder_layer.8} parent=0 // pred_fallthru
    _
  // Predicated region
  $region10: #{decoder_layer.8} parent=0 // pred_check
    _
  $region11: #{decoder_layer.8} parent=0 // pred_check_branch
    %15 = sbr.rel (0) target = $region13
  $region12: #{decoder_layer.8} parent=0 // pred_region
    _
  $region13: #{decoder_layer.8} parent=0 // pred_fallthru
    _
  // Predicated region
  $region14: #{decoder_layer.8} parent=0 // pred_check
    _
  $region15: #{decoder_layer.8} parent=0 // pred_check_branch
    %17 = sbr.rel (0) target = $region17
  $region16: #{decoder_layer.8} parent=0 // pred_region
    _
  $region17: #{decoder_layer.8} parent=0 // pred_fallthru
    _
  // Predicated region
  $region18: #{decoder_layer.8} parent=0 // pred_check
    _
  $region19: #{decoder_layer.8} parent=0 // pred_check_branch
    %19 = sbr.rel (0) target = $region21
  $region20: #{decoder_layer.8} parent=0 // pred_region
    _
  $region21: #{decoder_layer.8} parent=0 // pred_fallthru
    _
  %v21 = vld [vmem:[%s0] sm:$0xff]
  %v22 = vld [vmem:[%s0 + $0x8] sm:$0xff]
  %v23 = vld [vmem:[%s1] sm:$0x1]
  %v24 = vld [vmem:[%s2] sm:$0x1]
  %vm25 = vcmask 261120
  %v26 = vsel %vm25, %v21, 0.0
  %27 = vadd.xlane.f32.xlu0 %v26
  %v28 = vpop.xlane.xlu0 %27
  %v29 = vsel %vm25, %v22, 0.0
  %30 = vadd.xlane.f32.xlu0 %v29
  %v31 = vpop.xlane.xlu0 %30
  %v32 = vrcp.pop 32.0
  %v33 = vmul.f32 %v28, %v32
  %v34 = vmul.f32 %v31, %v32
  %v35 = vsub.f32 %v21, %v33
  %v36 = vsub.f32 %v22, %v34
  %v37 = vmul.f32 %v35, %v35
  %v38 = vmul.f32 %v36, %v36
  %v39 = vsel %vm25, %v37, 0.0
  %40 = vadd.xlane.f32.xlu0 %v39
  %v41 = vpop.xlane.xlu0 %40
  %v42 = vsel %vm25, %v38, 0.0
  %43 = vadd.xlane.f32.xlu0 %v42
  %v44 = vpop.xlane.xlu0 %43
  %v45 = vmul.f32 %v41, 0.032258064
  %v46 = vmul.f32 %v44, 0.032258064
  %v47 = vrsqrt.pop %v45
  %v48 = vmul.f32 %v45, %v47
  %vm49 = vcmp.eq.f32.partialorder %v45, inf
  %v50 = vsel %vm49, %v45, %v48
  %vm51 = vcmp.eq.f32.partialorder %v45, 0.0
  %v52 = vand.u32 %v45, 2147483648
  %v53 = vsel %vm51, %v52, %v50
  %v54 = vrsqrt.pop %v46
  %v55 = vmul.f32 %v46, %v54
  %vm56 = vcmp.eq.f32.partialorder %v46, inf
  %v57 = vsel %vm56, %v46, %v55
  %vm58 = vcmp.eq.f32.partialorder %v46, 0.0
  %v59 = vand.u32 %v46, 2147483648
  %v60 = vsel %vm58, %v59, %v57
  %v61 = vadd.f32 %v53, 1e-06
  %v62 = vadd.f32 %v60, 1e-06
  %v64 = vlaneseq
  %v65 = vshrl.u32 %v64, 7
  %v66 = vsub.s32 0, %v65
  %v67 = vrot.slane %v23, %v66
  %v69 = vrcp.pop %v61
  %v70 = vmul.f32 %v67, %v69
  %v71 = vrcp.pop %v62
  %v72 = vmul.f32 %v67, %v71
  %v73 = vmul.f32 %v35, %v70
  %v74 = vmul.f32 %v36, %v72
  %v76 = vlaneseq
  %v77 = vshrl.u32 %v76, 7
  %v78 = vsub.s32 0, %v77
  %v79 = vrot.slane %v24, %v78
  %v81 = vadd.f32 %v73, %v79
  %v82 = vadd.f32 %v74, %v79
  %v83 = vpack.c.bf16 %v82, %v81
  %v84 = vld [vmem:[%s3] sm:$0xf]
  %v85 = vld [vmem:[%s3 + $0x4] sm:$0xf]
  %v86 = vld [vmem:[%s3 + $0x8] sm:$0xf]
  %v87 = vld [vmem:[%s3 + $0xc] sm:$0xf]
  %v88 = vld [vmem:[%s4] sm:$0x1]
  %v90 = vlaneseq
  %v91 = vshrl.u32 %v90, 7
  %v92 = vsub.s32 0, %v91
  %v93 = vrot.slane %v88, %v92
  %v99 = vunpack.c.l.b16 %v84
  %v100 = vunpack.c.l.b16 %v85
  %v101 = vunpack.c.l.b16 %v86
  %v102 = vunpack.c.l.b16 %v87
  %v103 = vpack.c.b16 %v100, %v99
  %v104 = vpack.c.b16 %v102, %v101
  %v108 = vsel %vm25, %v83, 0
  %110 = vmatprep.subr.bf16.mxu0 0
  %111 = vmatpush1.bf16.msra.mxu0 %v103
  %112 = vmatprep.subr.bf16.mxu0 0
  %113 = vmatpush1.bf16.msra.mxu0 %v104
  %114 = vmatprep.subr.bf16.mxu0 0
  %115 = vmatpush1.bf16.msra.mxu0 0
  %116 = vmatprep.subr.bf16.mxu0 0
  %117 = vmatpush1.bf16.msra.mxu0 0
  %118 = vmatprep.subr.bf16.mxu0 0
  %119 = vmatpush1.bf16.msra.mxu0 0
  %120 = vmatprep.subr.bf16.mxu0 0
  %121 = vmatpush1.bf16.msra.mxu0 0
  %122 = vmatprep.subr.bf16.mxu0 0
  %123 = vmatpush1.bf16.msra.mxu0 0
  %124 = vmatprep.subr.bf16.mxu0 0
  %125 = vmatpush1.bf16.msra.mxu0 0
  %126 = vmatprep.subr.bf16.mxu0 0
  %127 = vmatpush1.bf16.msra.mxu0 0
  %128 = vmatprep.subr.bf16.mxu0 0
  %129 = vmatpush1.bf16.msra.mxu0 0
  %130 = vmatprep.subr.bf16.mxu0 0
  %131 = vmatpush1.bf16.msra.mxu0 0
  %132 = vmatprep.subr.bf16.mxu0 0
  %133 = vmatpush1.bf16.msra.mxu0 0
  %134 = vmatprep.subr.bf16.mxu0 0
  %135 = vmatpush1.bf16.msra.mxu0 0
  %136 = vmatprep.subr.bf16.mxu0 0
  %137 = vmatpush1.bf16.msra.mxu0 0
  %138 = vmatprep.subr.bf16.mxu0 0
  %139 = vmatpush1.bf16.msra.mxu0 0
  %140 = vmatprep.subr.bf16.mxu0 0
  %141 = vmatpush1.bf16.msra.mxu0 0
  %142 = vmatprep.mubr.bf16.mxu0 0
  %143 = vmatmul.mubr.bf16.gmra.mrb[0].mxu0 %v108
  %v144 = vpop.f32.mrb[0].mxu0
  %v145 = vadd.f32 %v93, %v144
  %v146 = vpop.f32.mrb[0].mxu0
  %v147 = vpop.f32.mrb[0].mxu0
  %v148 = vadd.f32 %v93, %v147
  %v149 = vpop.f32.mrb[0].mxu0
  %150 = vdwg.mxu0
  %v151 = vpack.c.bf16 %v148, %v145
  %v153 = vunpack.c.l.b16 %v151
  %v154 = vunpack.c.h.b16 %v151
  %v155 = vpack.c.b16 %v153, %v153
  %v156 = vpack.c.b16 %v154, %v154
  %vm159 = vcmask 257024
  %160 = vst.msk [vmem:[%s5] sm:$0xf] %vm159, %v155
  %161 = vst.msk [vmem:[%s5 + $0x4] sm:$0xf] %vm159, %v156
  // Predicated region
  $region22: #{decoder_layer.8} parent=0 // pred_check
    _
  $region23: #{decoder_layer.8} parent=0 // pred_check_branch
    %163 = sbr.rel (0) target = $region25
  $region24: #{decoder_layer.8} parent=0 // pred_region
    _
  $region25: #{decoder_layer.8} parent=0 // pred_fallthru
    _
  // Predicated region
  $region26: #{decoder_layer.8} parent=0 // pred_check
    _
  $region27: #{decoder_layer.8} parent=0 // pred_check_branch
    %165 = sbr.rel (0) target = $region29
  $region28: #{decoder_layer.8} parent=0 // pred_region
    _
  $region29: #{decoder_layer.8} parent=0 // pred_fallthru
    _

// kernel: decoder_layer.6
$region0: #{decoder_layer.6}
  #allocation0 [shape = 'u32[]', space=smem, size = 0x4, offset = 0x4, fixed_abs, tag = 'smem constant byte address 0x4 - core index']
  #allocation1 [shape = 'u32[144,128]{1,0:T(1,128)}', space=vmem, size = 0x12000, scoped, tag = 'internal scratch']
  %s0 = inlined_call_operand.vmem [shape: f32[16,32], index: 0, kind: input, shape index: {}]
  %s1 = inlined_call_operand.vmem [shape: f32[1,32], index: 1, kind: input, shape index: {}]
  %s2 = inlined_call_operand.vmem [shape: f32[1,32], index: 2, kind: input, shape index: {}]
  %s3 = inlined_call_operand.vmem [shape: bf16[32,32], index: 3, kind: input, shape index: {}]
  %s4 = inlined_call_operand.vmem [shape: f32[1,32], index: 4, kind: input, shape index: {}]
  %s5 = inlined_call_operand.vmem [shape: bf16[32,32], index: 5, kind: input, shape index: {}]
  %s6 = inlined_call_operand.vmem [shape: f32[1,32], index: 6, kind: input, shape index: {}]
  %s7 = inlined_call_operand.vmem [shape: bf16[32,32], index: 7, kind: input, shape index: {}]
  %s8 = inlined_call_operand.vmem [shape: f32[1,32], index: 8, kind: input, shape index: {}]
  %s9 = inlined_call_operand.vmem [shape: bf16[16,32], index: 9, kind: output, shape index: {0}]
  %s10 = inlined_call_operand.vmem [shape: bf16[16,32], index: 10, kind: output, shape index: {1}]
  %s11 = inlined_call_operand.vmem [shape: bf16[16,32], index: 11, kind: output, shape index: {2}]
  %12 = xla_tuple %s9, %s10, %s11
  %s13 = sld [smem:[#allocation0]]
  $region62: #{decoder_layer.6} parent=0
    _
  %s15 = ssub.s32 1, %s13
  %s16 = scalar_select 0, %s15, %s13
  // Predicated region
  $region2: #{decoder_layer.6} parent=0 // pred_check
    _
  $region3: #{decoder_layer.6} parent=0 // pred_check_branch
    %18 = sbr.rel (0) target = $region5
  $region4: #{decoder_layer.6} parent=0 // pred_region
    _
  $region5: #{decoder_layer.6} parent=0 // pred_fallthru
    _
  // Predicated region
  $region6: #{decoder_layer.6} parent=0 // pred_check
    _
  $region7: #{decoder_layer.6} parent=0 // pred_check_branch
    %20 = sbr.rel (0) target = $region9
  $region8: #{decoder_layer.6} parent=0 // pred_region
    _
  $region9: #{decoder_layer.6} parent=0 // pred_fallthru
    _
  // Predicated region
  $region10: #{decoder_layer.6} parent=0 // pred_check
    _
  $region11: #{decoder_layer.6} parent=0 // pred_check_branch
    %22 = sbr.rel (0) target = $region13
  $region12: #{decoder_layer.6} parent=0 // pred_region
    _
  $region13: #{decoder_layer.6} parent=0 // pred_fallthru
    _
  // Predicated region
  $region14: #{decoder_layer.6} parent=0 // pred_check
    _
  $region15: #{decoder_layer.6} parent=0 // pred_check_branch
    %24 = sbr.rel (0) target = $region17
  $region16: #{decoder_layer.6} parent=0 // pred_region
    _
  $region17: #{decoder_layer.6} parent=0 // pred_fallthru
    _
  // Predicated region
  $region18: #{decoder_layer.6} parent=0 // pred_check
    _
  $region19: #{decoder_layer.6} parent=0 // pred_check_branch
    %26 = sbr.rel (0) target = $region21
  $region20: #{decoder_layer.6} parent=0 // pred_region
    _
  $region21: #{decoder_layer.6} parent=0 // pred_fallthru
    _
  // Predicated region
  $region22: #{decoder_layer.6} parent=0 // pred_check
    _
  $region23: #{decoder_layer.6} parent=0 // pred_check_branch
    %28 = sbr.rel (0) target = $region25
  $region24: #{decoder_layer.6} parent=0 // pred_region
    _
  $region25: #{decoder_layer.6} parent=0 // pred_fallthru
    _
  // Predicated region
  $region26: #{decoder_layer.6} parent=0 // pred_check
    _
  $region27: #{decoder_layer.6} parent=0 // pred_check_branch
    %30 = sbr.rel (0) target = $region29
  $region28: #{decoder_layer.6} parent=0 // pred_region
    _
  $region29: #{decoder_layer.6} parent=0 // pred_fallthru
    _
  // Predicated region
  $region30: #{decoder_layer.6} parent=0 // pred_check
    _
  $region31: #{decoder_layer.6} parent=0 // pred_check_branch
    %32 = sbr.rel (0) target = $region33
  $region32: #{decoder_layer.6} parent=0 // pred_region
    _
  $region33: #{decoder_layer.6} parent=0 // pred_fallthru
    _
  // Predicated region
  $region34: #{decoder_layer.6} parent=0 // pred_check
    _
  $region35: #{decoder_layer.6} parent=0 // pred_check_branch
    %34 = sbr.rel (0) target = $region37
  $region36: #{decoder_layer.6} parent=0 // pred_region
    _
  $region37: #{decoder_layer.6} parent=0 // pred_fallthru
    _
  %v36 = vld [vmem:[%s0] sm:$0xff]
  %v37 = vld [vmem:[%s0 + $0x8] sm:$0xff]
  %v38 = vld [vmem:[%s1] sm:$0x1]
  %v39 = vld [vmem:[%s2] sm:$0x1]
  %vm40 = vcmask 261120
  %v41 = vsel %vm40, %v36, 0.0
  %42 = vadd.xlane.f32.xlu0 %v41
  %v43 = vpop.xlane.xlu0 %42
  %v44 = vsel %vm40, %v37, 0.0
  %45 = vadd.xlane.f32.xlu0 %v44
  %v46 = vpop.xlane.xlu0 %45
  %v47 = vrcp.pop 32.0
  %v48 = vmul.f32 %v43, %v47
  %v49 = vmul.f32 %v46, %v47
  %v50 = vsub.f32 %v36, %v48
  %v51 = vsub.f32 %v37, %v49
  %v52 = vmul.f32 %v50, %v50
  %v53 = vmul.f32 %v51, %v51
  %v54 = vsel %vm40, %v52, 0.0
  %55 = vadd.xlane.f32.xlu0 %v54
  %v56 = vpop.xlane.xlu0 %55
  %v57 = vsel %vm40, %v53, 0.0
  %58 = vadd.xlane.f32.xlu0 %v57
  %v59 = vpop.xlane.xlu0 %58
  %v60 = vmul.f32 %v56, 0.032258064
  %v61 = vmul.f32 %v59, 0.032258064
  %v62 = vrsqrt.pop %v60
  %v63 = vmul.f32 %v60, %v62
  %vm64 = vcmp.eq.f32.partialorder %v60, inf
  %v65 = vsel %vm64, %v60, %v63
  %vm66 = vcmp.eq.f32.partialorder %v60, 0.0
  %v67 = vand.u32 %v60, 2147483648
  %v68 = vsel %vm66, %v67, %v65
  %v69 = vrsqrt.pop %v61
  %v70 = vmul.f32 %v61, %v69
  %vm71 = vcmp.eq.f32.partialorder %v61, inf
  %v72 = vsel %vm71, %v61, %v70
  %vm73 = vcmp.eq.f32.partialorder %v61, 0.0
  %v74 = vand.u32 %v61, 2147483648
  %v75 = vsel %vm73, %v74, %v72
  %v76 = vadd.f32 %v68, 1e-06
  %v77 = vadd.f32 %v75, 1e-06
  %v79 = vlaneseq
  %v80 = vshrl.u32 %v79, 7
  %v81 = vsub.s32 0, %v80
  %v82 = vrot.slane %v38, %v81
  %v84 = vrcp.pop %v76
  %v85 = vmul.f32 %v82, %v84
  %v86 = vrcp.pop %v77
  %v87 = vmul.f32 %v82, %v86
  %v88 = vmul.f32 %v50, %v85
  %v89 = vmul.f32 %v51, %v87
  %v91 = vlaneseq
  %v92 = vshrl.u32 %v91, 7
  %v93 = vsub.s32 0, %v92
  %v94 = vrot.slane %v39, %v93
  %v96 = vadd.f32 %v88, %v94
  %v97 = vadd.f32 %v89, %v94
  %v98 = vpack.c.bf16 %v97, %v96
  %v99 = vld [vmem:[%s3] sm:$0xf]
  %v100 = vld [vmem:[%s3 + $0x4] sm:$0xf]
  %v101 = vld [vmem:[%s3 + $0x8] sm:$0xf]
  %v102 = vld [vmem:[%s3 + $0xc] sm:$0xf]
  %v103 = vld [vmem:[%s4] sm:$0x1]
  %v105 = vlaneseq
  %v106 = vshrl.u32 %v105, 7
  %v107 = vsub.s32 0, %v106
  %v108 = vrot.slane %v103, %v107
  %v114 = vunpack.c.l.b16 %v99
  %v115 = vunpack.c.l.b16 %v100
  %v116 = vunpack.c.l.b16 %v101
  %v117 = vunpack.c.l.b16 %v102
  %v118 = vpack.c.b16 %v115, %v114
  %v119 = vpack.c.b16 %v117, %v116
  %v123 = vsel %vm40, %v98, 0
  %125 = vmatprep.subr.bf16.mxu0 0
  %126 = vmatpush1.bf16.msra.mxu0 %v118
  %127 = vmatprep.subr.bf16.mxu0 0
  %128 = vmatpush1.bf16.msra.mxu0 %v119
  %129 = vmatprep.subr.bf16.mxu0 0
  %130 = vmatpush1.bf16.msra.mxu0 0
  %131 = vmatprep.subr.bf16.mxu0 0
  %132 = vmatpush1.bf16.msra.mxu0 0
  %133 = vmatprep.subr.bf16.mxu0 0
  %134 = vmatpush1.bf16.msra.mxu0 0
  %135 = vmatprep.subr.bf16.mxu0 0
  %136 = vmatpush1.bf16.msra.mxu0 0
  %137 = vmatprep.subr.bf16.mxu0 0
  %138 = vmatpush1.bf16.msra.mxu0 0
  %139 = vmatprep.subr.bf16.mxu0 0
  %140 = vmatpush1.bf16.msra.mxu0 0
  %141 = vmatprep.subr.bf16.mxu0 0
  %142 = vmatpush1.bf16.msra.mxu0 0
  %143 = vmatprep.subr.bf16.mxu0 0
  %144 = vmatpush1.bf16.msra.mxu0 0
  %145 = vmatprep.subr.bf16.mxu0 0
  %146 = vmatpush1.bf16.msra.mxu0 0
  %147 = vmatprep.subr.bf16.mxu0 0
  %148 = vmatpush1.bf16.msra.mxu0 0
  %149 = vmatprep.subr.bf16.mxu0 0
  %150 = vmatpush1.bf16.msra.mxu0 0
  %151 = vmatprep.subr.bf16.mxu0 0
  %152 = vmatpush1.bf16.msra.mxu0 0
  %153 = vmatprep.subr.bf16.mxu0 0
  %154 = vmatpush1.bf16.msra.mxu0 0
  %155 = vmatprep.subr.bf16.mxu0 0
  %156 = vmatpush1.bf16.msra.mxu0 0
  %157 = vmatprep.mubr.bf16.mxu0 0
  %158 = vmatmul.mubr.bf16.gmra.mrb[0].mxu0 %v123
  %v159 = vpop.f32.mrb[0].mxu0
  %v160 = vadd.f32 %v108, %v159
  %v161 = vpop.f32.mrb[0].mxu0
  %v162 = vpop.f32.mrb[0].mxu0
  %v163 = vadd.f32 %v108, %v162
  %v164 = vpop.f32.mrb[0].mxu0
  %165 = vdwg.mxu0
  %v166 = vpack.c.bf16 %v163, %v160
  %v168 = vunpack.c.l.b16 %v166
  %v169 = vunpack.c.h.b16 %v166
  %v170 = vpack.c.b16 %v168, %v168
  %v171 = vpack.c.b16 %v169, %v169
  %vm174 = vcmask 257024
  %175 = vst.msk [vmem:[%s9] sm:$0xf] %vm174, %v170
  %176 = vst.msk [vmem:[%s9 + $0x4] sm:$0xf] %vm174, %v171
  %v177 = vld [vmem:[%s5] sm:$0xf]
  %v178 = vld [vmem:[%s5 + $0x4] sm:$0xf]
  %v179 = vld [vmem:[%s5 + $0x8] sm:$0xf]
  %v180 = vld [vmem:[%s5 + $0xc] sm:$0xf]
  %v181 = vld [vmem:[%s6] sm:$0x1]
  %v183 = vlaneseq
  %v184 = vshrl.u32 %v183, 7
  %v185 = vsub.s32 0, %v184
  %v186 = vrot.slane %v181, %v185
  %v192 = vunpack.c.l.b16 %v177
  %v193 = vunpack.c.l.b16 %v178
  %v194 = vunpack.c.l.b16 %v179
  %v195 = vunpack.c.l.b16 %v180
  %v196 = vpack.c.b16 %v193, %v192
  %v197 = vpack.c.b16 %v195, %v194
  %200 = vmatprep.subr.bf16.mxu0 0
  %201 = vmatpush1.bf16.msra.mxu0 %v196
  %202 = vmatprep.subr.bf16.mxu0 0
  %203 = vmatpush1.bf16.msra.mxu0 %v197
  %204 = vmatprep.subr.bf16.mxu0 0
  %205 = vmatpush1.bf16.msra.mxu0 0
  %206 = vmatprep.subr.bf16.mxu0 0
  %207 = vmatpush1.bf16.msra.mxu0 0
  %208 = vmatprep.subr.bf16.mxu0 0
  %209 = vmatpush1.bf16.msra.mxu0 0
  %210 = vmatprep.subr.bf16.mxu0 0
  %211 = vmatpush1.bf16.msra.mxu0 0
  %212 = vmatprep.subr.bf16.mxu0 0
  %213 = vmatpush1.bf16.msra.mxu0 0
  %214 = vmatprep.subr.bf16.mxu0 0
  %215 = vmatpush1.bf16.msra.mxu0 0
  %216 = vmatprep.subr.bf16.mxu0 0
  %217 = vmatpush1.bf16.msra.mxu0 0
  %218 = vmatprep.subr.bf16.mxu0 0
  %219 = vmatpush1.bf16.msra.mxu0 0
  %220 = vmatprep.subr.bf16.mxu0 0
  %221 = vmatpush1.bf16.msra.mxu0 0
  %222 = vmatprep.subr.bf16.mxu0 0
  %223 = vmatpush1.bf16.msra.mxu0 0
  %224 = vmatprep.subr.bf16.mxu0 0
  %225 = vmatpush1.bf16.msra.mxu0 0
  %226 = vmatprep.subr.bf16.mxu0 0
  %227 = vmatpush1.bf16.msra.mxu0 0
  %228 = vmatprep.subr.bf16.mxu0 0
  %229 = vmatpush1.bf16.msra.mxu0 0
  %230 = vmatprep.subr.bf16.mxu0 0
  %231 = vmatpush1.bf16.msra.mxu0 0
  %232 = vmatprep.mubr.bf16.mxu0 0
  %233 = vmatmul.mubr.bf16.gmra.mrb[0].mxu0 %v123
  %v234 = vpop.f32.mrb[0].mxu0
  %v235 = vadd.f32 %v186, %v234
  %v236 = vpop.f32.mrb[0].mxu0
  %v237 = vpop.f32.mrb[0].mxu0
  %v238 = vadd.f32 %v186, %v237
  %v239 = vpop.f32.mrb[0].mxu0
  %240 = vdwg.mxu0
  %v241 = vpack.c.bf16 %v238, %v235
  %v243 = vunpack.c.l.b16 %v241
  %v244 = vunpack.c.h.b16 %v241
  %v245 = vpack.c.b16 %v243, %v243
  %v246 = vpack.c.b16 %v244, %v244
  %249 = vst.msk [vmem:[%s10] sm:$0xf] %vm174, %v245
  %250 = vst.msk [vmem:[%s10 + $0x4] sm:$0xf] %vm174, %v246
  %v251 = vld [vmem:[%s7] sm:$0xf]
  %v252 = vld [vmem:[%s7 + $0x4] sm:$0xf]
  %v253 = vld [vmem:[%s7 + $0x8] sm:$0xf]
  %v254 = vld [vmem:[%s7 + $0xc] sm:$0xf]
  %v255 = vld [vmem:[%s8] sm:$0x1]
  %v257 = vlaneseq
  %v258 = vshrl.u32 %v257, 7
  %v259 = vsub.s32 0, %v258
  %v260 = vrot.slane %v255, %v259
  %v266 = vunpack.c.l.b16 %v251
  %v267 = vunpack.c.l.b16 %v252
  %v268 = vunpack.c.l.b16 %v253
  %v269 = vunpack.c.l.b16 %v254
  %v270 = vpack.c.b16 %v267, %v266
  %v271 = vpack.c.b16 %v269, %v268
  %274 = vmatprep.subr.bf16.mxu0 0
  %275 = vmatpush1.bf16.msra.mxu0 %v270
  %276 = vmatprep.subr.bf16.mxu0 0
  %277 = vmatpush1.bf16.msra.mxu0 %v271
  %278 = vmatprep.subr.bf16.mxu0 0
  %279 = vmatpush1.bf16.msra.mxu0 0
  %280 = vmatprep.subr.bf16.mxu0 0
  %281 = vmatpush1.bf16.msra.mxu0 0
  %282 = vmatprep.subr.bf16.mxu0 0
  %283 = vmatpush1.bf16.msra.mxu0 0
  %284 = vmatprep.subr.bf16.mxu0 0
  %285 = vmatpush1.bf16.msra.mxu0 0
  %286 = vmatprep.subr.bf16.mxu0 0
  %287 = vmatpush1.bf16.msra.mxu0 0
  %288 = vmatprep.subr.bf16.mxu0 0
  %289 = vmatpush1.bf16.msra.mxu0 0
  %290 = vmatprep.subr.bf16.mxu0 0
  %291 = vmatpush1.bf16.msra.mxu0 0
  %292 = vmatprep.subr.bf16.mxu0 0
  %293 = vmatpush1.bf16.msra.mxu0 0
  %294 = vmatprep.subr.bf16.mxu0 0
  %295 = vmatpush1.bf16.msra.mxu0 0
  %296 = vmatprep.subr.bf16.mxu0 0
  %297 = vmatpush1.bf16.msra.mxu0 0
  %298 = vmatprep.subr.bf16.mxu0 0
  %299 = vmatpush1.bf16.msra.mxu0 0
  %300 = vmatprep.subr.bf16.mxu0 0
  %301 = vmatpush1.bf16.msra.mxu0 0
  %302 = vmatprep.subr.bf16.mxu0 0
  %303 = vmatpush1.bf16.msra.mxu0 0
  %304 = vmatprep.subr.bf16.mxu0 0
  %305 = vmatpush1.bf16.msra.mxu0 0
  %306 = vmatprep.mubr.bf16.mxu0 0
  %307 = vmatmul.mubr.bf16.gmra.mrb[0].mxu0 %v123
  %v308 = vpop.f32.mrb[0].mxu0
  %v309 = vadd.f32 %v260, %v308
  %v310 = vpop.f32.mrb[0].mxu0
  %v311 = vpop.f32.mrb[0].mxu0
  %v312 = vadd.f32 %v260, %v311
  %v313 = vpop.f32.mrb[0].mxu0
  %314 = vdwg.mxu0
  %v315 = vpack.c.bf16 %v312, %v309
  %v317 = vunpack.c.l.b16 %v315
  %v318 = vunpack.c.h.b16 %v315
  %v319 = vpack.c.b16 %v317, %v317
  %v320 = vpack.c.b16 %v318, %v318
  %323 = vst.msk [vmem:[%s11] sm:$0xf] %vm174, %v319
  %324 = vst.msk [vmem:[%s11 + $0x4] sm:$0xf] %vm174, %v320
  // Predicated region
  $region38: #{decoder_layer.6} parent=0 // pred_check
    _
  $region39: #{decoder_layer.6} parent=0 // pred_check_branch
    %326 = sbr.rel (0) target = $region41
  $region40: #{decoder_layer.6} parent=0 // pred_region
    _
  $region41: #{decoder_layer.6} parent=0 // pred_fallthru
    _
  // Predicated region
  $region42: #{decoder_layer.6} parent=0 // pred_check
    _
  $region43: #{decoder_layer.6} parent=0 // pred_check_branch
    %328 = sbr.rel (0) target = $region45
  $region44: #{decoder_layer.6} parent=0 // pred_region
    _
  $region45: #{decoder_layer.6} parent=0 // pred_fallthru
    _
  // Predicated region
  $region46: #{decoder_layer.6} parent=0 // pred_check
    _
  $region47: #{decoder_layer.6} parent=0 // pred_check_branch
    %330 = sbr.rel (0) target = $region49
  $region48: #{decoder_layer.6} parent=0 // pred_region
    _
  $region49: #{decoder_layer.6} parent=0 // pred_fallthru
    _
  // Predicated region
  $region50: #{decoder_layer.6} parent=0 // pred_check
    _
  $region51: #{decoder_layer.6} parent=0 // pred_check_branch
    %332 = sbr.rel (0) target = $region53
  $region52: #{decoder_layer.6} parent=0 // pred_region
    _
  $region53: #{decoder_layer.6} parent=0 // pred_fallthru
    _
  // Predicated region
  $region54: #{decoder_layer.6} parent=0 // pred_check
    _
  $region55: #{decoder_layer.6} parent=0 // pred_check_branch
    %334 = sbr.rel (0) target = $region57
  $region56: #{decoder_layer.6} parent=0 // pred_region
    _
  $region57: #{decoder_layer.6} parent=0 // pred_fallthru
    _
  // Predicated region
  $region58: #{decoder_layer.6} parent=0 // pred_check
    _
  $region59: #{decoder_layer.6} parent=0 // pred_check_branch
    %336 = sbr.rel (0) target = $region61
  $region60: #{decoder_layer.6} parent=0 // pred_region
    _
  $region61: #{decoder_layer.6} parent=0 // pred_fallthru
    _

// kernel: decoder_layer.9
$region0: #{decoder_layer.9}
  #allocation0 [shape = 'u32[]', space=smem, size = 0x4, offset = 0x4, fixed_abs, tag = 'smem constant byte address 0x4 - core index']
  #allocation1 [shape = 'u32[144,128]{1,0:T(1,128)}', space=vmem, size = 0x12000, scoped, tag = 'internal scratch']
  %s0 = inlined_call_operand.vmem [shape: f32[16,32], index: 0, kind: input, shape index: {}]
  %s1 = inlined_call_operand.vmem [shape: bf16[32,32], index: 1, kind: input, shape index: {}]
  %s2 = inlined_call_operand.vmem [shape: f32[1,32], index: 2, kind: input, shape index: {}]
  %s3 = inlined_call_operand.vmem [shape: bf16[32,32], index: 3, kind: input, shape index: {}]
  %s4 = inlined_call_operand.vmem [shape: f32[1,32], index: 4, kind: input, shape index: {}]
  %s5 = inlined_call_operand.vmem [shape: bf16[16,32], index: 5, kind: output, shape index: {0}]
  %s6 = inlined_call_operand.vmem [shape: bf16[16,32], index: 6, kind: output, shape index: {1}]
  %7 = xla_tuple %s5, %s6
  %s8 = sld [smem:[#allocation0]]
  $region38: #{decoder_layer.9} parent=0
    _
  %s10 = ssub.s32 1, %s8
  %s11 = scalar_select 0, %s10, %s8
  // Predicated region
  $region2: #{decoder_layer.9} parent=0 // pred_check
    _
  $region3: #{decoder_layer.9} parent=0 // pred_check_branch
    %13 = sbr.rel (0) target = $region5
  $region4: #{decoder_layer.9} parent=0 // pred_region
    _
  $region5: #{decoder_layer.9} parent=0 // pred_fallthru
    _
  // Predicated region
  $region6: #{decoder_layer.9} parent=0 // pred_check
    _
  $region7: #{decoder_layer.9} parent=0 // pred_check_branch
    %15 = sbr.rel (0) target = $region9
  $region8: #{decoder_layer.9} parent=0 // pred_region
    _
  $region9: #{decoder_layer.9} parent=0 // pred_fallthru
    _
  // Predicated region
  $region10: #{decoder_layer.9} parent=0 // pred_check
    _
  $region11: #{decoder_layer.9} parent=0 // pred_check_branch
    %17 = sbr.rel (0) target = $region13
  $region12: #{decoder_layer.9} parent=0 // pred_region
    _
  $region13: #{decoder_layer.9} parent=0 // pred_fallthru
    _
  // Predicated region
  $region14: #{decoder_layer.9} parent=0 // pred_check
    _
  $region15: #{decoder_layer.9} parent=0 // pred_check_branch
    %19 = sbr.rel (0) target = $region17
  $region16: #{decoder_layer.9} parent=0 // pred_region
    _
  $region17: #{decoder_layer.9} parent=0 // pred_fallthru
    _
  // Predicated region
  $region18: #{decoder_layer.9} parent=0 // pred_check
    _
  $region19: #{decoder_layer.9} parent=0 // pred_check_branch
    %21 = sbr.rel (0) target = $region21
  $region20: #{decoder_layer.9} parent=0 // pred_region
    _
  $region21: #{decoder_layer.9} parent=0 // pred_fallthru
    _
  %v23 = vld [vmem:[%s0] sm:$0xff]
  %v24 = vld [vmem:[%s0 + $0x8] sm:$0xff]
  %v25 = vpack.c.bf16 %v24, %v23
  %v26 = vld [vmem:[%s1] sm:$0xf]
  %v27 = vld [vmem:[%s1 + $0x4] sm:$0xf]
  %v28 = vld [vmem:[%s1 + $0x8] sm:$0xf]
  %v29 = vld [vmem:[%s1 + $0xc] sm:$0xf]
  %v30 = vld [vmem:[%s2] sm:$0x1]
  %v32 = vlaneseq
  %v33 = vshrl.u32 %v32, 7
  %v34 = vsub.s32 0, %v33
  %v35 = vrot.slane %v30, %v34
  %v41 = vunpack.c.l.b16 %v26
  %v42 = vunpack.c.l.b16 %v27
  %v43 = vunpack.c.l.b16 %v28
  %v44 = vunpack.c.l.b16 %v29
  %v45 = vpack.c.b16 %v42, %v41
  %v46 = vpack.c.b16 %v44, %v43
  %vm49 = vcmask 261120
  %v51 = vsel %vm49, %v25, 0
  %53 = vmatprep.subr.bf16.mxu0 0
  %54 = vmatpush1.bf16.msra.mxu0 %v45
  %55 = vmatprep.subr.bf16.mxu0 0
  %56 = vmatpush1.bf16.msra.mxu0 %v46
  %57 = vmatprep.subr.bf16.mxu0 0
  %58 = vmatpush1.bf16.msra.mxu0 0
  %59 = vmatprep.subr.bf16.mxu0 0
  %60 = vmatpush1.bf16.msra.mxu0 0
  %61 = vmatprep.subr.bf16.mxu0 0
  %62 = vmatpush1.bf16.msra.mxu0 0
  %63 = vmatprep.subr.bf16.mxu0 0
  %64 = vmatpush1.bf16.msra.mxu0 0
  %65 = vmatprep.subr.bf16.mxu0 0
  %66 = vmatpush1.bf16.msra.mxu0 0
  %67 = vmatprep.subr.bf16.mxu0 0
  %68 = vmatpush1.bf16.msra.mxu0 0
  %69 = vmatprep.subr.bf16.mxu0 0
  %70 = vmatpush1.bf16.msra.mxu0 0
  %71 = vmatprep.subr.bf16.mxu0 0
  %72 = vmatpush1.bf16.msra.mxu0 0
  %73 = vmatprep.subr.bf16.mxu0 0
  %74 = vmatpush1.bf16.msra.mxu0 0
  %75 = vmatprep.subr.bf16.mxu0 0
  %76 = vmatpush1.bf16.msra.mxu0 0
  %77 = vmatprep.subr.bf16.mxu0 0
  %78 = vmatpush1.bf16.msra.mxu0 0
  %79 = vmatprep.subr.bf16.mxu0 0
  %80 = vmatpush1.bf16.msra.mxu0 0
  %81 = vmatprep.subr.bf16.mxu0 0
  %82 = vmatpush1.bf16.msra.mxu0 0
  %83 = vmatprep.subr.bf16.mxu0 0
  %84 = vmatpush1.bf16.msra.mxu0 0
  %85 = vmatprep.mubr.bf16.mxu0 0
  %86 = vmatmul.mubr.bf16.gmra.mrb[0].mxu0 %v51
  %v87 = vpop.f32.mrb[0].mxu0
  %v88 = vadd.f32 %v35, %v87
  %v89 = vpop.f32.mrb[0].mxu0
  %v90 = vpop.f32.mrb[0].mxu0
  %v91 = vadd.f32 %v35, %v90
  %v92 = vpop.f32.mrb[0].mxu0
  %93 = vdwg.mxu0
  %v94 = vpack.c.bf16 %v91, %v88
  %v96 = vunpack.c.l.b16 %v94
  %v97 = vunpack.c.h.b16 %v94
  %v98 = vpack.c.b16 %v96, %v96
  %v99 = vpack.c.b16 %v97, %v97
  %vm102 = vcmask 257024
  %103 = vst.msk [vmem:[%s5] sm:$0xf] %vm102, %v98
  %104 = vst.msk [vmem:[%s5 + $0x4] sm:$0xf] %vm102, %v99
  %v105 = vld [vmem:[%s3] sm:$0xf]
  %v106 = vld [vmem:[%s3 + $0x4] sm:$0xf]
  %v107 = vld [vmem:[%s3 + $0x8] sm:$0xf]
  %v108 = vld [vmem:[%s3 + $0xc] sm:$0xf]
  %v109 = vld [vmem:[%s4] sm:$0x1]
  %v111 = vlaneseq
  %v112 = vshrl.u32 %v111, 7
  %v113 = vsub.s32 0, %v112
  %v114 = vrot.slane %v109, %v113
  %v120 = vunpack.c.l.b16 %v105
  %v121 = vunpack.c.l.b16 %v106
  %v122 = vunpack.c.l.b16 %v107
  %v123 = vunpack.c.l.b16 %v108
  %v124 = vpack.c.b16 %v121, %v120
  %v125 = vpack.c.b16 %v123, %v122
  %128 = vmatprep.subr.bf16.mxu0 0
  %129 = vmatpush1.bf16.msra.mxu0 %v124
  %130 = vmatprep.subr.bf16.mxu0 0
  %131 = vmatpush1.bf16.msra.mxu0 %v125
  %132 = vmatprep.subr.bf16.mxu0 0
  %133 = vmatpush1.bf16.msra.mxu0 0
  %134 = vmatprep.subr.bf16.mxu0 0
  %135 = vmatpush1.bf16.msra.mxu0 0
  %136 = vmatprep.subr.bf16.mxu0 0
  %137 = vmatpush1.bf16.msra.mxu0 0
  %138 = vmatprep.subr.bf16.mxu0 0
  %139 = vmatpush1.bf16.msra.mxu0 0
  %140 = vmatprep.subr.bf16.mxu0 0
  %141 = vmatpush1.bf16.msra.mxu0 0
  %142 = vmatprep.subr.bf16.mxu0 0
  %143 = vmatpush1.bf16.msra.mxu0 0
  %144 = vmatprep.subr.bf16.mxu0 0
  %145 = vmatpush1.bf16.msra.mxu0 0
  %146 = vmatprep.subr.bf16.mxu0 0
  %147 = vmatpush1.bf16.msra.mxu0 0
  %148 = vmatprep.subr.bf16.mxu0 0
  %149 = vmatpush1.bf16.msra.mxu0 0
  %150 = vmatprep.subr.bf16.mxu0 0
  %151 = vmatpush1.bf16.msra.mxu0 0
  %152 = vmatprep.subr.bf16.mxu0 0
  %153 = vmatpush1.bf16.msra.mxu0 0
  %154 = vmatprep.subr.bf16.mxu0 0
  %155 = vmatpush1.bf16.msra.mxu0 0
  %156 = vmatprep.subr.bf16.mxu0 0
  %157 = vmatpush1.bf16.msra.mxu0 0
  %158 = vmatprep.subr.bf16.mxu0 0
  %159 = vmatpush1.bf16.msra.mxu0 0
  %160 = vmatprep.mubr.bf16.mxu0 0
  %161 = vmatmul.mubr.bf16.gmra.mrb[0].mxu0 %v51
  %v162 = vpop.f32.mrb[0].mxu0
  %v163 = vadd.f32 %v114, %v162
  %v164 = vpop.f32.mrb[0].mxu0
  %v165 = vpop.f32.mrb[0].mxu0
  %v166 = vadd.f32 %v114, %v165
  %v167 = vpop.f32.mrb[0].mxu0
  %168 = vdwg.mxu0
  %v169 = vpack.c.bf16 %v166, %v163
  %v171 = vunpack.c.l.b16 %v169
  %v172 = vunpack.c.h.b16 %v169
  %v173 = vpack.c.b16 %v171, %v171
  %v174 = vpack.c.b16 %v172, %v172
  %177 = vst.msk [vmem:[%s6] sm:$0xf] %vm102, %v173
  %178 = vst.msk [vmem:[%s6 + $0x4] sm:$0xf] %vm102, %v174
  // Predicated region
  $region22: #{decoder_layer.9} parent=0 // pred_check
    _
  $region23: #{decoder_layer.9} parent=0 // pred_check_branch
    %180 = sbr.rel (0) target = $region25
  $region24: #{decoder_layer.9} parent=0 // pred_region
    _
  $region25: #{decoder_layer.9} parent=0 // pred_fallthru
    _
  // Predicated region
  $region26: #{decoder_layer.9} parent=0 // pred_check
    _
  $region27: #{decoder_layer.9} parent=0 // pred_check_branch
    %182 = sbr.rel (0) target = $region29
  $region28: #{decoder_layer.9} parent=0 // pred_region
    _
  $region29: #{decoder_layer.9} parent=0 // pred_fallthru
    _
  // Predicated region
  $region30: #{decoder_layer.9} parent=0 // pred_check
    _
  $region31: #{decoder_layer.9} parent=0 // pred_check_branch
    %184 = sbr.rel (0) target = $region33
  $region32: #{decoder_layer.9} parent=0 // pred_region
    _
  $region33: #{decoder_layer.9} parent=0 // pred_fallthru
    _
  // Predicated region
  $region34: #{decoder_layer.9} parent=0 // pred_check
    _
  $region35: #{decoder_layer.9} parent=0 // pred_check_branch
    %186 = sbr.rel (0) target = $region37
  $region36: #{decoder_layer.9} parent=0 // pred_region
    _
  $region37: #{decoder_layer.9} parent=0 // pred_fallthru
    _

// kernel: decoder_layer.7
$region0: #{decoder_layer.7}
  #allocation0 [shape = 'u32[]', space=smem, size = 0x4, offset = 0x4, fixed_abs, tag = 'smem constant byte address 0x4 - core index']
  #allocation1 [shape = 'u32[144,128]{1,0:T(1,128)}', space=vmem, size = 0x12000, scoped, tag = 'internal scratch']
  #allocation2 [shape = 'f32[8,32]{1,0:T(8,128)}', space=vmem, size = 0x1000, scoped, tag = 'scratch operand']
  %s0 = inlined_call_operand.vmem [shape: bf16[2,8,32], index: 0, kind: input, shape index: {}]
  %s1 = inlined_call_operand.vmem [shape: bf16[2,8,32], index: 1, kind: input, shape index: {}]
  %s2 = inlined_call_operand.vmem [shape: bf16[2,8,32], index: 2, kind: input, shape index: {}]
  %s3 = inlined_call_operand.vmem [shape: s32[1,8,8], index: 3, kind: input, shape index: {}]
  %s4 = inlined_call_operand.vmem [shape: f32[2,8,32], index: 4, kind: input, shape index: {}]
  %s5 = inlined_call_operand.vmem [shape: bf16[32,32], index: 5, kind: input, shape index: {}]
  %s6 = inlined_call_operand.vmem [shape: f32[1,32], index: 6, kind: input, shape index: {}]
  %s7 = inlined_call_operand.vmem [shape: f32[2,8,32], index: 7, kind: output, shape index: {}]
  %s8 = sld [smem:[#allocation0]]
  $region61: #{decoder_layer.7} parent=0
    _
  %s10 = ssub.s32 1, %s8
  %s11 = scalar_select 0, %s10, %s8
  loop: start=0, step=1, limit=4
  $region2: #{decoder_layer.7} parent=0 // loop_pre_header
    _
  $region3: #{decoder_layer.7} parent=0 // loop_header
    %s13 = sphi 0, %s17
    %p14 = scmp.ge.s32.totalorder %s13, 4
    %s20 = sphi 0, %s32
    %s21 = sphi 0, %s28
    %s22 = sphi 0, %s20
    %s23 = sphi 0, %s21
    %s24 = sphi 0, %s22
    %s25 = sphi 0, %s23
    %s37 = sphi 0, %s39
    %s40 = sphi 0, %s37
    %s41 = sphi 0, %s40
    %s57 = sphi 0, %s41
    %s63 = sphi 0, %s65
    %s66 = sphi 0, %s63
    %s67 = sphi 0, %s66
    %s83 = sphi 0, %s67
    %s89 = sphi 0, %s91
    %s92 = sphi 0, %s89
    %s93 = sphi 0, %s92
    %s109 = sphi 0, %s93
    %s115 = sphi 0, %s117
    %s118 = sphi 0, %s115
    %s119 = sphi 0, %s118
    %s135 = sphi 0, %s119
    %s143 = sphi 0, %s145
    %s146 = sphi 0, %s143
    %s147 = sphi 0, %s146
    %s163 = sphi 0, %s147
    %s167 = sphi 0, %s167
    %s169 = sphi 0, %s167
    %s170 = sphi 0, %s169
    %s184 = sphi 0, %s170
    %s188 = sphi 0, %s188
    %s190 = sphi 0, %s188
    %s191 = sphi 0, %s190
    %s205 = sphi 0, %s191
    %s213 = sphi 0, %s215
    %s216 = sphi 0, %s213
    %s217 = sphi 0, %s216
    %s233 = sphi 0, %s217
  $region4: #{decoder_layer.7} parent=0 // loop_header_branch
    %16 = sbr.rel (%p14) target = $region8
  $region5: #{decoder_layer.7} parent=0 // loop_body
    %s18 = ssub.s32 %s13, 1
    %s19 = ssub.s32 %s13, 2
    %s26 = sadd.s32 1, %s21
    %p27 = scmp.ge.s32.totalorder %s26, 1
    %s28 = scalar_select %p27, 0, %s26
    %s29 = sadd.s32 1, %s20
    %s30 = scalar_select %p27, %s29, %s20
    %p31 = scmp.ge.s32.totalorder %s30, 2
    %s32 = scalar_select %p31, 0, %s30
    %s33 = ssub.s32 %s20, %s32
    %s34 = ssub.s32 %s21, %s28
    %s35 = sor.u32 %s33, %s34
    %p36 = scmp.eq.s32.totalorder %s35, 0
    %s38 = sadd.s32 %s37, 1
    %s39 = scalar_select %p36, %s37, %s38
    %p42 = pneg %p36
    %p43 = scmp.eq.s32.totalorder %s13, 1
    %p44 = por %p42, %p43
    %p45 = scmp.ne.s32.totalorder %s37, %s40
    %p46 = scmp.eq.s32.totalorder %s13, 0
    %p47 = por %p45, %p46
    %p48 = scmp.ne.s32.totalorder %s37, %s40
    %p49 = scmp.eq.s32.totalorder %s18, 1
    %p50 = por %p48, %p49
    %p51 = scmp.ne.s32.totalorder %s40, %s41
    %p52 = scmp.eq.s32.totalorder %s18, 0
    %p53 = por %p51, %p52
    %p54 = scmp.ne.s32.totalorder %s40, %s41
    %p55 = scmp.eq.s32.totalorder %s19, 1
    %p56 = por %p54, %p55
    %p58 = scmp.ne.s32.totalorder %s41, %s57
    %p59 = scmp.eq.s32.totalorder %s19, 0
    %p60 = por %p58, %p59
    %s61 = ssub.s32 %s20, %s32
    %p62 = scmp.eq.s32.totalorder %s61, 0
    %s64 = sadd.s32 %s63, 1
    %s65 = scalar_select %p62, %s63, %s64
    %p68 = pneg %p62
    %p69 = scmp.eq.s32.totalorder %s13, 1
    %p70 = por %p68, %p69
    %p71 = scmp.ne.s32.totalorder %s63, %s66
    %p72 = scmp.eq.s32.totalorder %s13, 0
    %p73 = por %p71, %p72
    %p74 = scmp.ne.s32.totalorder %s63, %s66
    %p75 = scmp.eq.s32.totalorder %s18, 1
    %p76 = por %p74, %p75
    %p77 = scmp.ne.s32.totalorder %s66, %s67
    %p78 = scmp.eq.s32.totalorder %s18, 0
    %p79 = por %p77, %p78
    %p80 = scmp.ne.s32.totalorder %s66, %s67
    %p81 = scmp.eq.s32.totalorder %s19, 1
    %p82 = por %p80, %p81
    %p84 = scmp.ne.s32.totalorder %s67, %s83
    %p85 = scmp.eq.s32.totalorder %s19, 0
    %p86 = por %p84, %p85
    %s87 = ssub.s32 %s20, %s32
    %p88 = scmp.eq.s32.totalorder %s87, 0
    %s90 = sadd.s32 %s89, 1
    %s91 = scalar_select %p88, %s89, %s90
    %p94 = pneg %p88
    %p95 = scmp.eq.s32.totalorder %s13, 1
    %p96 = por %p94, %p95
    %p97 = scmp.ne.s32.totalorder %s89, %s92
    %p98 = scmp.eq.s32.totalorder %s13, 0
    %p99 = por %p97, %p98
    %p100 = scmp.ne.s32.totalorder %s89, %s92
    %p101 = scmp.eq.s32.totalorder %s18, 1
    %p102 = por %p100, %p101
    %p103 = scmp.ne.s32.totalorder %s92, %s93
    %p104 = scmp.eq.s32.totalorder %s18, 0
    %p105 = por %p103, %p104
    %p106 = scmp.ne.s32.totalorder %s92, %s93
    %p107 = scmp.eq.s32.totalorder %s19, 1
    %p108 = por %p106, %p107
    %p110 = scmp.ne.s32.totalorder %s93, %s109
    %p111 = scmp.eq.s32.totalorder %s19, 0
    %p112 = por %p110, %p111
    %s113 = ssub.s32 %s21, %s28
    %p114 = scmp.eq.s32.totalorder %s113, 0
    %s116 = sadd.s32 %s115, 1
    %s117 = scalar_select %p114, %s115, %s116
    %p120 = pneg %p114
    %p121 = scmp.eq.s32.totalorder %s13, 1
    %p122 = por %p120, %p121
    %p123 = scmp.ne.s32.totalorder %s115, %s118
    %p124 = scmp.eq.s32.totalorder %s13, 0
    %p125 = por %p123, %p124
    %p126 = scmp.ne.s32.totalorder %s115, %s118
    %p127 = scmp.eq.s32.totalorder %s18, 1
    %p128 = por %p126, %p127
    %p129 = scmp.ne.s32.totalorder %s118, %s119
    %p130 = scmp.eq.s32.totalorder %s18, 0
    %p131 = por %p129, %p130
    %p132 = scmp.ne.s32.totalorder %s118, %s119
    %p133 = scmp.eq.s32.totalorder %s19, 1
    %p134 = por %p132, %p133
    %p136 = scmp.ne.s32.totalorder %s119, %s135
    %p137 = scmp.eq.s32.totalorder %s19, 0
    %p138 = por %p136, %p137
    %s139 = ssub.s32 %s20, %s32
    %s140 = ssub.s32 %s21, %s28
    %s141 = sor.u32 %s139, %s140
    %p142 = scmp.eq.s32.totalorder %s141, 0
    %s144 = sadd.s32 %s143, 1
    %s145 = scalar_select %p142, %s143, %s144
    %p148 = pneg %p142
    %p149 = scmp.eq.s32.totalorder %s13, 1
    %p150 = por %p148, %p149
    %p151 = scmp.ne.s32.totalorder %s143, %s146
    %p152 = scmp.eq.s32.totalorder %s13, 0
    %p153 = por %p151, %p152
    %p154 = scmp.ne.s32.totalorder %s143, %s146
    %p155 = scmp.eq.s32.totalorder %s18, 1
    %p156 = por %p154, %p155
    %p157 = scmp.ne.s32.totalorder %s146, %s147
    %p158 = scmp.eq.s32.totalorder %s18, 0
    %p159 = por %p157, %p158
    %p160 = scmp.ne.s32.totalorder %s146, %s147
    %p161 = scmp.eq.s32.totalorder %s19, 1
    %p162 = por %p160, %p161
    %p164 = scmp.ne.s32.totalorder %s147, %s163
    %p165 = scmp.eq.s32.totalorder %s19, 0
    %p166 = por %p164, %p165
    %s168 = sadd.s32 %s167, 1
    %p171 = scmp.eq.s32.totalorder %s13, 1
    %p172 = scmp.ne.s32.totalorder %s167, %s169
    %p173 = scmp.eq.s32.totalorder %s13, 0
    %p174 = por %p172, %p173
    %p175 = scmp.ne.s32.totalorder %s167, %s169
    %p176 = scmp.eq.s32.totalorder %s18, 1
    %p177 = por %p175, %p176
    %p178 = scmp.ne.s32.totalorder %s169, %s170
    %p179 = scmp.eq.s32.totalorder %s18, 0
    %p180 = por %p178, %p179
    %p181 = scmp.ne.s32.totalorder %s169, %s170
    %p182 = scmp.eq.s32.totalorder %s19, 1
    %p183 = por %p181, %p182
    %p185 = scmp.ne.s32.totalorder %s170, %s184
    %p186 = scmp.eq.s32.totalorder %s19, 0
    %p187 = por %p185, %p186
    %s189 = sadd.s32 %s188, 1
    %p192 = scmp.eq.s32.totalorder %s13, 1
    %p193 = scmp.ne.s32.totalorder %s188, %s190
    %p194 = scmp.eq.s32.totalorder %s13, 0
    %p195 = por %p193, %p194
    %p196 = scmp.ne.s32.totalorder %s188, %s190
    %p197 = scmp.eq.s32.totalorder %s18, 1
    %p198 = por %p196, %p197
    %p199 = scmp.ne.s32.totalorder %s190, %s191
    %p200 = scmp.eq.s32.totalorder %s18, 0
    %p201 = por %p199, %p200
    %p202 = scmp.ne.s32.totalorder %s190, %s191
    %p203 = scmp.eq.s32.totalorder %s19, 1
    %p204 = por %p202, %p203
    %p206 = scmp.ne.s32.totalorder %s191, %s205
    %p207 = scmp.eq.s32.totalorder %s19, 0
    %p208 = por %p206, %p207
    %s209 = ssub.s32 %s20, %s32
    %s210 = ssub.s32 %s21, %s28
    %s211 = sor.u32 %s209, %s210
    %p212 = scmp.eq.s32.totalorder %s211, 0
    %s214 = sadd.s32 %s213, 1
    %s215 = scalar_select %p212, %s213, %s214
    %p218 = pneg %p212
    %p219 = scmp.eq.s32.totalorder %s13, 1
    %p220 = por %p218, %p219
    %p221 = scmp.ne.s32.totalorder %s213, %s216
    %p222 = scmp.eq.s32.totalorder %s13, 0
    %p223 = por %p221, %p222
    %p224 = scmp.ne.s32.totalorder %s213, %s216
    %p225 = scmp.eq.s32.totalorder %s18, 1
    %p226 = por %p224, %p225
    %p227 = scmp.ne.s32.totalorder %s216, %s217
    %p228 = scmp.eq.s32.totalorder %s18, 0
    %p229 = por %p227, %p228
    %p230 = scmp.ne.s32.totalorder %s216, %s217
    %p231 = scmp.eq.s32.totalorder %s19, 1
    %p232 = por %p230, %p231
    %p234 = scmp.ne.s32.totalorder %s217, %s233
    %p235 = scmp.eq.s32.totalorder %s19, 0
    %p236 = por %p234, %p235
    %p237 = scmp.le.s32.totalorder 1, %s13
    %p238 = scmp.lt.s32.totalorder %s13, 3
    %p239 = pnand %p237, %p238
    %p240 = pneg %p239
    // Predicated region
    $region9: #{decoder_layer.7} parent=5 // pred_check
      _
    $region10: #{decoder_layer.7} parent=5 // pred_check_branch
      %242 = sbr.rel (%p239) target = $region12
    $region11: #{decoder_layer.7} parent=5 // pred_region
      %s243 = ssub.s32 %s13, 1
      // Predicated region
      $region13: #{decoder_layer.7} parent=11 // pred_check
        %p244 = pneg %p131
      $region14: #{decoder_layer.7} parent=11 // pred_check_branch
        %246 = sbr.rel (%p244) target = $region16
      $region15: #{decoder_layer.7} parent=11 // pred_region
        %p247 = scmp.lt.s32.totalorder %s23, 0
        %s248 = scalar_select %p247, %s23, 0
        %s249 = smul.addr %s248, 8
        %s250 = scalar_lea.vmem %s3, %s249
      $region16: #{decoder_layer.7} parent=11 // pred_fallthru
        _
      // Predicated region
      $region17: #{decoder_layer.7} parent=11 // pred_check
        %p251 = pneg %p180
      $region18: #{decoder_layer.7} parent=11 // pred_check_branch
        %253 = sbr.rel (%p251) target = $region20
      $region19: #{decoder_layer.7} parent=11 // pred_region
        _
      $region20: #{decoder_layer.7} parent=11 // pred_fallthru
        _
      // Predicated region
      $region21: #{decoder_layer.7} parent=11 // pred_check
        %p254 = pneg %p201
      $region22: #{decoder_layer.7} parent=11 // pred_check_branch
        %256 = sbr.rel (%p254) target = $region24
      $region23: #{decoder_layer.7} parent=11 // pred_region
        _
      $region24: #{decoder_layer.7} parent=11 // pred_fallthru
        _
    $region12: #{decoder_layer.7} parent=5 // pred_fallthru
      _
    %p257 = scmp.lt.s32.totalorder %s13, 2
    // Predicated region
    $region25: #{decoder_layer.7} parent=5 // pred_check
      %p258 = pneg %p257
    $region26: #{decoder_layer.7} parent=5 // pred_check_branch
      %260 = sbr.rel (%p258) target = $region28
    $region27: #{decoder_layer.7} parent=5 // pred_region
      // Predicated region
      $region29: #{decoder_layer.7} parent=27 // pred_check
        %p261 = pneg %p47
      $region30: #{decoder_layer.7} parent=27 // pred_check_branch
        %263 = sbr.rel (%p261) target = $region32
      $region31: #{decoder_layer.7} parent=27 // pred_region
        %p264 = scmp.lt.s32.totalorder %s20, 1
        %s265 = scalar_select %p264, %s20, 1
        %p266 = scmp.lt.s32.totalorder %s21, 0
        %s267 = scalar_select %p266, %s21, 0
        %s268 = sadd.s32 %s267, %s265
        %s269 = smul.addr %s268, 4
        %s270 = scalar_lea.vmem %s0, %s269
      $region32: #{decoder_layer.7} parent=27 // pred_fallthru
        _
      // Predicated region
      $region33: #{decoder_layer.7} parent=27 // pred_check
        %p271 = pneg %p73
      $region34: #{decoder_layer.7} parent=27 // pred_check_branch
        %273 = sbr.rel (%p271) target = $region36
      $region35: #{decoder_layer.7} parent=27 // pred_region
        %p274 = scmp.lt.s32.totalorder %s20, 1
        %s275 = scalar_select %p274, %s20, 1
        %s276 = smul.addr %s275, 4
        %s277 = scalar_lea.vmem %s1, %s276
      $region36: #{decoder_layer.7} parent=27 // pred_fallthru
        _
      // Predicated region
      $region37: #{decoder_layer.7} parent=27 // pred_check
        %p278 = pneg %p99
      $region38: #{decoder_layer.7} parent=27 // pred_check_branch
        %280 = sbr.rel (%p278) target = $region40
      $region39: #{decoder_layer.7} parent=27 // pred_region
        %p281 = scmp.lt.s32.totalorder %s20, 1
        %s282 = scalar_select %p281, %s20, 1
        %s283 = smul.addr %s282, 4
        %s284 = scalar_lea.vmem %s2, %s283
      $region40: #{decoder_layer.7} parent=27 // pred_fallthru
        _
      // Predicated region
      $region41: #{decoder_layer.7} parent=27 // pred_check
        %p285 = pneg %p153
      $region42: #{decoder_layer.7} parent=27 // pred_check_branch
        %287 = sbr.rel (%p285) target = $region44
      $region43: #{decoder_layer.7} parent=27 // pred_region
        %p288 = scmp.lt.s32.totalorder %s20, 1
        %s289 = scalar_select %p288, %s20, 1
        %p290 = scmp.lt.s32.totalorder %s21, 0
        %s291 = scalar_select %p290, %s21, 0
        %s292 = sadd.s32 %s291, %s289
        %s293 = smul.addr %s292, 8
        %s294 = scalar_lea.vmem %s4, %s293
      $region44: #{decoder_layer.7} parent=27 // pred_fallthru
        _
    $region28: #{decoder_layer.7} parent=5 // pred_fallthru
      _
    %p295 = scmp.le.s32.totalorder 1, %s13
    %p296 = scmp.lt.s32.totalorder %s13, 3
    %p297 = pnand %p295, %p296
    %p298 = pneg %p297
    // Predicated region
    $region45: #{decoder_layer.7} parent=5 // pred_check
      _
    $region46: #{decoder_layer.7} parent=5 // pred_check_branch
      %300 = sbr.rel (%p297) target = $region48
    $region47: #{decoder_layer.7} parent=5 // pred_region
      %s301 = ssub.s32 %s13, 1
      %p302 = scmp.lt.s32.totalorder %s22, 1
      %s303 = scalar_select %p302, %s22, 1
      %p304 = scmp.lt.s32.totalorder %s23, 0
      %s305 = scalar_select %p304, %s23, 0
      %s306 = sadd.s32 %s305, %s303
      %s307 = smul.addr %s306, 4
      %s308 = scalar_lea.vmem %s0, %s307
      %p309 = pneg %p53
      %p310 = pneg %p50
      %p311 = scmp.lt.s32.totalorder %s22, 1
      %s312 = scalar_select %p311, %s22, 1
      %s313 = smul.addr %s312, 4
      %s314 = scalar_lea.vmem %s1, %s313
      %p315 = pneg %p79
      %p316 = pneg %p76
      %p317 = scmp.lt.s32.totalorder %s22, 1
      %s318 = scalar_select %p317, %s22, 1
      %s319 = smul.addr %s318, 4
      %s320 = scalar_lea.vmem %s2, %s319
      %p321 = pneg %p105
      %p322 = pneg %p102
      %p323 = scmp.lt.s32.totalorder %s23, 0
      %s324 = scalar_select %p323, %s23, 0
      %s325 = smul.addr %s324, 8
      %s326 = scalar_lea.vmem %s3, %s325
      %p327 = pneg %p131
      %p328 = pneg %p128
      %p329 = scmp.lt.s32.totalorder %s22, 1
      %s330 = scalar_select %p329, %s22, 1
      %p331 = scmp.lt.s32.totalorder %s23, 0
      %s332 = scalar_select %p331, %s23, 0
      %s333 = sadd.s32 %s332, %s330
      %s334 = smul.addr %s333, 8
      %s335 = scalar_lea.vmem %s4, %s334
      %p336 = pneg %p159
      %p337 = pneg %p156
      %p338 = pneg %p180
      %p339 = pneg %p177
      %p340 = pneg %p201
      %p341 = pneg %p198
      %p342 = pneg %p229
      %p343 = pneg %p226
      %p344 = scmp.lt.s32.totalorder %s22, 1
      %s345 = scalar_select %p344, %s22, 1
      %p346 = scmp.lt.s32.totalorder %s23, 0
      %s347 = scalar_select %p346, %s23, 0
      %s348 = sadd.s32 %s347, %s345
      %s349 = smul.addr %s348, 8
      %s350 = scalar_lea.vmem %s7, %s349
      %p351 = scmp.lt.s32.totalorder %s22, 1
      %s352 = scalar_select %p351, %s22, 1
      %p353 = scmp.lt.s32.totalorder %s23, 0
      %s354 = scalar_select %p353, %s23, 0
      %s355 = sadd.s32 %s354, %s352
      %s356 = smul.addr %s355, 4
      %s357 = scalar_lea.vmem %s0, %s356
      %p358 = scmp.lt.s32.totalorder %s22, 1
      %s359 = scalar_select %p358, %s22, 1
      %s360 = smul.addr %s359, 4
      %s361 = scalar_lea.vmem %s1, %s360
      %p362 = scmp.lt.s32.totalorder %s22, 1
      %s363 = scalar_select %p362, %s22, 1
      %s364 = smul.addr %s363, 4
      %s365 = scalar_lea.vmem %s2, %s364
      %p366 = scmp.lt.s32.totalorder %s23, 0
      %s367 = scalar_select %p366, %s23, 0
      %s368 = smul.addr %s367, 8
      %s369 = scalar_lea.vmem %s3, %s368
      %p370 = scmp.lt.s32.totalorder %s22, 1
      %s371 = scalar_select %p370, %s22, 1
      %p372 = scmp.lt.s32.totalorder %s23, 0
      %s373 = scalar_select %p372, %s23, 0
      %s374 = sadd.s32 %s373, %s371
      %s375 = smul.addr %s374, 8
      %s376 = scalar_lea.vmem %s4, %s375
      %p377 = scmp.lt.s32.totalorder %s22, 1
      %s378 = scalar_select %p377, %s22, 1
      %p379 = scmp.lt.s32.totalorder %s23, 0
      %s380 = scalar_select %p379, %s23, 0
      %s381 = sadd.s32 %s380, %s378
      %s382 = smul.addr %s381, 8
      %s383 = scalar_lea.vmem %s7, %s382
      %v385 = vld [vmem:[%s357] sm:$0xf]
      %v386 = vld [vmem:[%s361] sm:$0xf]
      %v387 = vld [vmem:[%s365] sm:$0xf]
      %v388 = vld [vmem:[%s369] sm:$0xff]
      %vm389 = vcmp.eq.s32.totalorder %v388, 0
      %vm390 = vcmask 64512
      %v392 = vsel %vm390, %v385, 0
      %v395 = vsel %vm390, %v386, 0
      %397 = vmatprep.subr.bf16.mxu0 0
      %398 = vmatpush1.bf16.xpose.msra.mxu0 %v395
      %399 = vmatprep.subr.bf16.mxu0 0
      %400 = vmatpush1.bf16.xpose.msra.mxu0 0
      %401 = vmatprep.subr.bf16.mxu0 0
      %402 = vmatpush1.bf16.xpose.msra.mxu0 0
      %403 = vmatprep.subr.bf16.mxu0 0
      %404 = vmatpush1.bf16.xpose.msra.mxu0 0
      %405 = vmatprep.subr.bf16.mxu0 0
      %406 = vmatpush1.bf16.xpose.msra.mxu0 0
      %407 = vmatprep.subr.bf16.mxu0 0
      %408 = vmatpush1.bf16.xpose.msra.mxu0 0
      %409 = vmatprep.subr.bf16.mxu0 0
      %410 = vmatpush1.bf16.xpose.msra.mxu0 0
      %411 = vmatprep.subr.bf16.mxu0 0
      %412 = vmatpush1.bf16.xpose.msra.mxu0 0
      %413 = vmatprep.subr.bf16.mxu0 0
      %414 = vmatpush1.bf16.xpose.msra.mxu0 0
      %415 = vmatprep.subr.bf16.mxu0 0
      %416 = vmatpush1.bf16.xpose.msra.mxu0 0
      %417 = vmatprep.subr.bf16.mxu0 0
      %418 = vmatpush1.bf16.xpose.msra.mxu0 0
      %419 = vmatprep.subr.bf16.mxu0 0
      %420 = vmatpush1.bf16.xpose.msra.mxu0 0
      %421 = vmatprep.subr.bf16.mxu0 0
      %422 = vmatpush1.bf16.xpose.msra.mxu0 0
      %423 = vmatprep.subr.bf16.mxu0 0
      %424 = vmatpush1.bf16.xpose.msra.mxu0 0
      %425 = vmatprep.subr.bf16.mxu0 0
      %426 = vmatpush1.bf16.xpose.msra.mxu0 0
      %427 = vmatprep.subr.bf16.mxu0 0
      %428 = vmatpush1.bf16.xpose.msra.mxu0 0
      %429 = vmatprep.mubr.bf16.mxu0 0
      %430 = vmatmul.mubr.bf16.gmra.mrb[0].mxu0 %v392
      %v431 = vpop.f32.mrb[0].mxu0
      %v432 = vadd.f32 0.0, %v431
      %v433 = vpop.f32.mrb[0].mxu0
      %v434 = vpop.f32.mrb[0].mxu0
      %v435 = vpop.f32.mrb[0].mxu0
      %436 = vdwg.mxu0
      %v437 = vmul.f32 %v432, 0.35355338
      %v438 = vsel %vm389, -1e+09, %v437
      %v439 = vsel %vm390, %v438, -inf
      %440 = vmax.xlane.f32.xlu0 %v439
      %v441 = vpop.xlane.xlu0 %440
      %v442 = vsub.f32 %v438, %v441
      %v443 = vmul.f32 %v442, 1.442695
      %v444 = vpow.pop %v443
      %v445 = vsel %vm390, %v444, 0.0
      %446 = vadd.xlane.f32.xlu0 %v445
      %v447 = vpop.xlane.xlu0 %446
      %v448 = vrcp.pop %v447
      %v449 = vmul.f32 %v444, %v448
      %v450 = vpack.c.bf16 %v449, %v449
      %v452 = vsel %vm390, %v450, 0
      %vm454 = vcmask 1043456
      %v456 = vsel %vm454, %v387, 0
      %458 = vmatprep.subr.bf16.mxu0 0
      %459 = vmatpush1.bf16.msra.mxu0 %v456
      %460 = vmatprep.subr.bf16.mxu0 0
      %461 = vmatpush1.bf16.msra.mxu0 0
      %462 = vmatprep.subr.bf16.mxu0 0
      %463 = vmatpush1.bf16.msra.mxu0 0
      %464 = vmatprep.subr.bf16.mxu0 0
      %465 = vmatpush1.bf16.msra.mxu0 0
      %466 = vmatprep.subr.bf16.mxu0 0
      %467 = vmatpush1.bf16.msra.mxu0 0
      %468 = vmatprep.subr.bf16.mxu0 0
      %469 = vmatpush1.bf16.msra.mxu0 0
      %470 = vmatprep.subr.bf16.mxu0 0
      %471 = vmatpush1.bf16.msra.mxu0 0
      %472 = vmatprep.subr.bf16.mxu0 0
      %473 = vmatpush1.bf16.msra.mxu0 0
      %474 = vmatprep.subr.bf16.mxu0 0
      %475 = vmatpush1.bf16.msra.mxu0 0
      %476 = vmatprep.subr.bf16.mxu0 0
      %477 = vmatpush1.bf16.msra.mxu0 0
      %478 = vmatprep.subr.bf16.mxu0 0
      %479 = vmatpush1.bf16.msra.mxu0 0
      %480 = vmatprep.subr.bf16.mxu0 0
      %481 = vmatpush1.bf16.msra.mxu0 0
      %482 = vmatprep.subr.bf16.mxu0 0
      %483 = vmatpush1.bf16.msra.mxu0 0
      %484 = vmatprep.subr.bf16.mxu0 0
      %485 = vmatpush1.bf16.msra.mxu0 0
      %486 = vmatprep.subr.bf16.mxu0 0
      %487 = vmatpush1.bf16.msra.mxu0 0
      %488 = vmatprep.subr.bf16.mxu0 0
      %489 = vmatpush1.bf16.msra.mxu0 0
      %490 = vmatprep.mubr.bf16.mxu0 0
      %491 = vmatmul.mubr.bf16.gmra.mrb[0].mxu0 %v452
      %v492 = vpop.f32.mrb[0].mxu0
      %v493 = vadd.f32 0.0, %v492
      %v494 = vpop.f32.mrb[0].mxu0
      %v495 = vpop.f32.mrb[0].mxu0
      %v496 = vpop.f32.mrb[0].mxu0
      %497 = vdwg.mxu0
      %498 = vst.msk [vmem:[#allocation2] sm:$0xff] %vm390, %v493
      %v500 = vunpack.c.l.b16 %v385
      %v501 = vpack.c.b16 %v500, %v500
      %502 = vrot.lane.b32.xlu0 %v501, 120
      %v503 = vpop.permute.xlu0 %502
      %v505 = vunpack.c.l.b16 %v386
      %v506 = vpack.c.b16 %v505, %v505
      %507 = vrot.lane.b32.xlu0 %v506, 120
      %v508 = vpop.permute.xlu0 %507
      %v510 = vsel %vm390, %v503, 0
      %v513 = vsel %vm390, %v508, 0
      %515 = vmatprep.subr.bf16.mxu0 0
      %516 = vmatpush1.bf16.xpose.msra.mxu0 %v513
      %517 = vmatprep.subr.bf16.mxu0 0
      %518 = vmatpush1.bf16.xpose.msra.mxu0 0
      %519 = vmatprep.subr.bf16.mxu0 0
      %520 = vmatpush1.bf16.xpose.msra.mxu0 0
      %521 = vmatprep.subr.bf16.mxu0 0
      %522 = vmatpush1.bf16.xpose.msra.mxu0 0
      %523 = vmatprep.subr.bf16.mxu0 0
      %524 = vmatpush1.bf16.xpose.msra.mxu0 0
      %525 = vmatprep.subr.bf16.mxu0 0
      %526 = vmatpush1.bf16.xpose.msra.mxu0 0
      %527 = vmatprep.subr.bf16.mxu0 0
      %528 = vmatpush1.bf16.xpose.msra.mxu0 0
      %529 = vmatprep.subr.bf16.mxu0 0
      %530 = vmatpush1.bf16.xpose.msra.mxu0 0
      %531 = vmatprep.subr.bf16.mxu0 0
      %532 = vmatpush1.bf16.xpose.msra.mxu0 0
      %533 = vmatprep.subr.bf16.mxu0 0
      %534 = vmatpush1.bf16.xpose.msra.mxu0 0
      %535 = vmatprep.subr.bf16.mxu0 0
      %536 = vmatpush1.bf16.xpose.msra.mxu0 0
      %537 = vmatprep.subr.bf16.mxu0 0
      %538 = vmatpush1.bf16.xpose.msra.mxu0 0
      %539 = vmatprep.subr.bf16.mxu0 0
      %540 = vmatpush1.bf16.xpose.msra.mxu0 0
      %541 = vmatprep.subr.bf16.mxu0 0
      %542 = vmatpush1.bf16.xpose.msra.mxu0 0
      %543 = vmatprep.subr.bf16.mxu0 0
      %544 = vmatpush1.bf16.xpose.msra.mxu0 0
      %545 = vmatprep.subr.bf16.mxu0 0
      %546 = vmatpush1.bf16.xpose.msra.mxu0 0
      %547 = vmatprep.mubr.bf16.mxu0 0
      %548 = vmatmul.mubr.bf16.gmra.mrb[0].mxu0 %v510
      %v549 = vpop.f32.mrb[0].mxu0
      %v550 = vadd.f32 0.0, %v549
      %v551 = vpop.f32.mrb[0].mxu0
      %v552 = vpop.f32.mrb[0].mxu0
      %v553 = vpop.f32.mrb[0].mxu0
      %554 = vdwg.mxu0
      %v555 = vmul.f32 %v550, 0.35355338
      %v556 = vsel %vm389, -1e+09, %v555
      %v557 = vsel %vm390, %v556, -inf
      %558 = vmax.xlane.f32.xlu0 %v557
      %v559 = vpop.xlane.xlu0 %558
      %v560 = vsub.f32 %v556, %v559
      %v561 = vmul.f32 %v560, 1.442695
      %v562 = vpow.pop %v561
      %v563 = vsel %vm390, %v562, 0.0
      %564 = vadd.xlane.f32.xlu0 %v563
      %v565 = vpop.xlane.xlu0 %564
      %v566 = vrcp.pop %v565
      %v567 = vmul.f32 %v562, %v566
      %v568 = vpack.c.bf16 %v567, %v567
      %v570 = vunpack.c.l.b16 %v387
      %v571 = vpack.c.b16 %v570, %v570
      %572 = vrot.lane.b32.xlu0 %v571, 120
      %v573 = vpop.permute.xlu0 %572
      %v575 = vsel %vm390, %v568, 0
      %v578 = vsel %vm454, %v573, 0
      %580 = vmatprep.subr.bf16.mxu0 0
      %581 = vmatpush1.bf16.msra.mxu0 %v578
      %582 = vmatprep.subr.bf16.mxu0 0
      %583 = vmatpush1.bf16.msra.mxu0 0
      %584 = vmatprep.subr.bf16.mxu0 0
      %585 = vmatpush1.bf16.msra.mxu0 0
      %586 = vmatprep.subr.bf16.mxu0 0
      %587 = vmatpush1.bf16.msra.mxu0 0
      %588 = vmatprep.subr.bf16.mxu0 0
      %589 = vmatpush1.bf16.msra.mxu0 0
      %590 = vmatprep.subr.bf16.mxu0 0
      %591 = vmatpush1.bf16.msra.mxu0 0
      %592 = vmatprep.subr.bf16.mxu0 0
      %593 = vmatpush1.bf16.msra.mxu0 0
      %594 = vmatprep.subr.bf16.mxu0 0
      %595 = vmatpush1.bf16.msra.mxu0 0
      %596 = vmatprep.subr.bf16.mxu0 0
      %597 = vmatpush1.bf16.msra.mxu0 0
      %598 = vmatprep.subr.bf16.mxu0 0
      %599 = vmatpush1.bf16.msra.mxu0 0
      %600 = vmatprep.subr.bf16.mxu0 0
      %601 = vmatpush1.bf16.msra.mxu0 0
      %602 = vmatprep.subr.bf16.mxu0 0
      %603 = vmatpush1.bf16.msra.mxu0 0
      %604 = vmatprep.subr.bf16.mxu0 0
      %605 = vmatpush1.bf16.msra.mxu0 0
      %606 = vmatprep.subr.bf16.mxu0 0
      %607 = vmatpush1.bf16.msra.mxu0 0
      %608 = vmatprep.subr.bf16.mxu0 0
      %609 = vmatpush1.bf16.msra.mxu0 0
      %610 = vmatprep.subr.bf16.mxu0 0
      %611 = vmatpush1.bf16.msra.mxu0 0
      %612 = vmatprep.mubr.bf16.mxu0 0
      %613 = vmatmul.mubr.bf16.gmra.mrb[0].mxu0 %v575
      %v614 = vpop.f32.mrb[0].mxu0
      %v615 = vadd.f32 0.0, %v614
      %v616 = vpop.f32.mrb[0].mxu0
      %v617 = vpop.f32.mrb[0].mxu0
      %v618 = vpop.f32.mrb[0].mxu0
      %619 = vdwg.mxu0
      %621 = vrot.lane.b32.xlu0 %v615, 8
      %v622 = vpop.permute.xlu0 %621
      %vm624 = vcmask 130112
      %625 = vst.msk [vmem:[#allocation2] sm:$0xff] %vm624, %v622
      %626 = vrot.lane.b32.xlu0 %v501, 112
      %v627 = vpop.permute.xlu0 %626
      %628 = vrot.lane.b32.xlu0 %v506, 112
      %v629 = vpop.permute.xlu0 %628
      %v631 = vsel %vm390, %v627, 0
      %v634 = vsel %vm390, %v629, 0
      %636 = vmatprep.subr.bf16.mxu0 0
      %637 = vmatpush1.bf16.xpose.msra.mxu0 %v634
      %638 = vmatprep.subr.bf16.mxu0 0
      %639 = vmatpush1.bf16.xpose.msra.mxu0 0
      %640 = vmatprep.subr.bf16.mxu0 0
      %641 = vmatpush1.bf16.xpose.msra.mxu0 0
      %642 = vmatprep.subr.bf16.mxu0 0
      %643 = vmatpush1.bf16.xpose.msra.mxu0 0
      %644 = vmatprep.subr.bf16.mxu0 0
      %645 = vmatpush1.bf16.xpose.msra.mxu0 0
      %646 = vmatprep.subr.bf16.mxu0 0
      %647 = vmatpush1.bf16.xpose.msra.mxu0 0
      %648 = vmatprep.subr.bf16.mxu0 0
      %649 = vmatpush1.bf16.xpose.msra.mxu0 0
      %650 = vmatprep.subr.bf16.mxu0 0
      %651 = vmatpush1.bf16.xpose.msra.mxu0 0
      %652 = vmatprep.subr.bf16.mxu0 0
      %653 = vmatpush1.bf16.xpose.msra.mxu0 0
      %654 = vmatprep.subr.bf16.mxu0 0
      %655 = vmatpush1.bf16.xpose.msra.mxu0 0
      %656 = vmatprep.subr.bf16.mxu0 0
      %657 = vmatpush1.bf16.xpose.msra.mxu0 0
      %658 = vmatprep.subr.bf16.mxu0 0
      %659 = vmatpush1.bf16.xpose.msra.mxu0 0
      %660 = vmatprep.subr.bf16.mxu0 0
      %661 = vmatpush1.bf16.xpose.msra.mxu0 0
      %662 = vmatprep.subr.bf16.mxu0 0
      %663 = vmatpush1.bf16.xpose.msra.mxu0 0
      %664 = vmatprep.subr.bf16.mxu0 0
      %665 = vmatpush1.bf16.xpose.msra.mxu0 0
      %666 = vmatprep.subr.bf16.mxu0 0
      %667 = vmatpush1.bf16.xpose.msra.mxu0 0
      %668 = vmatprep.mubr.bf16.mxu0 0
      %669 = vmatmul.mubr.bf16.gmra.mrb[0].mxu0 %v631
      %v670 = vpop.f32.mrb[0].mxu0
      %v671 = vadd.f32 0.0, %v670
      %v672 = vpop.f32.mrb[0].mxu0
      %v673 = vpop.f32.mrb[0].mxu0
      %v674 = vpop.f32.mrb[0].mxu0
      %675 = vdwg.mxu0
      %v676 = vmul.f32 %v671, 0.35355338
      %v677 = vsel %vm389, -1e+09, %v676
      %v678 = vsel %vm390, %v677, -inf
      %679 = vmax.xlane.f32.xlu0 %v678
      %v680 = vpop.xlane.xlu0 %679
      %v681 = vsub.f32 %v677, %v680
      %v682 = vmul.f32 %v681, 1.442695
      %v683 = vpow.pop %v682
      %v684 = vsel %vm390, %v683, 0.0
      %685 = vadd.xlane.f32.xlu0 %v684
      %v686 = vpop.xlane.xlu0 %685
      %v687 = vrcp.pop %v686
      %v688 = vmul.f32 %v683, %v687
      %v689 = vpack.c.bf16 %v688, %v688
      %690 = vrot.lane.b32.xlu0 %v571, 112
      %v691 = vpop.permute.xlu0 %690
      %v693 = vsel %vm390, %v689, 0
      %v696 = vsel %vm454, %v691, 0
      %698 = vmatprep.subr.bf16.mxu0 0
      %699 = vmatpush1.bf16.msra.mxu0 %v696
      %700 = vmatprep.subr.bf16.mxu0 0
      %701 = vmatpush1.bf16.msra.mxu0 0
      %702 = vmatprep.subr.bf16.mxu0 0
      %703 = vmatpush1.bf16.msra.mxu0 0
      %704 = vmatprep.subr.bf16.mxu0 0
      %705 = vmatpush1.bf16.msra.mxu0 0
      %706 = vmatprep.subr.bf16.mxu0 0
      %707 = vmatpush1.bf16.msra.mxu0 0
      %708 = vmatprep.subr.bf16.mxu0 0
      %709 = vmatpush1.bf16.msra.mxu0 0
      %710 = vmatprep.subr.bf16.mxu0 0
      %711 = vmatpush1.bf16.msra.mxu0 0
      %712 = vmatprep.subr.bf16.mxu0 0
      %713 = vmatpush1.bf16.msra.mxu0 0
      %714 = vmatprep.subr.bf16.mxu0 0
      %715 = vmatpush1.bf16.msra.mxu0 0
      %716 = vmatprep.subr.bf16.mxu0 0
      %717 = vmatpush1.bf16.msra.mxu0 0
      %718 = vmatprep.subr.bf16.mxu0 0
      %719 = vmatpush1.bf16.msra.mxu0 0
      %720 = vmatprep.subr.bf16.mxu0 0
      %721 = vmatpush1.bf16.msra.mxu0 0
      %722 = vmatprep.subr.bf16.mxu0 0
      %723 = vmatpush1.bf16.msra.mxu0 0
      %724 = vmatprep.subr.bf16.mxu0 0
      %725 = vmatpush1.bf16.msra.mxu0 0
      %726 = vmatprep.subr.bf16.mxu0 0
      %727 = vmatpush1.bf16.msra.mxu0 0
      %728 = vmatprep.subr.bf16.mxu0 0
      %729 = vmatpush1.bf16.msra.mxu0 0
      %730 = vmatprep.mubr.bf16.mxu0 0
      %731 = vmatmul.mubr.bf16.gmra.mrb[0].mxu0 %v693
      %v732 = vpop.f32.mrb[0].mxu0
      %v733 = vadd.f32 0.0, %v732
      %v734 = vpop.f32.mrb[0].mxu0
      %v735 = vpop.f32.mrb[0].mxu0
      %v736 = vpop.f32.mrb[0].mxu0
      %737 = vdwg.mxu0
      %739 = vrot.lane.b32.xlu0 %v733, 16
      %v740 = vpop.permute.xlu0 %739
      %vm742 = vcmask 195712
      %743 = vst.msk [vmem:[#allocation2] sm:$0xff] %vm742, %v740
      %744 = vrot.lane.b32.xlu0 %v501, 104
      %v745 = vpop.permute.xlu0 %744
      %746 = vrot.lane.b32.xlu0 %v506, 104
      %v747 = vpop.permute.xlu0 %746
      %v749 = vsel %vm390, %v745, 0
      %v752 = vsel %vm390, %v747, 0
      %754 = vmatprep.subr.bf16.mxu0 0
      %755 = vmatpush1.bf16.xpose.msra.mxu0 %v752
      %756 = vmatprep.subr.bf16.mxu0 0
      %757 = vmatpush1.bf16.xpose.msra.mxu0 0
      %758 = vmatprep.subr.bf16.mxu0 0
      %759 = vmatpush1.bf16.xpose.msra.mxu0 0
      %760 = vmatprep.subr.bf16.mxu0 0
      %761 = vmatpush1.bf16.xpose.msra.mxu0 0
      %762 = vmatprep.subr.bf16.mxu0 0
      %763 = vmatpush1.bf16.xpose.msra.mxu0 0
      %764 = vmatprep.subr.bf16.mxu0 0
      %765 = vmatpush1.bf16.xpose.msra.mxu0 0
      %766 = vmatprep.subr.bf16.mxu0 0
      %767 = vmatpush1.bf16.xpose.msra.mxu0 0
      %768 = vmatprep.subr.bf16.mxu0 0
      %769 = vmatpush1.bf16.xpose.msra.mxu0 0
      %770 = vmatprep.subr.bf16.mxu0 0
      %771 = vmatpush1.bf16.xpose.msra.mxu0 0
      %772 = vmatprep.subr.bf16.mxu0 0
      %773 = vmatpush1.bf16.xpose.msra.mxu0 0
      %774 = vmatprep.subr.bf16.mxu0 0
      %775 = vmatpush1.bf16.xpose.msra.mxu0 0
      %776 = vmatprep.subr.bf16.mxu0 0
      %777 = vmatpush1.bf16.xpose.msra.mxu0 0
      %778 = vmatprep.subr.bf16.mxu0 0
      %779 = vmatpush1.bf16.xpose.msra.mxu0 0
      %780 = vmatprep.subr.bf16.mxu0 0
      %781 = vmatpush1.bf16.xpose.msra.mxu0 0
      %782 = vmatprep.subr.bf16.mxu0 0
      %783 = vmatpush1.bf16.xpose.msra.mxu0 0
      %784 = vmatprep.subr.bf16.mxu0 0
      %785 = vmatpush1.bf16.xpose.msra.mxu0 0
      %786 = vmatprep.mubr.bf16.mxu0 0
      %787 = vmatmul.mubr.bf16.gmra.mrb[0].mxu0 %v749
      %v788 = vpop.f32.mrb[0].mxu0
      %v789 = vadd.f32 0.0, %v788
      %v790 = vpop.f32.mrb[0].mxu0
      %v791 = vpop.f32.mrb[0].mxu0
      %v792 = vpop.f32.mrb[0].mxu0
      %793 = vdwg.mxu0
      %v794 = vmul.f32 %v789, 0.35355338
      %v795 = vsel %vm389, -1e+09, %v794
      %v796 = vsel %vm390, %v795, -inf
      %797 = vmax.xlane.f32.xlu0 %v796
      %v798 = vpop.xlane.xlu0 %797
      %v799 = vsub.f32 %v795, %v798
      %v800 = vmul.f32 %v799, 1.442695
      %v801 = vpow.pop %v800
      %v802 = vsel %vm390, %v801, 0.0
      %803 = vadd.xlane.f32.xlu0 %v802
      %v804 = vpop.xlane.xlu0 %803
      %v805 = vrcp.pop %v804
      %v806 = vmul.f32 %v801, %v805
      %v807 = vpack.c.bf16 %v806, %v806
      %808 = vrot.lane.b32.xlu0 %v571, 104
      %v809 = vpop.permute.xlu0 %808
      %v811 = vsel %vm390, %v807, 0
      %v814 = vsel %vm454, %v809, 0
      %816 = vmatprep.subr.bf16.mxu0 0
      %817 = vmatpush1.bf16.msra.mxu0 %v814
      %818 = vmatprep.subr.bf16.mxu0 0
      %819 = vmatpush1.bf16.msra.mxu0 0
      %820 = vmatprep.subr.bf16.mxu0 0
      %821 = vmatpush1.bf16.msra.mxu0 0
      %822 = vmatprep.subr.bf16.mxu0 0
      %823 = vmatpush1.bf16.msra.mxu0 0
      %824 = vmatprep.subr.bf16.mxu0 0
      %825 = vmatpush1.bf16.msra.mxu0 0
      %826 = vmatprep.subr.bf16.mxu0 0
      %827 = vmatpush1.bf16.msra.mxu0 0
      %828 = vmatprep.subr.bf16.mxu0 0
      %829 = vmatpush1.bf16.msra.mxu0 0
      %830 = vmatprep.subr.bf16.mxu0 0
      %831 = vmatpush1.bf16.msra.mxu0 0
      %832 = vmatprep.subr.bf16.mxu0 0
      %833 = vmatpush1.bf16.msra.mxu0 0
      %834 = vmatprep.subr.bf16.mxu0 0
      %835 = vmatpush1.bf16.msra.mxu0 0
      %836 = vmatprep.subr.bf16.mxu0 0
      %837 = vmatpush1.bf16.msra.mxu0 0
      %838 = vmatprep.subr.bf16.mxu0 0
      %839 = vmatpush1.bf16.msra.mxu0 0
      %840 = vmatprep.subr.bf16.mxu0 0
      %841 = vmatpush1.bf16.msra.mxu0 0
      %842 = vmatprep.subr.bf16.mxu0 0
      %843 = vmatpush1.bf16.msra.mxu0 0
      %844 = vmatprep.subr.bf16.mxu0 0
      %845 = vmatpush1.bf16.msra.mxu0 0
      %846 = vmatprep.subr.bf16.mxu0 0
      %847 = vmatpush1.bf16.msra.mxu0 0
      %848 = vmatprep.mubr.bf16.mxu0 0
      %849 = vmatmul.mubr.bf16.gmra.mrb[0].mxu0 %v811
      %v850 = vpop.f32.mrb[0].mxu0
      %v851 = vadd.f32 0.0, %v850
      %v852 = vpop.f32.mrb[0].mxu0
      %v853 = vpop.f32.mrb[0].mxu0
      %v854 = vpop.f32.mrb[0].mxu0
      %855 = vdwg.mxu0
      %857 = vrot.lane.b32.xlu0 %v851, 24
      %v858 = vpop.permute.xlu0 %857
      %vm860 = vcmask 261312
      %861 = vst.msk [vmem:[#allocation2] sm:$0xff] %vm860, %v858
      %v862 = vld [vmem:[#allocation2] sm:$0xff]
      %v863 = vpack.c.bf16 %v862, %v862
      %v864 = vld [vmem:[%s5] sm:$0xf]
      %v865 = vld [vmem:[%s5 + $0x4] sm:$0xf]
      %v866 = vld [vmem:[%s5 + $0x8] sm:$0xf]
      %v867 = vld [vmem:[%s5 + $0xc] sm:$0xf]
      %v868 = vld [vmem:[%s6] sm:$0x1]
      %v870 = vlaneseq
      %v871 = vshrl.u32 %v870, 7
      %v872 = vsub.s32 0, %v871
      %v873 = vrot.slane %v868, %v872
      %v879 = vunpack.c.l.b16 %v864
      %v880 = vunpack.c.l.b16 %v865
      %v881 = vunpack.c.l.b16 %v866
      %v882 = vunpack.c.l.b16 %v867
      %v883 = vpack.c.b16 %v880, %v879
      %v884 = vpack.c.b16 %v882, %v881
      %vm887 = vcmask 261120
      %v889 = vsel %vm887, %v863, 0
      %891 = vmatprep.subr.bf16.mxu0 0
      %892 = vmatpush1.bf16.msra.mxu0 %v883
      %893 = vmatprep.subr.bf16.mxu0 0
      %894 = vmatpush1.bf16.msra.mxu0 %v884
      %895 = vmatprep.subr.bf16.mxu0 0
      %896 = vmatpush1.bf16.msra.mxu0 0
      %897 = vmatprep.subr.bf16.mxu0 0
      %898 = vmatpush1.bf16.msra.mxu0 0
      %899 = vmatprep.subr.bf16.mxu0 0
      %900 = vmatpush1.bf16.msra.mxu0 0
      %901 = vmatprep.subr.bf16.mxu0 0
      %902 = vmatpush1.bf16.msra.mxu0 0
      %903 = vmatprep.subr.bf16.mxu0 0
      %904 = vmatpush1.bf16.msra.mxu0 0
      %905 = vmatprep.subr.bf16.mxu0 0
      %906 = vmatpush1.bf16.msra.mxu0 0
      %907 = vmatprep.subr.bf16.mxu0 0
      %908 = vmatpush1.bf16.msra.mxu0 0
      %909 = vmatprep.subr.bf16.mxu0 0
      %910 = vmatpush1.bf16.msra.mxu0 0
      %911 = vmatprep.subr.bf16.mxu0 0
      %912 = vmatpush1.bf16.msra.mxu0 0
      %913 = vmatprep.subr.bf16.mxu0 0
      %914 = vmatpush1.bf16.msra.mxu0 0
      %915 = vmatprep.subr.bf16.mxu0 0
      %916 = vmatpush1.bf16.msra.mxu0 0
      %917 = vmatprep.subr.bf16.mxu0 0
      %918 = vmatpush1.bf16.msra.mxu0 0
      %919 = vmatprep.subr.bf16.mxu0 0
      %920 = vmatpush1.bf16.msra.mxu0 0
      %921 = vmatprep.subr.bf16.mxu0 0
      %922 = vmatpush1.bf16.msra.mxu0 0
      %923 = vmatprep.mubr.bf16.mxu0 0
      %924 = vmatmul.mubr.bf16.gmra.mrb[0].mxu0 %v889
      %v925 = vpop.f32.mrb[0].mxu0
      %v926 = vadd.f32 %v873, %v925
      %v927 = vpop.f32.mrb[0].mxu0
      %v928 = vpop.f32.mrb[0].mxu0
      %v929 = vpop.f32.mrb[0].mxu0
      %930 = vdwg.mxu0
      %v931 = vld [vmem:[%s376] sm:$0xff]
      %v932 = vadd.f32 %v931, %v926
      %933 = vst.msk [vmem:[%s383] sm:$0xff] %vm887, %v932
      %p934 = scmp.lt.s32.totalorder %s22, 1
      %s935 = scalar_select %p934, %s22, 1
      %p936 = scmp.lt.s32.totalorder %s23, 0
      %s937 = scalar_select %p936, %s23, 0
      %s938 = sadd.s32 %s937, %s935
      %s939 = smul.addr %s938, 8
      %s940 = scalar_lea.vmem %s7, %s939
      // Predicated region
      $region49: #{decoder_layer.7} parent=47 // pred_check
        %p941 = pneg %p226
      $region50: #{decoder_layer.7} parent=47 // pred_check_branch
        %943 = sbr.rel (%p941) target = $region52
      $region51: #{decoder_layer.7} parent=47 // pred_region
        _
      $region52: #{decoder_layer.7} parent=47 // pred_fallthru
        _
    $region48: #{decoder_layer.7} parent=5 // pred_fallthru
      _
    %p944 = scmp.le.s32.totalorder 2, %s13
    // Predicated region
    $region53: #{decoder_layer.7} parent=5 // pred_check
      %p945 = pneg %p944
    $region54: #{decoder_layer.7} parent=5 // pred_check_branch
      %947 = sbr.rel (%p945) target = $region56
    $region55: #{decoder_layer.7} parent=5 // pred_region
      %s948 = ssub.s32 %s13, 2
      // Predicated region
      $region57: #{decoder_layer.7} parent=55 // pred_check
        %p949 = pneg %p232
      $region58: #{decoder_layer.7} parent=55 // pred_check_branch
        %951 = sbr.rel (%p949) target = $region60
      $region59: #{decoder_layer.7} parent=55 // pred_region
        %p952 = scmp.lt.s32.totalorder %s24, 1
        %s953 = scalar_select %p952, %s24, 1
        %p954 = scmp.lt.s32.totalorder %s25, 0
        %s955 = scalar_select %p954, %s25, 0
        %s956 = sadd.s32 %s955, %s953
        %s957 = smul.addr %s956, 8
        %s958 = scalar_lea.vmem %s7, %s957
      $region60: #{decoder_layer.7} parent=55 // pred_fallthru
        _
    $region56: #{decoder_layer.7} parent=5 // pred_fallthru
      _
  $region6: #{decoder_layer.7} parent=0 // loop_footer
    %s17 = sadd.s32 1, %s13
  $region7: #{decoder_layer.7} parent=0 // loop_footer_branch
    %12 = sbr.rel target = $region3
  $region8: #{decoder_layer.7} parent=0 // loop_exit
    _

// kernel: decoder_layer.11
$region0: #{decoder_layer.11}
  #allocation0 [shape = 'u32[]', space=smem, size = 0x4, offset = 0x4, fixed_abs, tag = 'smem constant byte address 0x4 - core index']
  #allocation1 [shape = 'u32[144,128]{1,0:T(1,128)}', space=vmem, size = 0x12000, scoped, tag = 'internal scratch']
  %s0 = inlined_call_operand.vmem [shape: f32[16,32], index: 0, kind: input, shape index: {}]
  %s1 = inlined_call_operand.vmem [shape: f32[1,32], index: 1, kind: input, shape index: {}]
  %s2 = inlined_call_operand.vmem [shape: f32[1,32], index: 2, kind: input, shape index: {}]
  %s3 = inlined_call_operand.vmem [shape: bf16[32,64], index: 3, kind: input, shape index: {}]
  %s4 = inlined_call_operand.vmem [shape: f32[1,64], index: 4, kind: input, shape index: {}]
  %s5 = inlined_call_operand.vmem [shape: bf16[64,32], index: 5, kind: input, shape index: {}]
  %s6 = inlined_call_operand.vmem [shape: f32[1,32], index: 6, kind: input, shape index: {}]
  %s7 = inlined_call_operand.hbm [shape: f32[16,32], index: 7, kind: output, shape index: {}]
  %s8 = sld [smem:[#allocation0]]
  $region38: #{decoder_layer.11} parent=0
    _
  %s10 = ssub.s32 1, %s8
  %s11 = scalar_select 0, %s10, %s8
  $region1: #{decoder_layer.11} parent=0
    #allocation2 [shape = 'u8[8192]{0}', space=vmem, size = 0x2000, scoped, tag = 'output window, operand 0, single buffered']
    #allocation3 [shape = 's32[1]{0}', space=sflag, size = 0x4, scoped, tag = 'scoped memory for decoder_layer.11']
    %12 = vsyncpa [#allocation3], 0
    // Predicated region
    $region2: #{decoder_layer.11} parent=1 // pred_check
      _
    $region3: #{decoder_layer.11} parent=1 // pred_check_branch
      %14 = sbr.rel (0) target = $region5
    $region4: #{decoder_layer.11} parent=1 // pred_region
      _
    $region5: #{decoder_layer.11} parent=1 // pred_fallthru
      _
    // Predicated region
    $region6: #{decoder_layer.11} parent=1 // pred_check
      _
    $region7: #{decoder_layer.11} parent=1 // pred_check_branch
      %16 = sbr.rel (0) target = $region9
    $region8: #{decoder_layer.11} parent=1 // pred_region
      _
    $region9: #{decoder_layer.11} parent=1 // pred_fallthru
      _
    // Predicated region
    $region10: #{decoder_layer.11} parent=1 // pred_check
      _
    $region11: #{decoder_layer.11} parent=1 // pred_check_branch
      %18 = sbr.rel (0) target = $region13
    $region12: #{decoder_layer.11} parent=1 // pred_region
      _
    $region13: #{decoder_layer.11} parent=1 // pred_fallthru
      _
    // Predicated region
    $region14: #{decoder_layer.11} parent=1 // pred_check
      _
    $region15: #{decoder_layer.11} parent=1 // pred_check_branch
      %20 = sbr.rel (0) target = $region17
    $region16: #{decoder_layer.11} parent=1 // pred_region
      _
    $region17: #{decoder_layer.11} parent=1 // pred_fallthru
      _
    // Predicated region
    $region18: #{decoder_layer.11} parent=1 // pred_check
      _
    $region19: #{decoder_layer.11} parent=1 // pred_check_branch
      %22 = sbr.rel (0) target = $region21
    $region20: #{decoder_layer.11} parent=1 // pred_region
      _
    $region21: #{decoder_layer.11} parent=1 // pred_fallthru
      _
    // Predicated region
    $region22: #{decoder_layer.11} parent=1 // pred_check
      _
    $region23: #{decoder_layer.11} parent=1 // pred_check_branch
      %24 = sbr.rel (0) target = $region25
    $region24: #{decoder_layer.11} parent=1 // pred_region
      _
    $region25: #{decoder_layer.11} parent=1 // pred_fallthru
      _
    // Predicated region
    $region26: #{decoder_layer.11} parent=1 // pred_check
      _
    $region27: #{decoder_layer.11} parent=1 // pred_check_branch
      %26 = sbr.rel (0) target = $region29
    $region28: #{decoder_layer.11} parent=1 // pred_region
      _
    $region29: #{decoder_layer.11} parent=1 // pred_fallthru
      _
    %v28 = vld [vmem:[%s0] sm:$0xff]
    %v29 = vld [vmem:[%s0 + $0x8] sm:$0xff]
    %v30 = vld [vmem:[%s1] sm:$0x1]
    %v31 = vld [vmem:[%s2] sm:$0x1]
    %vm32 = vcmask 261120
    %v33 = vsel %vm32, %v28, 0.0
    %34 = vadd.xlane.f32.xlu0 %v33
    %v35 = vpop.xlane.xlu0 %34
    %v36 = vsel %vm32, %v29, 0.0
    %37 = vadd.xlane.f32.xlu0 %v36
    %v38 = vpop.xlane.xlu0 %37
    %v39 = vrcp.pop 32.0
    %v40 = vmul.f32 %v35, %v39
    %v41 = vmul.f32 %v38, %v39
    %v42 = vsub.f32 %v28, %v40
    %v43 = vsub.f32 %v29, %v41
    %v44 = vmul.f32 %v42, %v42
    %v45 = vmul.f32 %v43, %v43
    %v46 = vsel %vm32, %v44, 0.0
    %47 = vadd.xlane.f32.xlu0 %v46
    %v48 = vpop.xlane.xlu0 %47
    %v49 = vsel %vm32, %v45, 0.0
    %50 = vadd.xlane.f32.xlu0 %v49
    %v51 = vpop.xlane.xlu0 %50
    %v52 = vmul.f32 %v48, 0.032258064
    %v53 = vmul.f32 %v51, 0.032258064
    %v54 = vrsqrt.pop %v52
    %v55 = vmul.f32 %v52, %v54
    %vm56 = vcmp.eq.f32.partialorder %v52, inf
    %v57 = vsel %vm56, %v52, %v55
    %vm58 = vcmp.eq.f32.partialorder %v52, 0.0
    %v59 = vand.u32 %v52, 2147483648
    %v60 = vsel %vm58, %v59, %v57
    %v61 = vrsqrt.pop %v53
    %v62 = vmul.f32 %v53, %v61
    %vm63 = vcmp.eq.f32.partialorder %v53, inf
    %v64 = vsel %vm63, %v53, %v62
    %vm65 = vcmp.eq.f32.partialorder %v53, 0.0
    %v66 = vand.u32 %v53, 2147483648
    %v67 = vsel %vm65, %v66, %v64
    %v68 = vadd.f32 %v60, 1e-06
    %v69 = vadd.f32 %v67, 1e-06
    %v71 = vlaneseq
    %v72 = vshrl.u32 %v71, 7
    %v73 = vsub.s32 0, %v72
    %v74 = vrot.slane %v30, %v73
    %v76 = vrcp.pop %v68
    %v77 = vmul.f32 %v74, %v76
    %v78 = vrcp.pop %v69
    %v79 = vmul.f32 %v74, %v78
    %v80 = vmul.f32 %v42, %v77
    %v81 = vmul.f32 %v43, %v79
    %v83 = vlaneseq
    %v84 = vshrl.u32 %v83, 7
    %v85 = vsub.s32 0, %v84
    %v86 = vrot.slane %v31, %v85
    %v88 = vadd.f32 %v80, %v86
    %v89 = vadd.f32 %v81, %v86
    %v90 = vpack.c.bf16 %v89, %v88
    %v91 = vld [vmem:[%s3] sm:$0xf]
    %v92 = vld [vmem:[%s3 + $0x4] sm:$0xf]
    %v93 = vld [vmem:[%s3 + $0x8] sm:$0xf]
    %v94 = vld [vmem:[%s3 + $0xc] sm:$0xf]
    %v95 = vld [vmem:[%s4] sm:$0x1]
    %v97 = vlaneseq
    %v98 = vshrl.u32 %v97, 7
    %v99 = vsub.s32 0, %v98
    %v100 = vrot.slane %v95, %v99
    %v106 = vunpack.c.l.b16 %v91
    %v107 = vunpack.c.l.b16 %v92
    %v108 = vunpack.c.l.b16 %v93
    %v109 = vunpack.c.l.b16 %v94
    %v110 = vpack.c.b16 %v107, %v106
    %v111 = vpack.c.b16 %v109, %v108
    %v115 = vsel %vm32, %v90, 0
    %117 = vmatprep.subr.bf16.mxu0 0
    %118 = vmatpush1.bf16.msra.mxu0 %v110
    %119 = vmatprep.subr.bf16.mxu0 0
    %120 = vmatpush1.bf16.msra.mxu0 %v111
    %121 = vmatprep.subr.bf16.mxu0 0
    %122 = vmatpush1.bf16.msra.mxu0 0
    %123 = vmatprep.subr.bf16.mxu0 0
    %124 = vmatpush1.bf16.msra.mxu0 0
    %125 = vmatprep.subr.bf16.mxu0 0
    %126 = vmatpush1.bf16.msra.mxu0 0
    %127 = vmatprep.subr.bf16.mxu0 0
    %128 = vmatpush1.bf16.msra.mxu0 0
    %129 = vmatprep.subr.bf16.mxu0 0
    %130 = vmatpush1.bf16.msra.mxu0 0
    %131 = vmatprep.subr.bf16.mxu0 0
    %132 = vmatpush1.bf16.msra.mxu0 0
    %133 = vmatprep.subr.bf16.mxu0 0
    %134 = vmatpush1.bf16.msra.mxu0 0
    %135 = vmatprep.subr.bf16.mxu0 0
    %136 = vmatpush1.bf16.msra.mxu0 0
    %137 = vmatprep.subr.bf16.mxu0 0
    %138 = vmatpush1.bf16.msra.mxu0 0
    %139 = vmatprep.subr.bf16.mxu0 0
    %140 = vmatpush1.bf16.msra.mxu0 0
    %141 = vmatprep.subr.bf16.mxu0 0
    %142 = vmatpush1.bf16.msra.mxu0 0
    %143 = vmatprep.subr.bf16.mxu0 0
    %144 = vmatpush1.bf16.msra.mxu0 0
    %145 = vmatprep.subr.bf16.mxu0 0
    %146 = vmatpush1.bf16.msra.mxu0 0
    %147 = vmatprep.subr.bf16.mxu0 0
    %148 = vmatpush1.bf16.msra.mxu0 0
    %149 = vmatprep.mubr.bf16.mxu0 0
    %150 = vmatmul.mubr.bf16.gmra.mrb[0].mxu0 %v115
    %v151 = vpop.f32.mrb[0].mxu0
    %v152 = vadd.f32 %v100, %v151
    %v153 = vpop.f32.mrb[0].mxu0
    %v154 = vpop.f32.mrb[0].mxu0
    %v155 = vadd.f32 %v100, %v154
    %v156 = vpop.f32.mrb[0].mxu0
    %157 = vdwg.mxu0
    %v158 = vmax.f32 %v152, 0.0
    %v159 = vmax.f32 %v155, 0.0
    %v160 = vpack.c.bf16 %v159, %v158
    %v161 = vld [vmem:[%s5] sm:$0xf]
    %v162 = vld [vmem:[%s5 + $0x4] sm:$0xf]
    %v163 = vld [vmem:[%s5 + $0x8] sm:$0xf]
    %v164 = vld [vmem:[%s5 + $0xc] sm:$0xf]
    %v165 = vld [vmem:[%s5 + $0x10] sm:$0xf]
    %v166 = vld [vmem:[%s5 + $0x14] sm:$0xf]
    %v167 = vld [vmem:[%s5 + $0x18] sm:$0xf]
    %v168 = vld [vmem:[%s5 + $0x1c] sm:$0xf]
    %v169 = vld [vmem:[%s6] sm:$0x1]
    %v171 = vlaneseq
    %v172 = vshrl.u32 %v171, 7
    %v173 = vsub.s32 0, %v172
    %v174 = vrot.slane %v169, %v173
    %v184 = vunpack.c.l.b16 %v161
    %v185 = vunpack.c.l.b16 %v162
    %v186 = vunpack.c.l.b16 %v163
    %v187 = vunpack.c.l.b16 %v164
    %v188 = vunpack.c.l.b16 %v165
    %v189 = vunpack.c.l.b16 %v166
    %v190 = vunpack.c.l.b16 %v167
    %v191 = vunpack.c.l.b16 %v168
    %v192 = vpack.c.b16 %v185, %v184
    %v193 = vpack.c.b16 %v187, %v186
    %v194 = vpack.c.b16 %v189, %v188
    %v195 = vpack.c.b16 %v191, %v190
    %vm200 = vcmask 523264
    %v202 = vsel %vm200, %v160, 0
    %204 = vmatprep.subr.bf16.mxu0 0
    %205 = vmatpush1.bf16.msra.mxu0 %v192
    %206 = vmatprep.subr.bf16.mxu0 0
    %207 = vmatpush1.bf16.msra.mxu0 %v193
    %208 = vmatprep.subr.bf16.mxu0 0
    %209 = vmatpush1.bf16.msra.mxu0 %v194
    %210 = vmatprep.subr.bf16.mxu0 0
    %211 = vmatpush1.bf16.msra.mxu0 %v195
    %212 = vmatprep.subr.bf16.mxu0 0
    %213 = vmatpush1.bf16.msra.mxu0 0
    %214 = vmatprep.subr.bf16.mxu0 0
    %215 = vmatpush1.bf16.msra.mxu0 0
    %216 = vmatprep.subr.bf16.mxu0 0
    %217 = vmatpush1.bf16.msra.mxu0 0
    %218 = vmatprep.subr.bf16.mxu0 0
    %219 = vmatpush1.bf16.msra.mxu0 0
    %220 = vmatprep.subr.bf16.mxu0 0
    %221 = vmatpush1.bf16.msra.mxu0 0
    %222 = vmatprep.subr.bf16.mxu0 0
    %223 = vmatpush1.bf16.msra.mxu0 0
    %224 = vmatprep.subr.bf16.mxu0 0
    %225 = vmatpush1.bf16.msra.mxu0 0
    %226 = vmatprep.subr.bf16.mxu0 0
    %227 = vmatpush1.bf16.msra.mxu0 0
    %228 = vmatprep.subr.bf16.mxu0 0
    %229 = vmatpush1.bf16.msra.mxu0 0
    %230 = vmatprep.subr.bf16.mxu0 0
    %231 = vmatpush1.bf16.msra.mxu0 0
    %232 = vmatprep.subr.bf16.mxu0 0
    %233 = vmatpush1.bf16.msra.mxu0 0
    %234 = vmatprep.subr.bf16.mxu0 0
    %235 = vmatpush1.bf16.msra.mxu0 0
    %236 = vmatprep.mubr.bf16.mxu0 0
    %237 = vmatmul.mubr.bf16.gmra.mrb[0].mxu0 %v202
    %v238 = vpop.f32.mrb[0].mxu0
    %v239 = vadd.f32 %v174, %v238
    %v240 = vpop.f32.mrb[0].mxu0
    %v241 = vpop.f32.mrb[0].mxu0
    %v242 = vadd.f32 %v174, %v241
    %v243 = vpop.f32.mrb[0].mxu0
    %244 = vdwg.mxu0
    %v245 = vadd.f32 %v28, %v239
    %v246 = vadd.f32 %v29, %v242
    %247 = vst.msk [vmem:[#allocation2] sm:$0xff] %vm32, %v245
    %248 = vst.msk [vmem:[#allocation2 + $0x8] sm:$0xff] %vm32, %v246
    // Predicated region
    $region30: #{decoder_layer.11} parent=1 // pred_check
      _
    $region31: #{decoder_layer.11} parent=1 // pred_check_branch
      %250 = sbr.rel (0) target = $region33
    $region32: #{decoder_layer.11} parent=1 // pred_region
      %s252 = ssub.s32 256, 256
      %253 = vsyncadd [#allocation3], %s252
      %s254 = sshll.u32 [#allocation2], 4
      %s255 = int_to_ptr.vmem [resolvable:$true] %s254
      %260 = dma.vmem_to_hbm [thread:$0]  %s255, 256, %s7, [#allocation3], 128, 128, 8
    $region33: #{decoder_layer.11} parent=1 // pred_fallthru
      _
    // Predicated region
    $region34: #{decoder_layer.11} parent=1 // pred_check
      _
    $region35: #{decoder_layer.11} parent=1 // pred_check_branch
      %262 = sbr.rel (0) target = $region37
    $region36: #{decoder_layer.11} parent=1 // pred_region
      %263 = dma.done [#allocation3], 256
    $region37: #{decoder_layer.11} parent=1 // pred_fallthru
      _
    %264 = vsyncpa [#allocation3], 1

// kernel: decoder_layer.10
$region0: #{decoder_layer.10}
  #allocation0 [shape = 'u32[]', space=smem, size = 0x4, offset = 0x4, fixed_abs, tag = 'smem constant byte address 0x4 - core index']
  #allocation1 [shape = 'u32[144,128]{1,0:T(1,128)}', space=vmem, size = 0x12000, scoped, tag = 'internal scratch']
  #allocation2 [shape = 'f32[8,32]{1,0:T(8,128)}', space=vmem, size = 0x1000, scoped, tag = 'scratch operand']
  %s0 = inlined_call_operand.vmem [shape: bf16[2,8,32], index: 0, kind: input, shape index: {}]
  %s1 = inlined_call_operand.vmem [shape: bf16[2,8,32], index: 1, kind: input, shape index: {}]
  %s2 = inlined_call_operand.vmem [shape: bf16[2,8,32], index: 2, kind: input, shape index: {}]
  %s3 = inlined_call_operand.vmem [shape: s32[2,1,8], index: 3, kind: input, shape index: {}]
  %s4 = inlined_call_operand.vmem [shape: f32[2,8,32], index: 4, kind: input, shape index: {}]
  %s5 = inlined_call_operand.vmem [shape: bf16[32,32], index: 5, kind: input, shape index: {}]
  %s6 = inlined_call_operand.vmem [shape: f32[1,32], index: 6, kind: input, shape index: {}]
  %s7 = inlined_call_operand.vmem [shape: f32[2,8,32], index: 7, kind: output, shape index: {}]
  %s8 = sld [smem:[#allocation0]]
  $region61: #{decoder_layer.10} parent=0
    _
  %s10 = ssub.s32 1, %s8
  %s11 = scalar_select 0, %s10, %s8
  loop: start=0, step=1, limit=4
  $region2: #{decoder_layer.10} parent=0 // loop_pre_header
    _
  $region3: #{decoder_layer.10} parent=0 // loop_header
    %s13 = sphi 0, %s17
    %p14 = scmp.ge.s32.totalorder %s13, 4
    %s20 = sphi 0, %s32
    %s21 = sphi 0, %s28
    %s22 = sphi 0, %s20
    %s23 = sphi 0, %s21
    %s24 = sphi 0, %s22
    %s25 = sphi 0, %s23
    %s37 = sphi 0, %s39
    %s40 = sphi 0, %s37
    %s41 = sphi 0, %s40
    %s57 = sphi 0, %s41
    %s63 = sphi 0, %s65
    %s66 = sphi 0, %s63
    %s67 = sphi 0, %s66
    %s83 = sphi 0, %s67
    %s89 = sphi 0, %s91
    %s92 = sphi 0, %s89
    %s93 = sphi 0, %s92
    %s109 = sphi 0, %s93
    %s115 = sphi 0, %s117
    %s118 = sphi 0, %s115
    %s119 = sphi 0, %s118
    %s135 = sphi 0, %s119
    %s143 = sphi 0, %s145
    %s146 = sphi 0, %s143
    %s147 = sphi 0, %s146
    %s163 = sphi 0, %s147
    %s167 = sphi 0, %s167
    %s169 = sphi 0, %s167
    %s170 = sphi 0, %s169
    %s184 = sphi 0, %s170
    %s188 = sphi 0, %s188
    %s190 = sphi 0, %s188
    %s191 = sphi 0, %s190
    %s205 = sphi 0, %s191
    %s213 = sphi 0, %s215
    %s216 = sphi 0, %s213
    %s217 = sphi 0, %s216
    %s233 = sphi 0, %s217
  $region4: #{decoder_layer.10} parent=0 // loop_header_branch
    %16 = sbr.rel (%p14) target = $region8
  $region5: #{decoder_layer.10} parent=0 // loop_body
    %s18 = ssub.s32 %s13, 1
    %s19 = ssub.s32 %s13, 2
    %s26 = sadd.s32 1, %s21
    %p27 = scmp.ge.s32.totalorder %s26, 1
    %s28 = scalar_select %p27, 0, %s26
    %s29 = sadd.s32 1, %s20
    %s30 = scalar_select %p27, %s29, %s20
    %p31 = scmp.ge.s32.totalorder %s30, 2
    %s32 = scalar_select %p31, 0, %s30
    %s33 = ssub.s32 %s20, %s32
    %s34 = ssub.s32 %s21, %s28
    %s35 = sor.u32 %s33, %s34
    %p36 = scmp.eq.s32.totalorder %s35, 0
    %s38 = sadd.s32 %s37, 1
    %s39 = scalar_select %p36, %s37, %s38
    %p42 = pneg %p36
    %p43 = scmp.eq.s32.totalorder %s13, 1
    %p44 = por %p42, %p43
    %p45 = scmp.ne.s32.totalorder %s37, %s40
    %p46 = scmp.eq.s32.totalorder %s13, 0
    %p47 = por %p45, %p46
    %p48 = scmp.ne.s32.totalorder %s37, %s40
    %p49 = scmp.eq.s32.totalorder %s18, 1
    %p50 = por %p48, %p49
    %p51 = scmp.ne.s32.totalorder %s40, %s41
    %p52 = scmp.eq.s32.totalorder %s18, 0
    %p53 = por %p51, %p52
    %p54 = scmp.ne.s32.totalorder %s40, %s41
    %p55 = scmp.eq.s32.totalorder %s19, 1
    %p56 = por %p54, %p55
    %p58 = scmp.ne.s32.totalorder %s41, %s57
    %p59 = scmp.eq.s32.totalorder %s19, 0
    %p60 = por %p58, %p59
    %s61 = ssub.s32 %s20, %s32
    %p62 = scmp.eq.s32.totalorder %s61, 0
    %s64 = sadd.s32 %s63, 1
    %s65 = scalar_select %p62, %s63, %s64
    %p68 = pneg %p62
    %p69 = scmp.eq.s32.totalorder %s13, 1
    %p70 = por %p68, %p69
    %p71 = scmp.ne.s32.totalorder %s63, %s66
    %p72 = scmp.eq.s32.totalorder %s13, 0
    %p73 = por %p71, %p72
    %p74 = scmp.ne.s32.totalorder %s63, %s66
    %p75 = scmp.eq.s32.totalorder %s18, 1
    %p76 = por %p74, %p75
    %p77 = scmp.ne.s32.totalorder %s66, %s67
    %p78 = scmp.eq.s32.totalorder %s18, 0
    %p79 = por %p77, %p78
    %p80 = scmp.ne.s32.totalorder %s66, %s67
    %p81 = scmp.eq.s32.totalorder %s19, 1
    %p82 = por %p80, %p81
    %p84 = scmp.ne.s32.totalorder %s67, %s83
    %p85 = scmp.eq.s32.totalorder %s19, 0
    %p86 = por %p84, %p85
    %s87 = ssub.s32 %s20, %s32
    %p88 = scmp.eq.s32.totalorder %s87, 0
    %s90 = sadd.s32 %s89, 1
    %s91 = scalar_select %p88, %s89, %s90
    %p94 = pneg %p88
    %p95 = scmp.eq.s32.totalorder %s13, 1
    %p96 = por %p94, %p95
    %p97 = scmp.ne.s32.totalorder %s89, %s92
    %p98 = scmp.eq.s32.totalorder %s13, 0
    %p99 = por %p97, %p98
    %p100 = scmp.ne.s32.totalorder %s89, %s92
    %p101 = scmp.eq.s32.totalorder %s18, 1
    %p102 = por %p100, %p101
    %p103 = scmp.ne.s32.totalorder %s92, %s93
    %p104 = scmp.eq.s32.totalorder %s18, 0
    %p105 = por %p103, %p104
    %p106 = scmp.ne.s32.totalorder %s92, %s93
    %p107 = scmp.eq.s32.totalorder %s19, 1
    %p108 = por %p106, %p107
    %p110 = scmp.ne.s32.totalorder %s93, %s109
    %p111 = scmp.eq.s32.totalorder %s19, 0
    %p112 = por %p110, %p111
    %s113 = ssub.s32 %s20, %s32
    %p114 = scmp.eq.s32.totalorder %s113, 0
    %s116 = sadd.s32 %s115, 1
    %s117 = scalar_select %p114, %s115, %s116
    %p120 = pneg %p114
    %p121 = scmp.eq.s32.totalorder %s13, 1
    %p122 = por %p120, %p121
    %p123 = scmp.ne.s32.totalorder %s115, %s118
    %p124 = scmp.eq.s32.totalorder %s13, 0
    %p125 = por %p123, %p124
    %p126 = scmp.ne.s32.totalorder %s115, %s118
    %p127 = scmp.eq.s32.totalorder %s18, 1
    %p128 = por %p126, %p127
    %p129 = scmp.ne.s32.totalorder %s118, %s119
    %p130 = scmp.eq.s32.totalorder %s18, 0
    %p131 = por %p129, %p130
    %p132 = scmp.ne.s32.totalorder %s118, %s119
    %p133 = scmp.eq.s32.totalorder %s19, 1
    %p134 = por %p132, %p133
    %p136 = scmp.ne.s32.totalorder %s119, %s135
    %p137 = scmp.eq.s32.totalorder %s19, 0
    %p138 = por %p136, %p137
    %s139 = ssub.s32 %s20, %s32
    %s140 = ssub.s32 %s21, %s28
    %s141 = sor.u32 %s139, %s140
    %p142 = scmp.eq.s32.totalorder %s141, 0
    %s144 = sadd.s32 %s143, 1
    %s145 = scalar_select %p142, %s143, %s144
    %p148 = pneg %p142
    %p149 = scmp.eq.s32.totalorder %s13, 1
    %p150 = por %p148, %p149
    %p151 = scmp.ne.s32.totalorder %s143, %s146
    %p152 = scmp.eq.s32.totalorder %s13, 0
    %p153 = por %p151, %p152
    %p154 = scmp.ne.s32.totalorder %s143, %s146
    %p155 = scmp.eq.s32.totalorder %s18, 1
    %p156 = por %p154, %p155
    %p157 = scmp.ne.s32.totalorder %s146, %s147
    %p158 = scmp.eq.s32.totalorder %s18, 0
    %p159 = por %p157, %p158
    %p160 = scmp.ne.s32.totalorder %s146, %s147
    %p161 = scmp.eq.s32.totalorder %s19, 1
    %p162 = por %p160, %p161
    %p164 = scmp.ne.s32.totalorder %s147, %s163
    %p165 = scmp.eq.s32.totalorder %s19, 0
    %p166 = por %p164, %p165
    %s168 = sadd.s32 %s167, 1
    %p171 = scmp.eq.s32.totalorder %s13, 1
    %p172 = scmp.ne.s32.totalorder %s167, %s169
    %p173 = scmp.eq.s32.totalorder %s13, 0
    %p174 = por %p172, %p173
    %p175 = scmp.ne.s32.totalorder %s167, %s169
    %p176 = scmp.eq.s32.totalorder %s18, 1
    %p177 = por %p175, %p176
    %p178 = scmp.ne.s32.totalorder %s169, %s170
    %p179 = scmp.eq.s32.totalorder %s18, 0
    %p180 = por %p178, %p179
    %p181 = scmp.ne.s32.totalorder %s169, %s170
    %p182 = scmp.eq.s32.totalorder %s19, 1
    %p183 = por %p181, %p182
    %p185 = scmp.ne.s32.totalorder %s170, %s184
    %p186 = scmp.eq.s32.totalorder %s19, 0
    %p187 = por %p185, %p186
    %s189 = sadd.s32 %s188, 1
    %p192 = scmp.eq.s32.totalorder %s13, 1
    %p193 = scmp.ne.s32.totalorder %s188, %s190
    %p194 = scmp.eq.s32.totalorder %s13, 0
    %p195 = por %p193, %p194
    %p196 = scmp.ne.s32.totalorder %s188, %s190
    %p197 = scmp.eq.s32.totalorder %s18, 1
    %p198 = por %p196, %p197
    %p199 = scmp.ne.s32.totalorder %s190, %s191
    %p200 = scmp.eq.s32.totalorder %s18, 0
    %p201 = por %p199, %p200
    %p202 = scmp.ne.s32.totalorder %s190, %s191
    %p203 = scmp.eq.s32.totalorder %s19, 1
    %p204 = por %p202, %p203
    %p206 = scmp.ne.s32.totalorder %s191, %s205
    %p207 = scmp.eq.s32.totalorder %s19, 0
    %p208 = por %p206, %p207
    %s209 = ssub.s32 %s20, %s32
    %s210 = ssub.s32 %s21, %s28
    %s211 = sor.u32 %s209, %s210
    %p212 = scmp.eq.s32.totalorder %s211, 0
    %s214 = sadd.s32 %s213, 1
    %s215 = scalar_select %p212, %s213, %s214
    %p218 = pneg %p212
    %p219 = scmp.eq.s32.totalorder %s13, 1
    %p220 = por %p218, %p219
    %p221 = scmp.ne.s32.totalorder %s213, %s216
    %p222 = scmp.eq.s32.totalorder %s13, 0
    %p223 = por %p221, %p222
    %p224 = scmp.ne.s32.totalorder %s213, %s216
    %p225 = scmp.eq.s32.totalorder %s18, 1
    %p226 = por %p224, %p225
    %p227 = scmp.ne.s32.totalorder %s216, %s217
    %p228 = scmp.eq.s32.totalorder %s18, 0
    %p229 = por %p227, %p228
    %p230 = scmp.ne.s32.totalorder %s216, %s217
    %p231 = scmp.eq.s32.totalorder %s19, 1
    %p232 = por %p230, %p231
    %p234 = scmp.ne.s32.totalorder %s217, %s233
    %p235 = scmp.eq.s32.totalorder %s19, 0
    %p236 = por %p234, %p235
    %p237 = scmp.le.s32.totalorder 1, %s13
    %p238 = scmp.lt.s32.totalorder %s13, 3
    %p239 = pnand %p237, %p238
    %p240 = pneg %p239
    // Predicated region
    $region9: #{decoder_layer.10} parent=5 // pred_check
      _
    $region10: #{decoder_layer.10} parent=5 // pred_check_branch
      %242 = sbr.rel (%p239) target = $region12
    $region11: #{decoder_layer.10} parent=5 // pred_region
      %s243 = ssub.s32 %s13, 1
      // Predicated region
      $region13: #{decoder_layer.10} parent=11 // pred_check
        %p244 = pneg %p180
      $region14: #{decoder_layer.10} parent=11 // pred_check_branch
        %246 = sbr.rel (%p244) target = $region16
      $region15: #{decoder_layer.10} parent=11 // pred_region
        _
      $region16: #{decoder_layer.10} parent=11 // pred_fallthru
        _
      // Predicated region
      $region17: #{decoder_layer.10} parent=11 // pred_check
        %p247 = pneg %p201
      $region18: #{decoder_layer.10} parent=11 // pred_check_branch
        %249 = sbr.rel (%p247) target = $region20
      $region19: #{decoder_layer.10} parent=11 // pred_region
        _
      $region20: #{decoder_layer.10} parent=11 // pred_fallthru
        _
    $region12: #{decoder_layer.10} parent=5 // pred_fallthru
      _
    %p250 = scmp.lt.s32.totalorder %s13, 2
    // Predicated region
    $region21: #{decoder_layer.10} parent=5 // pred_check
      %p251 = pneg %p250
    $region22: #{decoder_layer.10} parent=5 // pred_check_branch
      %253 = sbr.rel (%p251) target = $region24
    $region23: #{decoder_layer.10} parent=5 // pred_region
      // Predicated region
      $region25: #{decoder_layer.10} parent=23 // pred_check
        %p254 = pneg %p47
      $region26: #{decoder_layer.10} parent=23 // pred_check_branch
        %256 = sbr.rel (%p254) target = $region28
      $region27: #{decoder_layer.10} parent=23 // pred_region
        %p257 = scmp.lt.s32.totalorder %s20, 1
        %s258 = scalar_select %p257, %s20, 1
        %p259 = scmp.lt.s32.totalorder %s21, 0
        %s260 = scalar_select %p259, %s21, 0
        %s261 = sadd.s32 %s260, %s258
        %s262 = smul.addr %s261, 4
        %s263 = scalar_lea.vmem %s0, %s262
      $region28: #{decoder_layer.10} parent=23 // pred_fallthru
        _
      // Predicated region
      $region29: #{decoder_layer.10} parent=23 // pred_check
        %p264 = pneg %p73
      $region30: #{decoder_layer.10} parent=23 // pred_check_branch
        %266 = sbr.rel (%p264) target = $region32
      $region31: #{decoder_layer.10} parent=23 // pred_region
        %p267 = scmp.lt.s32.totalorder %s20, 1
        %s268 = scalar_select %p267, %s20, 1
        %s269 = smul.addr %s268, 4
        %s270 = scalar_lea.vmem %s1, %s269
      $region32: #{decoder_layer.10} parent=23 // pred_fallthru
        _
      // Predicated region
      $region33: #{decoder_layer.10} parent=23 // pred_check
        %p271 = pneg %p99
      $region34: #{decoder_layer.10} parent=23 // pred_check_branch
        %273 = sbr.rel (%p271) target = $region36
      $region35: #{decoder_layer.10} parent=23 // pred_region
        %p274 = scmp.lt.s32.totalorder %s20, 1
        %s275 = scalar_select %p274, %s20, 1
        %s276 = smul.addr %s275, 4
        %s277 = scalar_lea.vmem %s2, %s276
      $region36: #{decoder_layer.10} parent=23 // pred_fallthru
        _
      // Predicated region
      $region37: #{decoder_layer.10} parent=23 // pred_check
        %p278 = pneg %p125
      $region38: #{decoder_layer.10} parent=23 // pred_check_branch
        %280 = sbr.rel (%p278) target = $region40
      $region39: #{decoder_layer.10} parent=23 // pred_region
        %p281 = scmp.lt.s32.totalorder %s20, 1
        %s282 = scalar_select %p281, %s20, 1
        %s283 = scalar_lea.vmem %s3, %s282
      $region40: #{decoder_layer.10} parent=23 // pred_fallthru
        _
      // Predicated region
      $region41: #{decoder_layer.10} parent=23 // pred_check
        %p284 = pneg %p153
      $region42: #{decoder_layer.10} parent=23 // pred_check_branch
        %286 = sbr.rel (%p284) target = $region44
      $region43: #{decoder_layer.10} parent=23 // pred_region
        %p287 = scmp.lt.s32.totalorder %s20, 1
        %s288 = scalar_select %p287, %s20, 1
        %p289 = scmp.lt.s32.totalorder %s21, 0
        %s290 = scalar_select %p289, %s21, 0
        %s291 = sadd.s32 %s290, %s288
        %s292 = smul.addr %s291, 8
        %s293 = scalar_lea.vmem %s4, %s292
      $region44: #{decoder_layer.10} parent=23 // pred_fallthru
        _
    $region24: #{decoder_layer.10} parent=5 // pred_fallthru
      _
    %p294 = scmp.le.s32.totalorder 1, %s13
    %p295 = scmp.lt.s32.totalorder %s13, 3
    %p296 = pnand %p294, %p295
    %p297 = pneg %p296
    // Predicated region
    $region45: #{decoder_layer.10} parent=5 // pred_check
      _
    $region46: #{decoder_layer.10} parent=5 // pred_check_branch
      %299 = sbr.rel (%p296) target = $region48
    $region47: #{decoder_layer.10} parent=5 // pred_region
      %s300 = ssub.s32 %s13, 1
      %p301 = scmp.lt.s32.totalorder %s22, 1
      %s302 = scalar_select %p301, %s22, 1
      %p303 = scmp.lt.s32.totalorder %s23, 0
      %s304 = scalar_select %p303, %s23, 0
      %s305 = sadd.s32 %s304, %s302
      %s306 = smul.addr %s305, 4
      %s307 = scalar_lea.vmem %s0, %s306
      %p308 = pneg %p53
      %p309 = pneg %p50
      %p310 = scmp.lt.s32.totalorder %s22, 1
      %s311 = scalar_select %p310, %s22, 1
      %s312 = smul.addr %s311, 4
      %s313 = scalar_lea.vmem %s1, %s312
      %p314 = pneg %p79
      %p315 = pneg %p76
      %p316 = scmp.lt.s32.totalorder %s22, 1
      %s317 = scalar_select %p316, %s22, 1
      %s318 = smul.addr %s317, 4
      %s319 = scalar_lea.vmem %s2, %s318
      %p320 = pneg %p105
      %p321 = pneg %p102
      %p322 = scmp.lt.s32.totalorder %s22, 1
      %s323 = scalar_select %p322, %s22, 1
      %s324 = scalar_lea.vmem %s3, %s323
      %p325 = pneg %p131
      %p326 = pneg %p128
      %p327 = scmp.lt.s32.totalorder %s22, 1
      %s328 = scalar_select %p327, %s22, 1
      %p329 = scmp.lt.s32.totalorder %s23, 0
      %s330 = scalar_select %p329, %s23, 0
      %s331 = sadd.s32 %s330, %s328
      %s332 = smul.addr %s331, 8
      %s333 = scalar_lea.vmem %s4, %s332
      %p334 = pneg %p159
      %p335 = pneg %p156
      %p336 = pneg %p180
      %p337 = pneg %p177
      %p338 = pneg %p201
      %p339 = pneg %p198
      %p340 = pneg %p229
      %p341 = pneg %p226
      %p342 = scmp.lt.s32.totalorder %s22, 1
      %s343 = scalar_select %p342, %s22, 1
      %p344 = scmp.lt.s32.totalorder %s23, 0
      %s345 = scalar_select %p344, %s23, 0
      %s346 = sadd.s32 %s345, %s343
      %s347 = smul.addr %s346, 8
      %s348 = scalar_lea.vmem %s7, %s347
      %p349 = scmp.lt.s32.totalorder %s22, 1
      %s350 = scalar_select %p349, %s22, 1
      %p351 = scmp.lt.s32.totalorder %s23, 0
      %s352 = scalar_select %p351, %s23, 0
      %s353 = sadd.s32 %s352, %s350
      %s354 = smul.addr %s353, 4
      %s355 = scalar_lea.vmem %s0, %s354
      %p356 = scmp.lt.s32.totalorder %s22, 1
      %s357 = scalar_select %p356, %s22, 1
      %s358 = smul.addr %s357, 4
      %s359 = scalar_lea.vmem %s1, %s358
      %p360 = scmp.lt.s32.totalorder %s22, 1
      %s361 = scalar_select %p360, %s22, 1
      %s362 = smul.addr %s361, 4
      %s363 = scalar_lea.vmem %s2, %s362
      %p364 = scmp.lt.s32.totalorder %s22, 1
      %s365 = scalar_select %p364, %s22, 1
      %s366 = scalar_lea.vmem %s3, %s365
      %p367 = scmp.lt.s32.totalorder %s22, 1
      %s368 = scalar_select %p367, %s22, 1
      %p369 = scmp.lt.s32.totalorder %s23, 0
      %s370 = scalar_select %p369, %s23, 0
      %s371 = sadd.s32 %s370, %s368
      %s372 = smul.addr %s371, 8
      %s373 = scalar_lea.vmem %s4, %s372
      %p374 = scmp.lt.s32.totalorder %s22, 1
      %s375 = scalar_select %p374, %s22, 1
      %p376 = scmp.lt.s32.totalorder %s23, 0
      %s377 = scalar_select %p376, %s23, 0
      %s378 = sadd.s32 %s377, %s375
      %s379 = smul.addr %s378, 8
      %s380 = scalar_lea.vmem %s7, %s379
      %v382 = vld [vmem:[%s355] sm:$0xf]
      %v383 = vld [vmem:[%s359] sm:$0xf]
      %v384 = vld [vmem:[%s363] sm:$0xf]
      %v385 = vld [vmem:[%s366] sm:$0x1]
      %v386 = vlaneseq
      %v387 = vshrl.u32 %v386, 7
      %v388 = vsub.s32 0, %v387
      %v389 = vrot.slane %v385, %v388
      %vm390 = vcmp.eq.s32.totalorder %v389, 0
      %vm391 = vcmask 64512
      %v393 = vsel %vm391, %v382, 0
      %v396 = vsel %vm391, %v383, 0
      %398 = vmatprep.subr.bf16.mxu0 0
      %399 = vmatpush1.bf16.xpose.msra.mxu0 %v396
      %400 = vmatprep.subr.bf16.mxu0 0
      %401 = vmatpush1.bf16.xpose.msra.mxu0 0
      %402 = vmatprep.subr.bf16.mxu0 0
      %403 = vmatpush1.bf16.xpose.msra.mxu0 0
      %404 = vmatprep.subr.bf16.mxu0 0
      %405 = vmatpush1.bf16.xpose.msra.mxu0 0
      %406 = vmatprep.subr.bf16.mxu0 0
      %407 = vmatpush1.bf16.xpose.msra.mxu0 0
      %408 = vmatprep.subr.bf16.mxu0 0
      %409 = vmatpush1.bf16.xpose.msra.mxu0 0
      %410 = vmatprep.subr.bf16.mxu0 0
      %411 = vmatpush1.bf16.xpose.msra.mxu0 0
      %412 = vmatprep.subr.bf16.mxu0 0
      %413 = vmatpush1.bf16.xpose.msra.mxu0 0
      %414 = vmatprep.subr.bf16.mxu0 0
      %415 = vmatpush1.bf16.xpose.msra.mxu0 0
      %416 = vmatprep.subr.bf16.mxu0 0
      %417 = vmatpush1.bf16.xpose.msra.mxu0 0
      %418 = vmatprep.subr.bf16.mxu0 0
      %419 = vmatpush1.bf16.xpose.msra.mxu0 0
      %420 = vmatprep.subr.bf16.mxu0 0
      %421 = vmatpush1.bf16.xpose.msra.mxu0 0
      %422 = vmatprep.subr.bf16.mxu0 0
      %423 = vmatpush1.bf16.xpose.msra.mxu0 0
      %424 = vmatprep.subr.bf16.mxu0 0
      %425 = vmatpush1.bf16.xpose.msra.mxu0 0
      %426 = vmatprep.subr.bf16.mxu0 0
      %427 = vmatpush1.bf16.xpose.msra.mxu0 0
      %428 = vmatprep.subr.bf16.mxu0 0
      %429 = vmatpush1.bf16.xpose.msra.mxu0 0
      %430 = vmatprep.mubr.bf16.mxu0 0
      %431 = vmatmul.mubr.bf16.gmra.mrb[0].mxu0 %v393
      %v432 = vpop.f32.mrb[0].mxu0
      %v433 = vadd.f32 0.0, %v432
      %v434 = vpop.f32.mrb[0].mxu0
      %v435 = vpop.f32.mrb[0].mxu0
      %v436 = vpop.f32.mrb[0].mxu0
      %437 = vdwg.mxu0
      %v438 = vmul.f32 %v433, 0.35355338
      %v439 = vsel %vm390, -1e+09, %v438
      %v440 = vsel %vm391, %v439, -inf
      %441 = vmax.xlane.f32.xlu0 %v440
      %v442 = vpop.xlane.xlu0 %441
      %v443 = vsub.f32 %v439, %v442
      %v444 = vmul.f32 %v443, 1.442695
      %v445 = vpow.pop %v444
      %v446 = vsel %vm391, %v445, 0.0
      %447 = vadd.xlane.f32.xlu0 %v446
      %v448 = vpop.xlane.xlu0 %447
      %v449 = vrcp.pop %v448
      %v450 = vmul.f32 %v445, %v449
      %v451 = vpack.c.bf16 %v450, %v450
      %v453 = vsel %vm391, %v451, 0
      %vm455 = vcmask 1043456
      %v457 = vsel %vm455, %v384, 0
      %459 = vmatprep.subr.bf16.mxu0 0
      %460 = vmatpush1.bf16.msra.mxu0 %v457
      %461 = vmatprep.subr.bf16.mxu0 0
      %462 = vmatpush1.bf16.msra.mxu0 0
      %463 = vmatprep.subr.bf16.mxu0 0
      %464 = vmatpush1.bf16.msra.mxu0 0
      %465 = vmatprep.subr.bf16.mxu0 0
      %466 = vmatpush1.bf16.msra.mxu0 0
      %467 = vmatprep.subr.bf16.mxu0 0
      %468 = vmatpush1.bf16.msra.mxu0 0
      %469 = vmatprep.subr.bf16.mxu0 0
      %470 = vmatpush1.bf16.msra.mxu0 0
      %471 = vmatprep.subr.bf16.mxu0 0
      %472 = vmatpush1.bf16.msra.mxu0 0
      %473 = vmatprep.subr.bf16.mxu0 0
      %474 = vmatpush1.bf16.msra.mxu0 0
      %475 = vmatprep.subr.bf16.mxu0 0
      %476 = vmatpush1.bf16.msra.mxu0 0
      %477 = vmatprep.subr.bf16.mxu0 0
      %478 = vmatpush1.bf16.msra.mxu0 0
      %479 = vmatprep.subr.bf16.mxu0 0
      %480 = vmatpush1.bf16.msra.mxu0 0
      %481 = vmatprep.subr.bf16.mxu0 0
      %482 = vmatpush1.bf16.msra.mxu0 0
      %483 = vmatprep.subr.bf16.mxu0 0
      %484 = vmatpush1.bf16.msra.mxu0 0
      %485 = vmatprep.subr.bf16.mxu0 0
      %486 = vmatpush1.bf16.msra.mxu0 0
      %487 = vmatprep.subr.bf16.mxu0 0
      %488 = vmatpush1.bf16.msra.mxu0 0
      %489 = vmatprep.subr.bf16.mxu0 0
      %490 = vmatpush1.bf16.msra.mxu0 0
      %491 = vmatprep.mubr.bf16.mxu0 0
      %492 = vmatmul.mubr.bf16.gmra.mrb[0].mxu0 %v453
      %v493 = vpop.f32.mrb[0].mxu0
      %v494 = vadd.f32 0.0, %v493
      %v495 = vpop.f32.mrb[0].mxu0
      %v496 = vpop.f32.mrb[0].mxu0
      %v497 = vpop.f32.mrb[0].mxu0
      %498 = vdwg.mxu0
      %499 = vst.msk [vmem:[#allocation2] sm:$0xff] %vm391, %v494
      %v501 = vunpack.c.l.b16 %v382
      %v502 = vpack.c.b16 %v501, %v501
      %503 = vrot.lane.b32.xlu0 %v502, 120
      %v504 = vpop.permute.xlu0 %503
      %v506 = vunpack.c.l.b16 %v383
      %v507 = vpack.c.b16 %v506, %v506
      %508 = vrot.lane.b32.xlu0 %v507, 120
      %v509 = vpop.permute.xlu0 %508
      %v511 = vsel %vm391, %v504, 0
      %v514 = vsel %vm391, %v509, 0
      %516 = vmatprep.subr.bf16.mxu0 0
      %517 = vmatpush1.bf16.xpose.msra.mxu0 %v514
      %518 = vmatprep.subr.bf16.mxu0 0
      %519 = vmatpush1.bf16.xpose.msra.mxu0 0
      %520 = vmatprep.subr.bf16.mxu0 0
      %521 = vmatpush1.bf16.xpose.msra.mxu0 0
      %522 = vmatprep.subr.bf16.mxu0 0
      %523 = vmatpush1.bf16.xpose.msra.mxu0 0
      %524 = vmatprep.subr.bf16.mxu0 0
      %525 = vmatpush1.bf16.xpose.msra.mxu0 0
      %526 = vmatprep.subr.bf16.mxu0 0
      %527 = vmatpush1.bf16.xpose.msra.mxu0 0
      %528 = vmatprep.subr.bf16.mxu0 0
      %529 = vmatpush1.bf16.xpose.msra.mxu0 0
      %530 = vmatprep.subr.bf16.mxu0 0
      %531 = vmatpush1.bf16.xpose.msra.mxu0 0
      %532 = vmatprep.subr.bf16.mxu0 0
      %533 = vmatpush1.bf16.xpose.msra.mxu0 0
      %534 = vmatprep.subr.bf16.mxu0 0
      %535 = vmatpush1.bf16.xpose.msra.mxu0 0
      %536 = vmatprep.subr.bf16.mxu0 0
      %537 = vmatpush1.bf16.xpose.msra.mxu0 0
      %538 = vmatprep.subr.bf16.mxu0 0
      %539 = vmatpush1.bf16.xpose.msra.mxu0 0
      %540 = vmatprep.subr.bf16.mxu0 0
      %541 = vmatpush1.bf16.xpose.msra.mxu0 0
      %542 = vmatprep.subr.bf16.mxu0 0
      %543 = vmatpush1.bf16.xpose.msra.mxu0 0
      %544 = vmatprep.subr.bf16.mxu0 0
      %545 = vmatpush1.bf16.xpose.msra.mxu0 0
      %546 = vmatprep.subr.bf16.mxu0 0
      %547 = vmatpush1.bf16.xpose.msra.mxu0 0
      %548 = vmatprep.mubr.bf16.mxu0 0
      %549 = vmatmul.mubr.bf16.gmra.mrb[0].mxu0 %v511
      %v550 = vpop.f32.mrb[0].mxu0
      %v551 = vadd.f32 0.0, %v550
      %v552 = vpop.f32.mrb[0].mxu0
      %v553 = vpop.f32.mrb[0].mxu0
      %v554 = vpop.f32.mrb[0].mxu0
      %555 = vdwg.mxu0
      %v556 = vmul.f32 %v551, 0.35355338
      %v557 = vsel %vm390, -1e+09, %v556
      %v558 = vsel %vm391, %v557, -inf
      %559 = vmax.xlane.f32.xlu0 %v558
      %v560 = vpop.xlane.xlu0 %559
      %v561 = vsub.f32 %v557, %v560
      %v562 = vmul.f32 %v561, 1.442695
      %v563 = vpow.pop %v562
      %v564 = vsel %vm391, %v563, 0.0
      %565 = vadd.xlane.f32.xlu0 %v564
      %v566 = vpop.xlane.xlu0 %565
      %v567 = vrcp.pop %v566
      %v568 = vmul.f32 %v563, %v567
      %v569 = vpack.c.bf16 %v568, %v568
      %v571 = vunpack.c.l.b16 %v384
      %v572 = vpack.c.b16 %v571, %v571
      %573 = vrot.lane.b32.xlu0 %v572, 120
      %v574 = vpop.permute.xlu0 %573
      %v576 = vsel %vm391, %v569, 0
      %v579 = vsel %vm455, %v574, 0
      %581 = vmatprep.subr.bf16.mxu0 0
      %582 = vmatpush1.bf16.msra.mxu0 %v579
      %583 = vmatprep.subr.bf16.mxu0 0
      %584 = vmatpush1.bf16.msra.mxu0 0
      %585 = vmatprep.subr.bf16.mxu0 0
      %586 = vmatpush1.bf16.msra.mxu0 0
      %587 = vmatprep.subr.bf16.mxu0 0
      %588 = vmatpush1.bf16.msra.mxu0 0
      %589 = vmatprep.subr.bf16.mxu0 0
      %590 = vmatpush1.bf16.msra.mxu0 0
      %591 = vmatprep.subr.bf16.mxu0 0
      %592 = vmatpush1.bf16.msra.mxu0 0
      %593 = vmatprep.subr.bf16.mxu0 0
      %594 = vmatpush1.bf16.msra.mxu0 0
      %595 = vmatprep.subr.bf16.mxu0 0
      %596 = vmatpush1.bf16.msra.mxu0 0
      %597 = vmatprep.subr.bf16.mxu0 0
      %598 = vmatpush1.bf16.msra.mxu0 0
      %599 = vmatprep.subr.bf16.mxu0 0
      %600 = vmatpush1.bf16.msra.mxu0 0
      %601 = vmatprep.subr.bf16.mxu0 0
      %602 = vmatpush1.bf16.msra.mxu0 0
      %603 = vmatprep.subr.bf16.mxu0 0
      %604 = vmatpush1.bf16.msra.mxu0 0
      %605 = vmatprep.subr.bf16.mxu0 0
      %606 = vmatpush1.bf16.msra.mxu0 0
      %607 = vmatprep.subr.bf16.mxu0 0
      %608 = vmatpush1.bf16.msra.mxu0 0
      %609 = vmatprep.subr.bf16.mxu0 0
      %610 = vmatpush1.bf16.msra.mxu0 0
      %611 = vmatprep.subr.bf16.mxu0 0
      %612 = vmatpush1.bf16.msra.mxu0 0
      %613 = vmatprep.mubr.bf16.mxu0 0
      %614 = vmatmul.mubr.bf16.gmra.mrb[0].mxu0 %v576
      %v615 = vpop.f32.mrb[0].mxu0
      %v616 = vadd.f32 0.0, %v615
      %v617 = vpop.f32.mrb[0].mxu0
      %v618 = vpop.f32.mrb[0].mxu0
      %v619 = vpop.f32.mrb[0].mxu0
      %620 = vdwg.mxu0
      %622 = vrot.lane.b32.xlu0 %v616, 8
      %v623 = vpop.permute.xlu0 %622
      %vm625 = vcmask 130112
      %626 = vst.msk [vmem:[#allocation2] sm:$0xff] %vm625, %v623
      %627 = vrot.lane.b32.xlu0 %v502, 112
      %v628 = vpop.permute.xlu0 %627
      %629 = vrot.lane.b32.xlu0 %v507, 112
      %v630 = vpop.permute.xlu0 %629
      %v632 = vsel %vm391, %v628, 0
      %v635 = vsel %vm391, %v630, 0
      %637 = vmatprep.subr.bf16.mxu0 0
      %638 = vmatpush1.bf16.xpose.msra.mxu0 %v635
      %639 = vmatprep.subr.bf16.mxu0 0
      %640 = vmatpush1.bf16.xpose.msra.mxu0 0
      %641 = vmatprep.subr.bf16.mxu0 0
      %642 = vmatpush1.bf16.xpose.msra.mxu0 0
      %643 = vmatprep.subr.bf16.mxu0 0
      %644 = vmatpush1.bf16.xpose.msra.mxu0 0
      %645 = vmatprep.subr.bf16.mxu0 0
      %646 = vmatpush1.bf16.xpose.msra.mxu0 0
      %647 = vmatprep.subr.bf16.mxu0 0
      %648 = vmatpush1.bf16.xpose.msra.mxu0 0
      %649 = vmatprep.subr.bf16.mxu0 0
      %650 = vmatpush1.bf16.xpose.msra.mxu0 0
      %651 = vmatprep.subr.bf16.mxu0 0
      %652 = vmatpush1.bf16.xpose.msra.mxu0 0
      %653 = vmatprep.subr.bf16.mxu0 0
      %654 = vmatpush1.bf16.xpose.msra.mxu0 0
      %655 = vmatprep.subr.bf16.mxu0 0
      %656 = vmatpush1.bf16.xpose.msra.mxu0 0
      %657 = vmatprep.subr.bf16.mxu0 0
      %658 = vmatpush1.bf16.xpose.msra.mxu0 0
      %659 = vmatprep.subr.bf16.mxu0 0
      %660 = vmatpush1.bf16.xpose.msra.mxu0 0
      %661 = vmatprep.subr.bf16.mxu0 0
      %662 = vmatpush1.bf16.xpose.msra.mxu0 0
      %663 = vmatprep.subr.bf16.mxu0 0
      %664 = vmatpush1.bf16.xpose.msra.mxu0 0
      %665 = vmatprep.subr.bf16.mxu0 0
      %666 = vmatpush1.bf16.xpose.msra.mxu0 0
      %667 = vmatprep.subr.bf16.mxu0 0
      %668 = vmatpush1.bf16.xpose.msra.mxu0 0
      %669 = vmatprep.mubr.bf16.mxu0 0
      %670 = vmatmul.mubr.bf16.gmra.mrb[0].mxu0 %v632
      %v671 = vpop.f32.mrb[0].mxu0
      %v672 = vadd.f32 0.0, %v671
      %v673 = vpop.f32.mrb[0].mxu0
      %v674 = vpop.f32.mrb[0].mxu0
      %v675 = vpop.f32.mrb[0].mxu0
      %676 = vdwg.mxu0
      %v677 = vmul.f32 %v672, 0.35355338
      %v678 = vsel %vm390, -1e+09, %v677
      %v679 = vsel %vm391, %v678, -inf
      %680 = vmax.xlane.f32.xlu0 %v679
      %v681 = vpop.xlane.xlu0 %680
      %v682 = vsub.f32 %v678, %v681
      %v683 = vmul.f32 %v682, 1.442695
      %v684 = vpow.pop %v683
      %v685 = vsel %vm391, %v684, 0.0
      %686 = vadd.xlane.f32.xlu0 %v685
      %v687 = vpop.xlane.xlu0 %686
      %v688 = vrcp.pop %v687
      %v689 = vmul.f32 %v684, %v688
      %v690 = vpack.c.bf16 %v689, %v689
      %691 = vrot.lane.b32.xlu0 %v572, 112
      %v692 = vpop.permute.xlu0 %691
      %v694 = vsel %vm391, %v690, 0
      %v697 = vsel %vm455, %v692, 0
      %699 = vmatprep.subr.bf16.mxu0 0
      %700 = vmatpush1.bf16.msra.mxu0 %v697
      %701 = vmatprep.subr.bf16.mxu0 0
      %702 = vmatpush1.bf16.msra.mxu0 0
      %703 = vmatprep.subr.bf16.mxu0 0
      %704 = vmatpush1.bf16.msra.mxu0 0
      %705 = vmatprep.subr.bf16.mxu0 0
      %706 = vmatpush1.bf16.msra.mxu0 0
      %707 = vmatprep.subr.bf16.mxu0 0
      %708 = vmatpush1.bf16.msra.mxu0 0
      %709 = vmatprep.subr.bf16.mxu0 0
      %710 = vmatpush1.bf16.msra.mxu0 0
      %711 = vmatprep.subr.bf16.mxu0 0
      %712 = vmatpush1.bf16.msra.mxu0 0
      %713 = vmatprep.subr.bf16.mxu0 0
      %714 = vmatpush1.bf16.msra.mxu0 0
      %715 = vmatprep.subr.bf16.mxu0 0
      %716 = vmatpush1.bf16.msra.mxu0 0
      %717 = vmatprep.subr.bf16.mxu0 0
      %718 = vmatpush1.bf16.msra.mxu0 0
      %719 = vmatprep.subr.bf16.mxu0 0
      %720 = vmatpush1.bf16.msra.mxu0 0
      %721 = vmatprep.subr.bf16.mxu0 0
      %722 = vmatpush1.bf16.msra.mxu0 0
      %723 = vmatprep.subr.bf16.mxu0 0
      %724 = vmatpush1.bf16.msra.mxu0 0
      %725 = vmatprep.subr.bf16.mxu0 0
      %726 = vmatpush1.bf16.msra.mxu0 0
      %727 = vmatprep.subr.bf16.mxu0 0
      %728 = vmatpush1.bf16.msra.mxu0 0
      %729 = vmatprep.subr.bf16.mxu0 0
      %730 = vmatpush1.bf16.msra.mxu0 0
      %731 = vmatprep.mubr.bf16.mxu0 0
      %732 = vmatmul.mubr.bf16.gmra.mrb[0].mxu0 %v694
      %v733 = vpop.f32.mrb[0].mxu0
      %v734 = vadd.f32 0.0, %v733
      %v735 = vpop.f32.mrb[0].mxu0
      %v736 = vpop.f32.mrb[0].mxu0
      %v737 = vpop.f32.mrb[0].mxu0
      %738 = vdwg.mxu0
      %740 = vrot.lane.b32.xlu0 %v734, 16
      %v741 = vpop.permute.xlu0 %740
      %vm743 = vcmask 195712
      %744 = vst.msk [vmem:[#allocation2] sm:$0xff] %vm743, %v741
      %745 = vrot.lane.b32.xlu0 %v502, 104
      %v746 = vpop.permute.xlu0 %745
      %747 = vrot.lane.b32.xlu0 %v507, 104
      %v748 = vpop.permute.xlu0 %747
      %v750 = vsel %vm391, %v746, 0
      %v753 = vsel %vm391, %v748, 0
      %755 = vmatprep.subr.bf16.mxu0 0
      %756 = vmatpush1.bf16.xpose.msra.mxu0 %v753
      %757 = vmatprep.subr.bf16.mxu0 0
      %758 = vmatpush1.bf16.xpose.msra.mxu0 0
      %759 = vmatprep.subr.bf16.mxu0 0
      %760 = vmatpush1.bf16.xpose.msra.mxu0 0
      %761 = vmatprep.subr.bf16.mxu0 0
      %762 = vmatpush1.bf16.xpose.msra.mxu0 0
      %763 = vmatprep.subr.bf16.mxu0 0
      %764 = vmatpush1.bf16.xpose.msra.mxu0 0
      %765 = vmatprep.subr.bf16.mxu0 0
      %766 = vmatpush1.bf16.xpose.msra.mxu0 0
      %767 = vmatprep.subr.bf16.mxu0 0
      %768 = vmatpush1.bf16.xpose.msra.mxu0 0
      %769 = vmatprep.subr.bf16.mxu0 0
      %770 = vmatpush1.bf16.xpose.msra.mxu0 0
      %771 = vmatprep.subr.bf16.mxu0 0
      %772 = vmatpush1.bf16.xpose.msra.mxu0 0
      %773 = vmatprep.subr.bf16.mxu0 0
      %774 = vmatpush1.bf16.xpose.msra.mxu0 0
      %775 = vmatprep.subr.bf16.mxu0 0
      %776 = vmatpush1.bf16.xpose.msra.mxu0 0
      %777 = vmatprep.subr.bf16.mxu0 0
      %778 = vmatpush1.bf16.xpose.msra.mxu0 0
      %779 = vmatprep.subr.bf16.mxu0 0
      %780 = vmatpush1.bf16.xpose.msra.mxu0 0
      %781 = vmatprep.subr.bf16.mxu0 0
      %782 = vmatpush1.bf16.xpose.msra.mxu0 0
      %783 = vmatprep.subr.bf16.mxu0 0
      %784 = vmatpush1.bf16.xpose.msra.mxu0 0
      %785 = vmatprep.subr.bf16.mxu0 0
      %786 = vmatpush1.bf16.xpose.msra.mxu0 0
      %787 = vmatprep.mubr.bf16.mxu0 0
      %788 = vmatmul.mubr.bf16.gmra.mrb[0].mxu0 %v750
      %v789 = vpop.f32.mrb[0].mxu0
      %v790 = vadd.f32 0.0, %v789
      %v791 = vpop.f32.mrb[0].mxu0
      %v792 = vpop.f32.mrb[0].mxu0
      %v793 = vpop.f32.mrb[0].mxu0
      %794 = vdwg.mxu0
      %v795 = vmul.f32 %v790, 0.35355338
      %v796 = vsel %vm390, -1e+09, %v795
      %v797 = vsel %vm391, %v796, -inf
      %798 = vmax.xlane.f32.xlu0 %v797
      %v799 = vpop.xlane.xlu0 %798
      %v800 = vsub.f32 %v796, %v799
      %v801 = vmul.f32 %v800, 1.442695
      %v802 = vpow.pop %v801
      %v803 = vsel %vm391, %v802, 0.0
      %804 = vadd.xlane.f32.xlu0 %v803
      %v805 = vpop.xlane.xlu0 %804
      %v806 = vrcp.pop %v805
      %v807 = vmul.f32 %v802, %v806
      %v808 = vpack.c.bf16 %v807, %v807
      %809 = vrot.lane.b32.xlu0 %v572, 104
      %v810 = vpop.permute.xlu0 %809
      %v812 = vsel %vm391, %v808, 0
      %v815 = vsel %vm455, %v810, 0
      %817 = vmatprep.subr.bf16.mxu0 0
      %818 = vmatpush1.bf16.msra.mxu0 %v815
      %819 = vmatprep.subr.bf16.mxu0 0
      %820 = vmatpush1.bf16.msra.mxu0 0
      %821 = vmatprep.subr.bf16.mxu0 0
      %822 = vmatpush1.bf16.msra.mxu0 0
      %823 = vmatprep.subr.bf16.mxu0 0
      %824 = vmatpush1.bf16.msra.mxu0 0
      %825 = vmatprep.subr.bf16.mxu0 0
      %826 = vmatpush1.bf16.msra.mxu0 0
      %827 = vmatprep.subr.bf16.mxu0 0
      %828 = vmatpush1.bf16.msra.mxu0 0
      %829 = vmatprep.subr.bf16.mxu0 0
      %830 = vmatpush1.bf16.msra.mxu0 0
      %831 = vmatprep.subr.bf16.mxu0 0
      %832 = vmatpush1.bf16.msra.mxu0 0
      %833 = vmatprep.subr.bf16.mxu0 0
      %834 = vmatpush1.bf16.msra.mxu0 0
      %835 = vmatprep.subr.bf16.mxu0 0
      %836 = vmatpush1.bf16.msra.mxu0 0
      %837 = vmatprep.subr.bf16.mxu0 0
      %838 = vmatpush1.bf16.msra.mxu0 0
      %839 = vmatprep.subr.bf16.mxu0 0
      %840 = vmatpush1.bf16.msra.mxu0 0
      %841 = vmatprep.subr.bf16.mxu0 0
      %842 = vmatpush1.bf16.msra.mxu0 0
      %843 = vmatprep.subr.bf16.mxu0 0
      %844 = vmatpush1.bf16.msra.mxu0 0
      %845 = vmatprep.subr.bf16.mxu0 0
      %846 = vmatpush1.bf16.msra.mxu0 0
      %847 = vmatprep.subr.bf16.mxu0 0
      %848 = vmatpush1.bf16.msra.mxu0 0
      %849 = vmatprep.mubr.bf16.mxu0 0
      %850 = vmatmul.mubr.bf16.gmra.mrb[0].mxu0 %v812
      %v851 = vpop.f32.mrb[0].mxu0
      %v852 = vadd.f32 0.0, %v851
      %v853 = vpop.f32.mrb[0].mxu0
      %v854 = vpop.f32.mrb[0].mxu0
      %v855 = vpop.f32.mrb[0].mxu0
      %856 = vdwg.mxu0
      %858 = vrot.lane.b32.xlu0 %v852, 24
      %v859 = vpop.permute.xlu0 %858
      %vm861 = vcmask 261312
      %862 = vst.msk [vmem:[#allocation2] sm:$0xff] %vm861, %v859
      %v863 = vld [vmem:[#allocation2] sm:$0xff]
      %v864 = vpack.c.bf16 %v863, %v863
      %v865 = vld [vmem:[%s5] sm:$0xf]
      %v866 = vld [vmem:[%s5 + $0x4] sm:$0xf]
      %v867 = vld [vmem:[%s5 + $0x8] sm:$0xf]
      %v868 = vld [vmem:[%s5 + $0xc] sm:$0xf]
      %v869 = vld [vmem:[%s6] sm:$0x1]
      %v871 = vlaneseq
      %v872 = vshrl.u32 %v871, 7
      %v873 = vsub.s32 0, %v872
      %v874 = vrot.slane %v869, %v873
      %v880 = vunpack.c.l.b16 %v865
      %v881 = vunpack.c.l.b16 %v866
      %v882 = vunpack.c.l.b16 %v867
      %v883 = vunpack.c.l.b16 %v868
      %v884 = vpack.c.b16 %v881, %v880
      %v885 = vpack.c.b16 %v883, %v882
      %vm888 = vcmask 261120
      %v890 = vsel %vm888, %v864, 0
      %892 = vmatprep.subr.bf16.mxu0 0
      %893 = vmatpush1.bf16.msra.mxu0 %v884
      %894 = vmatprep.subr.bf16.mxu0 0
      %895 = vmatpush1.bf16.msra.mxu0 %v885
      %896 = vmatprep.subr.bf16.mxu0 0
      %897 = vmatpush1.bf16.msra.mxu0 0
      %898 = vmatprep.subr.bf16.mxu0 0
      %899 = vmatpush1.bf16.msra.mxu0 0
      %900 = vmatprep.subr.bf16.mxu0 0
      %901 = vmatpush1.bf16.msra.mxu0 0
      %902 = vmatprep.subr.bf16.mxu0 0
      %903 = vmatpush1.bf16.msra.mxu0 0
      %904 = vmatprep.subr.bf16.mxu0 0
      %905 = vmatpush1.bf16.msra.mxu0 0
      %906 = vmatprep.subr.bf16.mxu0 0
      %907 = vmatpush1.bf16.msra.mxu0 0
      %908 = vmatprep.subr.bf16.mxu0 0
      %909 = vmatpush1.bf16.msra.mxu0 0
      %910 = vmatprep.subr.bf16.mxu0 0
      %911 = vmatpush1.bf16.msra.mxu0 0
      %912 = vmatprep.subr.bf16.mxu0 0
      %913 = vmatpush1.bf16.msra.mxu0 0
      %914 = vmatprep.subr.bf16.mxu0 0
      %915 = vmatpush1.bf16.msra.mxu0 0
      %916 = vmatprep.subr.bf16.mxu0 0
      %917 = vmatpush1.bf16.msra.mxu0 0
      %918 = vmatprep.subr.bf16.mxu0 0
      %919 = vmatpush1.bf16.msra.mxu0 0
      %920 = vmatprep.subr.bf16.mxu0 0
      %921 = vmatpush1.bf16.msra.mxu0 0
      %922 = vmatprep.subr.bf16.mxu0 0
      %923 = vmatpush1.bf16.msra.mxu0 0
      %924 = vmatprep.mubr.bf16.mxu0 0
      %925 = vmatmul.mubr.bf16.gmra.mrb[0].mxu0 %v890
      %v926 = vpop.f32.mrb[0].mxu0
      %v927 = vadd.f32 %v874, %v926
      %v928 = vpop.f32.mrb[0].mxu0
      %v929 = vpop.f32.mrb[0].mxu0
      %v930 = vpop.f32.mrb[0].mxu0
      %931 = vdwg.mxu0
      %v932 = vld [vmem:[%s373] sm:$0xff]
      %v933 = vadd.f32 %v932, %v927
      %934 = vst.msk [vmem:[%s380] sm:$0xff] %vm888, %v933
      %p935 = scmp.lt.s32.totalorder %s22, 1
      %s936 = scalar_select %p935, %s22, 1
      %p937 = scmp.lt.s32.totalorder %s23, 0
      %s938 = scalar_select %p937, %s23, 0
      %s939 = sadd.s32 %s938, %s936
      %s940 = smul.addr %s939, 8
      %s941 = scalar_lea.vmem %s7, %s940
      // Predicated region
      $region49: #{decoder_layer.10} parent=47 // pred_check
        %p942 = pneg %p226
      $region50: #{decoder_layer.10} parent=47 // pred_check_branch
        %944 = sbr.rel (%p942) target = $region52
      $region51: #{decoder_layer.10} parent=47 // pred_region
        _
      $region52: #{decoder_layer.10} parent=47 // pred_fallthru
        _
    $region48: #{decoder_layer.10} parent=5 // pred_fallthru
      _
    %p945 = scmp.le.s32.totalorder 2, %s13
    // Predicated region
    $region53: #{decoder_layer.10} parent=5 // pred_check
      %p946 = pneg %p945
    $region54: #{decoder_layer.10} parent=5 // pred_check_branch
      %948 = sbr.rel (%p946) target = $region56
    $region55: #{decoder_layer.10} parent=5 // pred_region
      %s949 = ssub.s32 %s13, 2
      // Predicated region
      $region57: #{decoder_layer.10} parent=55 // pred_check
        %p950 = pneg %p232
      $region58: #{decoder_layer.10} parent=55 // pred_check_branch
        %952 = sbr.rel (%p950) target = $region60
      $region59: #{decoder_layer.10} parent=55 // pred_region
        %p953 = scmp.lt.s32.totalorder %s24, 1
        %s954 = scalar_select %p953, %s24, 1
        %p955 = scmp.lt.s32.totalorder %s25, 0
        %s956 = scalar_select %p955, %s25, 0
        %s957 = sadd.s32 %s956, %s954
        %s958 = smul.addr %s957, 8
        %s959 = scalar_lea.vmem %s7, %s958
      $region60: #{decoder_layer.10} parent=55 // pred_fallthru
        _
    $region56: #{decoder_layer.10} parent=5 // pred_fallthru
      _
  $region6: #{decoder_layer.10} parent=0 // loop_footer
    %s17 = sadd.s32 1, %s13
  $region7: #{decoder_layer.10} parent=0 // loop_footer_branch
    %12 = sbr.rel target = $region3
  $region8: #{decoder_layer.10} parent=0 // loop_exit
    _

</llo_original>
